<compile_context>
chip_gen: v5e
topology: v5e:2x2
jax: 0.10.0
libtpu: 0.0.40
codegen_flags: <defaults>
</compile_context>

<pallas_src>
import functools
import math

import jax
import jax.numpy as jnp
from jax.experimental import pallas as pl
from jax.experimental.pallas import tpu as pltpu


# ----------------------------------------------------------------------------
# In-kernel helpers
# ----------------------------------------------------------------------------

def _mm(a, w):
    """bf16 MXU matmul with f32 accumulation (w is already bf16)."""
    return jnp.dot(a.astype(jnp.bfloat16), w, preferred_element_type=jnp.float32)


def _layernorm(x, g, b, eps=1e-5):
    mu = jnp.mean(x, axis=-1, keepdims=True)
    var = jnp.mean((x - mu) ** 2, axis=-1, keepdims=True)
    return (x - mu) * jax.lax.rsqrt(var + eps) * g + b


# ----------------------------------------------------------------------------
# Single fused forward kernel
# ----------------------------------------------------------------------------

def transnar_kernel(
    x_ref, pe_ref, attn_mask_ref, out_mask_ref,
    emb_w_ref, emb_b_ref,
    wqkv_ref, bqkv_ref, wo_ref, bo_ref, ln1g_ref, ln1b_ref,
    w1_ref, b1_ref, w2_ref, b2_ref, ln2g_ref, ln2b_ref,
    nar_w1_ref, nar_b1_ref, nar_w2_ref, nar_b2_ref,
    gru_wih_ref, gru_bih_ref, gru_whh_ref, gru_bhh_ref,
    dec_wh_ref, dec_wnar_ref, dec_b_ref, fn_g_ref, fn_b_ref,
    o_ref,
    *, num_layers, num_heads, seq_len, batch, out_dim):
    E = emb_w_ref.shape[1]
    dh = E // num_heads
    L, N = seq_len, batch

    # ---- embedding + positional encoding (dropout = eval identity) ----------
    h = _mm(x_ref[...], emb_w_ref[...]) + emb_b_ref[...] + pe_ref[...]    # (M, E)

    neg_mask = attn_mask_ref[...]            # (M, M) additive 0 / -1e30 block-diag

    # ---- transformer layers, fully unrolled (static weight-stack indexing) --
    for li in range(num_layers):
        qkv = _mm(h, wqkv_ref[li]) + bqkv_ref[li]                         # (M, 3E)
        # 1/sqrt(dh) is pre-folded into the Q slice of wqkv/bqkv.
        q = qkv[:, :E].astype(jnp.bfloat16)
        k = qkv[:, E:2 * E].astype(jnp.bfloat16)
        v = qkv[:, 2 * E:].astype(jnp.bfloat16)

        heads = []
        # TODO(synk): switch to a batched dot_general / fori_loop(unroll=True)
        # over heads if num_heads grows beyond a handful.
        for hd in range(num_heads):
            sl = slice(hd * dh, (hd + 1) * dh)
            s = jax.lax.dot_general(q[:, sl], k[:, sl], (((1,), (1,)), ((), ())),
                                    preferred_element_type=jnp.float32)  # (M, M)
            s = s + neg_mask                                 # mask cross-batch
            s = s - jnp.max(s, axis=-1, keepdims=True)
            p = jnp.exp(s)
            p = p * pl.reciprocal(jnp.sum(p, axis=-1, keepdims=True), approx=True)
            heads.append(jnp.dot(p.astype(jnp.bfloat16), v[:, sl],
                                 preferred_element_type=jnp.float32))    # (M, dh)
        attn = jnp.concatenate(heads, axis=-1)               # lane concat -> (M, E)
        attn = _mm(attn, wo_ref[li]) + bo_ref[li]            # one K=E out-proj

        h1 = _layernorm(h + attn, ln1g_ref[li], ln1b_ref[li])             # res+LN1
        f = jnp.maximum(_mm(h1, w1_ref[li]) + b1_ref[li], 0.0)            # FFN+ReLU
        f = _mm(f, w2_ref[li]) + b2_ref[li]
        h = _layernorm(h1 + f, ln2g_ref[li], ln2b_ref[li])                # res+LN2

    # ---- NAR reasoning MLP + GRU input gates (hoisted, full M rows) ---------
    r = jnp.maximum(_mm(h, nar_w1_ref[...]) + nar_b1_ref[...], 0.0)
    r = jnp.tanh(_mm(r, nar_w2_ref[...]) + nar_b2_ref[...])
    xg = _mm(r, gru_wih_ref[...]) + gru_bih_ref[...]                      # (M, 3E)

    # decoder h-contribution hoisted out of the recurrence (all biases folded in)
    dec = _mm(h, dec_wh_ref[...]) + dec_b_ref[...]                        # (M, Opad)

    # ---- GRU over the batch axis (torch GRU batch_first=True on (L,N,E):
    #      time axis = n, recurrent "batch" = sequence position, h0 = 0) ------
    whh = gru_whh_ref[...]
    bhh = gru_bhh_ref[...]
    state = jnp.zeros((L, E), jnp.float32)
    states = []
    # TODO(synk): convert to lax.fori_loop(unroll=True) + VMEM scratch if N grows.
    for n in range(N):
        xg_n = xg[n * L:(n + 1) * L]
        hg = _mm(state, whh) + bhh
        rg = jax.nn.sigmoid(xg_n[:, :E] + hg[:, :E])
        zg = jax.nn.sigmoid(xg_n[:, E:2 * E] + hg[:, E:2 * E])
        ng = jnp.tanh(xg_n[:, 2 * E:] + rg * hg[:, 2 * E:])
        state = (1.0 - zg) * ng + zg * state
        states.append(state)
    gru_all = jnp.concatenate(states, axis=0)                             # (M, E)

    # NAR output_layer fused algebraically into the decoder (dec_wnar = Wno@Wdn).
    dec = dec + _mm(gru_all, dec_wnar_ref[...])                           # (M, Opad)

    # ---- final LayerNorm over the true out_dim (lane-padded to Opad) --------
    lane_mask = out_mask_ref[...]                                         # (1, Opad)
    inv_d = 1.0 / out_dim
    mu = jnp.sum(dec * lane_mask, axis=-1, keepdims=True) * inv_d
    diff = (dec - mu) * lane_mask
    var = jnp.sum(diff * diff, axis=-1, keepdims=True) * inv_d
    o_ref[...] = diff * jax.lax.rsqrt(var + 1e-5) * fn_g_ref[...] + fn_b_ref[...]


# ----------------------------------------------------------------------------
# pallas_call wrapper + model glue
# ----------------------------------------------------------------------------

def _round_up(x, m):
    return ((x + m - 1) // m) * m


def positional_encoding(L, E):
    pos = jnp.arange(L, dtype=jnp.float32)[:, None]
    div = jnp.exp(jnp.arange(0, E, 2, dtype=jnp.float32) * (-math.log(10000.0) / E))
    pe = jnp.zeros((L, E), jnp.float32)
    pe = pe.at[:, 0::2].set(jnp.sin(pos * div))
    pe = pe.at[:, 1::2].set(jnp.cos(pos * div))
    return pe


def init_params(key, input_dim, output_dim, embed_dim, num_heads, num_layers, ffn_dim):
    in_pad = _round_up(input_dim, 128)
    out_pad = _round_up(output_dim, 128)
    keys = iter(jax.random.split(key, 64 + 16 * num_layers))

    def wf32(shape, scale=0.05):
        return scale * jax.random.normal(next(keys), shape, jnp.float32)

    def bf16(a):
        return a.astype(jnp.bfloat16)

    head_dim = embed_dim // num_heads
    qscale = 1.0 / math.sqrt(head_dim)

    # embedding weight zero-padded on the input axis (x is zero-padded to match)
    emb_w = jnp.zeros((in_pad, embed_dim), jnp.float32).at[:input_dim].set(
        wf32((input_dim, embed_dim)))

    wqkv, bqkv, wo, bo = [], [], [], []
    w1, b1, w2, b2 = [], [], [], []
    ln1g, ln1b, ln2g, ln2b = [], [], [], []
    for _ in range(num_layers):
        ipw = wf32((embed_dim, 3 * embed_dim))
        ipb = wf32((1, 3 * embed_dim))
        # fold the attention 1/sqrt(head_dim) scale into the Q projection
        ipw = ipw.at[:, :embed_dim].multiply(qscale)
        ipb = ipb.at[:, :embed_dim].multiply(qscale)
        wqkv.append(bf16(ipw)); bqkv.append(ipb)
        wo.append(bf16(wf32((embed_dim, embed_dim)))); bo.append(wf32((1, embed_dim)))
        w1.append(bf16(wf32((embed_dim, ffn_dim)))); b1.append(wf32((1, ffn_dim)))
        w2.append(bf16(wf32((ffn_dim, embed_dim)))); b2.append(wf32((1, embed_dim)))
        ln1g.append(jnp.ones((1, embed_dim), jnp.float32))
        ln1b.append(jnp.zeros((1, embed_dim), jnp.float32))
        ln2g.append(jnp.ones((1, embed_dim), jnp.float32))
        ln2b.append(jnp.zeros((1, embed_dim), jnp.float32))

    # NAR tail: output_layer is folded into the decoder's second half.
    nar_out_w = wf32((embed_dim, embed_dim))
    nar_out_b = wf32((1, embed_dim))
    dec_w = wf32((2 * embed_dim, output_dim))
    dec_b = wf32((1, output_dim))
    dec_w_nar = nar_out_w @ dec_w[embed_dim:]
    dec_b_total = dec_b + nar_out_b @ dec_w[embed_dim:]

    def pad_out(a):  # zero-pad last (output) dim to a lane-dense width
        return jnp.pad(a, ((0, 0), (0, out_pad - a.shape[1])))

    return {
        "emb_w": bf16(emb_w), "emb_b": wf32((1, embed_dim)),
        "wqkv": jnp.stack(wqkv), "bqkv": jnp.stack(bqkv),
        "wo": jnp.stack(wo), "bo": jnp.stack(bo),
        "ln1g": jnp.stack(ln1g), "ln1b": jnp.stack(ln1b),
        "w1": jnp.stack(w1), "b1": jnp.stack(b1),
        "w2": jnp.stack(w2), "b2": jnp.stack(b2),
        "ln2g": jnp.stack(ln2g), "ln2b": jnp.stack(ln2b),
        "nar_w1": bf16(wf32((embed_dim, 2 * embed_dim))), "nar_b1": wf32((1, 2 * embed_dim)),
        "nar_w2": bf16(wf32((2 * embed_dim, embed_dim))), "nar_b2": wf32((1, embed_dim)),
        # GRU pre-transposed to (E, 3E), gate order [r, z, n]
        "gru_wih": bf16(wf32((embed_dim, 3 * embed_dim))), "gru_bih": wf32((1, 3 * embed_dim)),
        "gru_whh": bf16(wf32((embed_dim, 3 * embed_dim))), "gru_bhh": wf32((1, 3 * embed_dim)),
        "dec_w_h": bf16(pad_out(dec_w[:embed_dim])),
        "dec_w_nar": bf16(pad_out(dec_w_nar)),
        "dec_b": pad_out(dec_b_total),
        "fn_g": pad_out(jnp.ones((1, output_dim), jnp.float32)),
        "fn_b": pad_out(jnp.zeros((1, output_dim), jnp.float32)),
    }


@functools.partial(jax.jit, static_argnums=(2, 3))
def transnar_forward(p, x, num_heads, out_dim):
    # x: (L, N, input_dim) -- same seq-first convention as the torch model.
    L, N, in_dim = x.shape
    E = p["emb_w"].shape[1]
    in_pad = p["emb_w"].shape[0]
    out_pad = p["dec_w_h"].shape[1]
    num_layers = p["wqkv"].shape[0]
    M = N * L

    # batch-major internal layout (rows ordered n*L + l), lane-dense input pad
    x_flat = jnp.transpose(x, (1, 0, 2)).reshape(M, in_dim)
    x_flat = jnp.pad(x_flat, ((0, 0), (0, in_pad - in_dim)))

    pe_flat = jnp.tile(positional_encoding(L, E), (N, 1))          # row n*L+l -> pe[l]

    # additive block-diagonal mask: batches must not attend to each other
    grp = jnp.arange(M) // L
    attn_mask = jnp.where(grp[:, None] == grp[None, :], 0.0, -1e30).astype(jnp.float32)

    out_mask = (jnp.arange(out_pad) < out_dim).astype(jnp.float32)[None, :]

    vmem = lambda: pl.BlockSpec(memory_space=pltpu.MemorySpace.VMEM)
    out = pl.pallas_call(
        functools.partial(transnar_kernel, num_layers=int(num_layers),
                          num_heads=num_heads, seq_len=L, batch=N,
                          out_dim=out_dim),
        out_shape=jax.ShapeDtypeStruct((M, out_pad), jnp.float32),
        in_specs=[vmem() for _ in range(31)],
        out_specs=vmem(),
    )(x_flat, pe_flat, attn_mask, out_mask,
      p["emb_w"], p["emb_b"],
      p["wqkv"], p["bqkv"], p["wo"], p["bo"], p["ln1g"], p["ln1b"],
      p["w1"], p["b1"], p["w2"], p["b2"], p["ln2g"], p["ln2b"],
      p["nar_w1"], p["nar_b1"], p["nar_w2"], p["nar_b2"],
      p["gru_wih"], p["gru_bih"], p["gru_whh"], p["gru_bhh"],
      p["dec_w_h"], p["dec_w_nar"], p["dec_b"], p["fn_g"], p["fn_b"])

    out = out[:, :out_dim]                                         # strip lane padding
    return jnp.transpose(out.reshape(N, L, out_dim), (1, 0, 2))    # (L, N, out_dim)


# ----------------------------------------------------------------------------

if __name__ == "__main__":
    # Small, TPU-friendly shapes consistent with the reference module.
    SEQ, BATCH = 8, 2
    INPUT_DIM, OUTPUT_DIM = 64, 32
    EMBED_DIM, NUM_HEADS, NUM_LAYERS, FFN_DIM = 128, 4, 2, 256

    root = jax.random.PRNGKey(0)
    k_params, k_input = jax.random.split(root)

    params = init_params(k_params, INPUT_DIM, OUTPUT_DIM, EMBED_DIM,
                         NUM_HEADS, NUM_LAYERS, FFN_DIM)
    x = jax.random.normal(k_input, (SEQ, BATCH, INPUT_DIM), jnp.float32)

    out = jax.block_until_ready(transnar_forward(params, x, NUM_HEADS, OUTPUT_DIM))

    assert out.shape == (SEQ, BATCH, OUTPUT_DIM), out.shape
    assert bool(jnp.all(jnp.isfinite(out)))
    print("KERNEL_OK")
</pallas_src>

<mosaic_0001>
module attributes {stable_mosaic.version = 11 : i64} {
  func.func @transnar_kernel(%arg0: memref<16x128xf32, #tpu.memory_space<vmem>>, %arg1: memref<16x128xf32, #tpu.memory_space<vmem>>, %arg2: memref<16x16xf32, #tpu.memory_space<vmem>>, %arg3: memref<1x128xf32, #tpu.memory_space<vmem>>, %arg4: memref<128x128xbf16, #tpu.memory_space<vmem>>, %arg5: memref<1x128xf32, #tpu.memory_space<vmem>>, %arg6: memref<2x128x384xbf16, #tpu.memory_space<vmem>>, %arg7: memref<2x1x384xf32, #tpu.memory_space<vmem>>, %arg8: memref<2x128x128xbf16, #tpu.memory_space<vmem>>, %arg9: memref<2x1x128xf32, #tpu.memory_space<vmem>>, %arg10: memref<2x1x128xf32, #tpu.memory_space<vmem>>, %arg11: memref<2x1x128xf32, #tpu.memory_space<vmem>>, %arg12: memref<2x128x256xbf16, #tpu.memory_space<vmem>>, %arg13: memref<2x1x256xf32, #tpu.memory_space<vmem>>, %arg14: memref<2x256x128xbf16, #tpu.memory_space<vmem>>, %arg15: memref<2x1x128xf32, #tpu.memory_space<vmem>>, %arg16: memref<2x1x128xf32, #tpu.memory_space<vmem>>, %arg17: memref<2x1x128xf32, #tpu.memory_space<vmem>>, %arg18: memref<128x256xbf16, #tpu.memory_space<vmem>>, %arg19: memref<1x256xf32, #tpu.memory_space<vmem>>, %arg20: memref<256x128xbf16, #tpu.memory_space<vmem>>, %arg21: memref<1x128xf32, #tpu.memory_space<vmem>>, %arg22: memref<128x384xbf16, #tpu.memory_space<vmem>>, %arg23: memref<1x384xf32, #tpu.memory_space<vmem>>, %arg24: memref<128x384xbf16, #tpu.memory_space<vmem>>, %arg25: memref<1x384xf32, #tpu.memory_space<vmem>>, %arg26: memref<128x128xbf16, #tpu.memory_space<vmem>>, %arg27: memref<128x128xbf16, #tpu.memory_space<vmem>>, %arg28: memref<1x128xf32, #tpu.memory_space<vmem>>, %arg29: memref<1x128xf32, #tpu.memory_space<vmem>>, %arg30: memref<1x128xf32, #tpu.memory_space<vmem>>, %arg31: memref<16x128xf32, #tpu.memory_space<vmem>>) attributes {dimension_semantics = [], scalar_prefetch = 0 : i64, scratch_operands = 0 : i64, tpu.core_type = #tpu.core_type<tc>} {
    %c0 = arith.constant 0 : index
    %c0_0 = arith.constant 0 : index
    %0 = vector.load %arg0[%c0, %c0_0] : memref<16x128xf32, #tpu.memory_space<vmem>>, vector<16x128xf32>
    %c0_1 = arith.constant 0 : index
    %c0_2 = arith.constant 0 : index
    %1 = vector.load %arg4[%c0_1, %c0_2] : memref<128x128xbf16, #tpu.memory_space<vmem>>, vector<128x128xbf16>
    %2 = arith.truncf %0 : vector<16x128xf32> to vector<16x128xbf16>
    %cst = arith.constant dense<0.000000e+00> : vector<16x128xf32>
    %3 = tpu.matmul %2, %1, %cst {dimension_numbers = #tpu.dot_dimension_numbers<[1], [0], [0], [1], [0, 0, 1, 1], [], []>} : vector<16x128xbf16>, vector<128x128xbf16>, vector<16x128xf32> -> vector<16x128xf32>
    %c0_3 = arith.constant 0 : index
    %c0_4 = arith.constant 0 : index
    %4 = vector.load %arg5[%c0_3, %c0_4] : memref<1x128xf32, #tpu.memory_space<vmem>>, vector<1x128xf32>
    %5 = vector.broadcast %4 : vector<1x128xf32> to vector<16x128xf32>
    %6 = arith.addf %3, %5 : vector<16x128xf32>
    %c0_5 = arith.constant 0 : index
    %c0_6 = arith.constant 0 : index
    %7 = vector.load %arg1[%c0_5, %c0_6] : memref<16x128xf32, #tpu.memory_space<vmem>>, vector<16x128xf32>
    %8 = arith.addf %6, %7 : vector<16x128xf32>
    %c0_7 = arith.constant 0 : index
    %c0_8 = arith.constant 0 : index
    %9 = vector.load %arg2[%c0_7, %c0_8] : memref<16x16xf32, #tpu.memory_space<vmem>>, vector<16x16xf32>
    %c0_9 = arith.constant 0 : index
    %c0_10 = arith.constant 0 : index
    %c0_11 = arith.constant 0 : index
    %10 = vector.load %arg6[%c0_9, %c0_10, %c0_11] : memref<2x128x384xbf16, #tpu.memory_space<vmem>>, vector<1x128x384xbf16>
    %11 = vector.shape_cast %10 : vector<1x128x384xbf16> to vector<128x384xbf16>
    %12 = arith.truncf %8 : vector<16x128xf32> to vector<16x128xbf16>
    %cst_12 = arith.constant dense<0.000000e+00> : vector<16x384xf32>
    %13 = tpu.matmul %12, %11, %cst_12 {dimension_numbers = #tpu.dot_dimension_numbers<[1], [0], [0], [1], [0, 0, 1, 1], [], []>} : vector<16x128xbf16>, vector<128x384xbf16>, vector<16x384xf32> -> vector<16x384xf32>
    %c0_13 = arith.constant 0 : index
    %c0_14 = arith.constant 0 : index
    %c0_15 = arith.constant 0 : index
    %14 = vector.load %arg7[%c0_13, %c0_14, %c0_15] : memref<2x1x384xf32, #tpu.memory_space<vmem>>, vector<1x1x384xf32>
    %15 = vector.shape_cast %14 : vector<1x1x384xf32> to vector<1x384xf32>
    %16 = vector.broadcast %15 : vector<1x384xf32> to vector<16x384xf32>
    %17 = arith.addf %13, %16 : vector<16x384xf32>
    %18 = vector.extract_strided_slice %17 {offsets = [0, 0], sizes = [16, 128], strides = [1, 1]} : vector<16x384xf32> to vector<16x128xf32>
    %19 = arith.truncf %18 : vector<16x128xf32> to vector<16x128xbf16>
    %20 = vector.extract_strided_slice %17 {offsets = [0, 128], sizes = [16, 128], strides = [1, 1]} : vector<16x384xf32> to vector<16x128xf32>
    %21 = arith.truncf %20 : vector<16x128xf32> to vector<16x128xbf16>
    %22 = vector.extract_strided_slice %17 {offsets = [0, 256], sizes = [16, 128], strides = [1, 1]} : vector<16x384xf32> to vector<16x128xf32>
    %23 = arith.truncf %22 : vector<16x128xf32> to vector<16x128xbf16>
    %24 = vector.extract_strided_slice %19 {offsets = [0, 0], sizes = [16, 32], strides = [1, 1]} : vector<16x128xbf16> to vector<16x32xbf16>
    %25 = vector.extract_strided_slice %21 {offsets = [0, 0], sizes = [16, 32], strides = [1, 1]} : vector<16x128xbf16> to vector<16x32xbf16>
    %cst_16 = arith.constant dense<0.000000e+00> : vector<16x16xf32>
    %26 = tpu.matmul %24, %25, %cst_16 {dimension_numbers = #tpu.dot_dimension_numbers<[1], [1], [0], [0], [0, 0, 1, 0], [], []>} : vector<16x32xbf16>, vector<16x32xbf16>, vector<16x16xf32> -> vector<16x16xf32>
    %27 = arith.addf %26, %9 : vector<16x16xf32>
    %cst_17 = arith.constant dense<0xFF800000> : vector<16xf32>
    %28 = vector.multi_reduction <maximumf>, %27, %cst_17 [1] : vector<16x16xf32> to vector<16xf32>
    %29 = vector.shape_cast %28 : vector<16xf32> to vector<16x1xf32>
    %30 = vector.broadcast %29 : vector<16x1xf32> to vector<16x16xf32>
    %31 = arith.subf %27, %30 : vector<16x16xf32>
    %32 = math.exp %31 : vector<16x16xf32>
    %cst_18 = arith.constant dense<0.000000e+00> : vector<16xf32>
    %33 = vector.multi_reduction <add>, %32, %cst_18 [1] : vector<16x16xf32> to vector<16xf32>
    %34 = vector.shape_cast %33 : vector<16xf32> to vector<16x1xf32>
    %35 = tpu.reciprocal %34 {approx = true} : vector<16x1xf32> -> vector<16x1xf32>
    %36 = vector.broadcast %35 : vector<16x1xf32> to vector<16x16xf32>
    %37 = arith.mulf %32, %36 : vector<16x16xf32>
    %38 = arith.truncf %37 : vector<16x16xf32> to vector<16x16xbf16>
    %39 = vector.extract_strided_slice %23 {offsets = [0, 0], sizes = [16, 32], strides = [1, 1]} : vector<16x128xbf16> to vector<16x32xbf16>
    %cst_19 = arith.constant dense<0.000000e+00> : vector<16x32xf32>
    %40 = tpu.matmul %38, %39, %cst_19 {dimension_numbers = #tpu.dot_dimension_numbers<[1], [0], [0], [1], [0, 0, 1, 1], [], []>} : vector<16x16xbf16>, vector<16x32xbf16>, vector<16x32xf32> -> vector<16x32xf32>
    %41 = vector.extract_strided_slice %19 {offsets = [0, 32], sizes = [16, 32], strides = [1, 1]} : vector<16x128xbf16> to vector<16x32xbf16>
    %42 = vector.extract_strided_slice %21 {offsets = [0, 32], sizes = [16, 32], strides = [1, 1]} : vector<16x128xbf16> to vector<16x32xbf16>
    %cst_20 = arith.constant dense<0.000000e+00> : vector<16x16xf32>
    %43 = tpu.matmul %41, %42, %cst_20 {dimension_numbers = #tpu.dot_dimension_numbers<[1], [1], [0], [0], [0, 0, 1, 0], [], []>} : vector<16x32xbf16>, vector<16x32xbf16>, vector<16x16xf32> -> vector<16x16xf32>
    %44 = arith.addf %43, %9 : vector<16x16xf32>
    %cst_21 = arith.constant dense<0xFF800000> : vector<16xf32>
    %45 = vector.multi_reduction <maximumf>, %44, %cst_21 [1] : vector<16x16xf32> to vector<16xf32>
    %46 = vector.shape_cast %45 : vector<16xf32> to vector<16x1xf32>
    %47 = vector.broadcast %46 : vector<16x1xf32> to vector<16x16xf32>
    %48 = arith.subf %44, %47 : vector<16x16xf32>
    %49 = math.exp %48 : vector<16x16xf32>
    %cst_22 = arith.constant dense<0.000000e+00> : vector<16xf32>
    %50 = vector.multi_reduction <add>, %49, %cst_22 [1] : vector<16x16xf32> to vector<16xf32>
    %51 = vector.shape_cast %50 : vector<16xf32> to vector<16x1xf32>
    %52 = tpu.reciprocal %51 {approx = true} : vector<16x1xf32> -> vector<16x1xf32>
    %53 = vector.broadcast %52 : vector<16x1xf32> to vector<16x16xf32>
    %54 = arith.mulf %49, %53 : vector<16x16xf32>
    %55 = arith.truncf %54 : vector<16x16xf32> to vector<16x16xbf16>
    %56 = vector.extract_strided_slice %23 {offsets = [0, 32], sizes = [16, 32], strides = [1, 1]} : vector<16x128xbf16> to vector<16x32xbf16>
    %cst_23 = arith.constant dense<0.000000e+00> : vector<16x32xf32>
    %57 = tpu.matmul %55, %56, %cst_23 {dimension_numbers = #tpu.dot_dimension_numbers<[1], [0], [0], [1], [0, 0, 1, 1], [], []>} : vector<16x16xbf16>, vector<16x32xbf16>, vector<16x32xf32> -> vector<16x32xf32>
    %58 = vector.extract_strided_slice %19 {offsets = [0, 64], sizes = [16, 32], strides = [1, 1]} : vector<16x128xbf16> to vector<16x32xbf16>
    %59 = vector.extract_strided_slice %21 {offsets = [0, 64], sizes = [16, 32], strides = [1, 1]} : vector<16x128xbf16> to vector<16x32xbf16>
    %cst_24 = arith.constant dense<0.000000e+00> : vector<16x16xf32>
    %60 = tpu.matmul %58, %59, %cst_24 {dimension_numbers = #tpu.dot_dimension_numbers<[1], [1], [0], [0], [0, 0, 1, 0], [], []>} : vector<16x32xbf16>, vector<16x32xbf16>, vector<16x16xf32> -> vector<16x16xf32>
    %61 = arith.addf %60, %9 : vector<16x16xf32>
    %cst_25 = arith.constant dense<0xFF800000> : vector<16xf32>
    %62 = vector.multi_reduction <maximumf>, %61, %cst_25 [1] : vector<16x16xf32> to vector<16xf32>
    %63 = vector.shape_cast %62 : vector<16xf32> to vector<16x1xf32>
    %64 = vector.broadcast %63 : vector<16x1xf32> to vector<16x16xf32>
    %65 = arith.subf %61, %64 : vector<16x16xf32>
    %66 = math.exp %65 : vector<16x16xf32>
    %cst_26 = arith.constant dense<0.000000e+00> : vector<16xf32>
    %67 = vector.multi_reduction <add>, %66, %cst_26 [1] : vector<16x16xf32> to vector<16xf32>
    %68 = vector.shape_cast %67 : vector<16xf32> to vector<16x1xf32>
    %69 = tpu.reciprocal %68 {approx = true} : vector<16x1xf32> -> vector<16x1xf32>
    %70 = vector.broadcast %69 : vector<16x1xf32> to vector<16x16xf32>
    %71 = arith.mulf %66, %70 : vector<16x16xf32>
    %72 = arith.truncf %71 : vector<16x16xf32> to vector<16x16xbf16>
    %73 = vector.extract_strided_slice %23 {offsets = [0, 64], sizes = [16, 32], strides = [1, 1]} : vector<16x128xbf16> to vector<16x32xbf16>
    %cst_27 = arith.constant dense<0.000000e+00> : vector<16x32xf32>
    %74 = tpu.matmul %72, %73, %cst_27 {dimension_numbers = #tpu.dot_dimension_numbers<[1], [0], [0], [1], [0, 0, 1, 1], [], []>} : vector<16x16xbf16>, vector<16x32xbf16>, vector<16x32xf32> -> vector<16x32xf32>
    %75 = vector.extract_strided_slice %19 {offsets = [0, 96], sizes = [16, 32], strides = [1, 1]} : vector<16x128xbf16> to vector<16x32xbf16>
    %76 = vector.extract_strided_slice %21 {offsets = [0, 96], sizes = [16, 32], strides = [1, 1]} : vector<16x128xbf16> to vector<16x32xbf16>
    %cst_28 = arith.constant dense<0.000000e+00> : vector<16x16xf32>
    %77 = tpu.matmul %75, %76, %cst_28 {dimension_numbers = #tpu.dot_dimension_numbers<[1], [1], [0], [0], [0, 0, 1, 0], [], []>} : vector<16x32xbf16>, vector<16x32xbf16>, vector<16x16xf32> -> vector<16x16xf32>
    %78 = arith.addf %77, %9 : vector<16x16xf32>
    %cst_29 = arith.constant dense<0xFF800000> : vector<16xf32>
    %79 = vector.multi_reduction <maximumf>, %78, %cst_29 [1] : vector<16x16xf32> to vector<16xf32>
    %80 = vector.shape_cast %79 : vector<16xf32> to vector<16x1xf32>
    %81 = vector.broadcast %80 : vector<16x1xf32> to vector<16x16xf32>
    %82 = arith.subf %78, %81 : vector<16x16xf32>
    %83 = math.exp %82 : vector<16x16xf32>
    %cst_30 = arith.constant dense<0.000000e+00> : vector<16xf32>
    %84 = vector.multi_reduction <add>, %83, %cst_30 [1] : vector<16x16xf32> to vector<16xf32>
    %85 = vector.shape_cast %84 : vector<16xf32> to vector<16x1xf32>
    %86 = tpu.reciprocal %85 {approx = true} : vector<16x1xf32> -> vector<16x1xf32>
    %87 = vector.broadcast %86 : vector<16x1xf32> to vector<16x16xf32>
    %88 = arith.mulf %83, %87 : vector<16x16xf32>
    %89 = arith.truncf %88 : vector<16x16xf32> to vector<16x16xbf16>
    %90 = vector.extract_strided_slice %23 {offsets = [0, 96], sizes = [16, 32], strides = [1, 1]} : vector<16x128xbf16> to vector<16x32xbf16>
    %cst_31 = arith.constant dense<0.000000e+00> : vector<16x32xf32>
    %91 = tpu.matmul %89, %90, %cst_31 {dimension_numbers = #tpu.dot_dimension_numbers<[1], [0], [0], [1], [0, 0, 1, 1], [], []>} : vector<16x16xbf16>, vector<16x32xbf16>, vector<16x32xf32> -> vector<16x32xf32>
    %92 = tpu.concatenate %40, %57, %74, %91 in 1 : vector<16x32xf32>, vector<16x32xf32>, vector<16x32xf32>, vector<16x32xf32> -> vector<16x128xf32>
    %c0_32 = arith.constant 0 : index
    %c0_33 = arith.constant 0 : index
    %c0_34 = arith.constant 0 : index
    %93 = vector.load %arg8[%c0_32, %c0_33, %c0_34] : memref<2x128x128xbf16, #tpu.memory_space<vmem>>, vector<1x128x128xbf16>
    %94 = vector.shape_cast %93 : vector<1x128x128xbf16> to vector<128x128xbf16>
    %95 = arith.truncf %92 : vector<16x128xf32> to vector<16x128xbf16>
    %cst_35 = arith.constant dense<0.000000e+00> : vector<16x128xf32>
    %96 = tpu.matmul %95, %94, %cst_35 {dimension_numbers = #tpu.dot_dimension_numbers<[1], [0], [0], [1], [0, 0, 1, 1], [], []>} : vector<16x128xbf16>, vector<128x128xbf16>, vector<16x128xf32> -> vector<16x128xf32>
    %c0_36 = arith.constant 0 : index
    %c0_37 = arith.constant 0 : index
    %c0_38 = arith.constant 0 : index
    %97 = vector.load %arg9[%c0_36, %c0_37, %c0_38] : memref<2x1x128xf32, #tpu.memory_space<vmem>>, vector<1x1x128xf32>
    %98 = vector.shape_cast %97 : vector<1x1x128xf32> to vector<1x128xf32>
    %99 = vector.broadcast %98 : vector<1x128xf32> to vector<16x128xf32>
    %100 = arith.addf %96, %99 : vector<16x128xf32>
    %101 = arith.addf %8, %100 : vector<16x128xf32>
    %c0_39 = arith.constant 0 : index
    %c0_40 = arith.constant 0 : index
    %c0_41 = arith.constant 0 : index
    %102 = vector.load %arg10[%c0_39, %c0_40, %c0_41] : memref<2x1x128xf32, #tpu.memory_space<vmem>>, vector<1x1x128xf32>
    %103 = vector.shape_cast %102 : vector<1x1x128xf32> to vector<1x128xf32>
    %c0_42 = arith.constant 0 : index
    %c0_43 = arith.constant 0 : index
    %c0_44 = arith.constant 0 : index
    %104 = vector.load %arg11[%c0_42, %c0_43, %c0_44] : memref<2x1x128xf32, #tpu.memory_space<vmem>>, vector<1x1x128xf32>
    %105 = vector.shape_cast %104 : vector<1x1x128xf32> to vector<1x128xf32>
    %cst_45 = arith.constant dense<0.000000e+00> : vector<16xf32>
    %106 = vector.multi_reduction <add>, %101, %cst_45 [1] : vector<16x128xf32> to vector<16xf32>
    %107 = vector.shape_cast %106 : vector<16xf32> to vector<16x1xf32>
    %cst_46 = arith.constant 1.280000e+02 : f32
    %108 = vector.broadcast %cst_46 : f32 to vector<16x1xf32>
    %109 = arith.divf %107, %108 : vector<16x1xf32>
    %110 = vector.broadcast %109 : vector<16x1xf32> to vector<16x128xf32>
    %111 = arith.subf %101, %110 : vector<16x128xf32>
    %112 = arith.mulf %111, %111 : vector<16x128xf32>
    %cst_47 = arith.constant dense<0.000000e+00> : vector<16xf32>
    %113 = vector.multi_reduction <add>, %112, %cst_47 [1] : vector<16x128xf32> to vector<16xf32>
    %114 = vector.shape_cast %113 : vector<16xf32> to vector<16x1xf32>
    %cst_48 = arith.constant 1.280000e+02 : f32
    %115 = vector.broadcast %cst_48 : f32 to vector<16x1xf32>
    %116 = arith.divf %114, %115 : vector<16x1xf32>
    %117 = vector.broadcast %109 : vector<16x1xf32> to vector<16x128xf32>
    %118 = arith.subf %101, %117 : vector<16x128xf32>
    %cst_49 = arith.constant 9.99999974E-6 : f32
    %119 = vector.broadcast %cst_49 : f32 to vector<16x1xf32>
    %120 = arith.addf %116, %119 : vector<16x1xf32>
    %121 = math.rsqrt %120 : vector<16x1xf32>
    %122 = vector.broadcast %121 : vector<16x1xf32> to vector<16x128xf32>
    %123 = arith.mulf %118, %122 : vector<16x128xf32>
    %124 = vector.broadcast %103 : vector<1x128xf32> to vector<16x128xf32>
    %125 = arith.mulf %123, %124 : vector<16x128xf32>
    %126 = vector.broadcast %105 : vector<1x128xf32> to vector<16x128xf32>
    %127 = arith.addf %125, %126 : vector<16x128xf32>
    %c0_50 = arith.constant 0 : index
    %c0_51 = arith.constant 0 : index
    %c0_52 = arith.constant 0 : index
    %128 = vector.load %arg12[%c0_50, %c0_51, %c0_52] : memref<2x128x256xbf16, #tpu.memory_space<vmem>>, vector<1x128x256xbf16>
    %129 = vector.shape_cast %128 : vector<1x128x256xbf16> to vector<128x256xbf16>
    %130 = arith.truncf %127 : vector<16x128xf32> to vector<16x128xbf16>
    %cst_53 = arith.constant dense<0.000000e+00> : vector<16x256xf32>
    %131 = tpu.matmul %130, %129, %cst_53 {dimension_numbers = #tpu.dot_dimension_numbers<[1], [0], [0], [1], [0, 0, 1, 1], [], []>} : vector<16x128xbf16>, vector<128x256xbf16>, vector<16x256xf32> -> vector<16x256xf32>
    %c0_54 = arith.constant 0 : index
    %c0_55 = arith.constant 0 : index
    %c0_56 = arith.constant 0 : index
    %132 = vector.load %arg13[%c0_54, %c0_55, %c0_56] : memref<2x1x256xf32, #tpu.memory_space<vmem>>, vector<1x1x256xf32>
    %133 = vector.shape_cast %132 : vector<1x1x256xf32> to vector<1x256xf32>
    %134 = vector.broadcast %133 : vector<1x256xf32> to vector<16x256xf32>
    %135 = arith.addf %131, %134 : vector<16x256xf32>
    %cst_57 = arith.constant 0.000000e+00 : f32
    %136 = vector.broadcast %cst_57 : f32 to vector<16x256xf32>
    %137 = arith.maximumf %135, %136 : vector<16x256xf32>
    %c0_58 = arith.constant 0 : index
    %c0_59 = arith.constant 0 : index
    %c0_60 = arith.constant 0 : index
    %138 = vector.load %arg14[%c0_58, %c0_59, %c0_60] : memref<2x256x128xbf16, #tpu.memory_space<vmem>>, vector<1x256x128xbf16>
    %139 = vector.shape_cast %138 : vector<1x256x128xbf16> to vector<256x128xbf16>
    %140 = arith.truncf %137 : vector<16x256xf32> to vector<16x256xbf16>
    %cst_61 = arith.constant dense<0.000000e+00> : vector<16x128xf32>
    %141 = tpu.matmul %140, %139, %cst_61 {dimension_numbers = #tpu.dot_dimension_numbers<[1], [0], [0], [1], [0, 0, 1, 1], [], []>} : vector<16x256xbf16>, vector<256x128xbf16>, vector<16x128xf32> -> vector<16x128xf32>
    %c0_62 = arith.constant 0 : index
    %c0_63 = arith.constant 0 : index
    %c0_64 = arith.constant 0 : index
    %142 = vector.load %arg15[%c0_62, %c0_63, %c0_64] : memref<2x1x128xf32, #tpu.memory_space<vmem>>, vector<1x1x128xf32>
    %143 = vector.shape_cast %142 : vector<1x1x128xf32> to vector<1x128xf32>
    %144 = vector.broadcast %143 : vector<1x128xf32> to vector<16x128xf32>
    %145 = arith.addf %141, %144 : vector<16x128xf32>
    %146 = arith.addf %127, %145 : vector<16x128xf32>
    %c0_65 = arith.constant 0 : index
    %c0_66 = arith.constant 0 : index
    %c0_67 = arith.constant 0 : index
    %147 = vector.load %arg16[%c0_65, %c0_66, %c0_67] : memref<2x1x128xf32, #tpu.memory_space<vmem>>, vector<1x1x128xf32>
    %148 = vector.shape_cast %147 : vector<1x1x128xf32> to vector<1x128xf32>
    %c0_68 = arith.constant 0 : index
    %c0_69 = arith.constant 0 : index
    %c0_70 = arith.constant 0 : index
    %149 = vector.load %arg17[%c0_68, %c0_69, %c0_70] : memref<2x1x128xf32, #tpu.memory_space<vmem>>, vector<1x1x128xf32>
    %150 = vector.shape_cast %149 : vector<1x1x128xf32> to vector<1x128xf32>
    %cst_71 = arith.constant dense<0.000000e+00> : vector<16xf32>
    %151 = vector.multi_reduction <add>, %146, %cst_71 [1] : vector<16x128xf32> to vector<16xf32>
    %152 = vector.shape_cast %151 : vector<16xf32> to vector<16x1xf32>
    %cst_72 = arith.constant 1.280000e+02 : f32
    %153 = vector.broadcast %cst_72 : f32 to vector<16x1xf32>
    %154 = arith.divf %152, %153 : vector<16x1xf32>
    %155 = vector.broadcast %154 : vector<16x1xf32> to vector<16x128xf32>
    %156 = arith.subf %146, %155 : vector<16x128xf32>
    %157 = arith.mulf %156, %156 : vector<16x128xf32>
    %cst_73 = arith.constant dense<0.000000e+00> : vector<16xf32>
    %158 = vector.multi_reduction <add>, %157, %cst_73 [1] : vector<16x128xf32> to vector<16xf32>
    %159 = vector.shape_cast %158 : vector<16xf32> to vector<16x1xf32>
    %cst_74 = arith.constant 1.280000e+02 : f32
    %160 = vector.broadcast %cst_74 : f32 to vector<16x1xf32>
    %161 = arith.divf %159, %160 : vector<16x1xf32>
    %162 = vector.broadcast %154 : vector<16x1xf32> to vector<16x128xf32>
    %163 = arith.subf %146, %162 : vector<16x128xf32>
    %cst_75 = arith.constant 9.99999974E-6 : f32
    %164 = vector.broadcast %cst_75 : f32 to vector<16x1xf32>
    %165 = arith.addf %161, %164 : vector<16x1xf32>
    %166 = math.rsqrt %165 : vector<16x1xf32>
    %167 = vector.broadcast %166 : vector<16x1xf32> to vector<16x128xf32>
    %168 = arith.mulf %163, %167 : vector<16x128xf32>
    %169 = vector.broadcast %148 : vector<1x128xf32> to vector<16x128xf32>
    %170 = arith.mulf %168, %169 : vector<16x128xf32>
    %171 = vector.broadcast %150 : vector<1x128xf32> to vector<16x128xf32>
    %172 = arith.addf %170, %171 : vector<16x128xf32>
    %c1 = arith.constant 1 : index
    %c0_76 = arith.constant 0 : index
    %c0_77 = arith.constant 0 : index
    %173 = vector.load %arg6[%c1, %c0_76, %c0_77] : memref<2x128x384xbf16, #tpu.memory_space<vmem>>, vector<1x128x384xbf16>
    %174 = vector.shape_cast %173 : vector<1x128x384xbf16> to vector<128x384xbf16>
    %175 = arith.truncf %172 : vector<16x128xf32> to vector<16x128xbf16>
    %cst_78 = arith.constant dense<0.000000e+00> : vector<16x384xf32>
    %176 = tpu.matmul %175, %174, %cst_78 {dimension_numbers = #tpu.dot_dimension_numbers<[1], [0], [0], [1], [0, 0, 1, 1], [], []>} : vector<16x128xbf16>, vector<128x384xbf16>, vector<16x384xf32> -> vector<16x384xf32>
    %c1_79 = arith.constant 1 : index
    %c0_80 = arith.constant 0 : index
    %c0_81 = arith.constant 0 : index
    %177 = vector.load %arg7[%c1_79, %c0_80, %c0_81] : memref<2x1x384xf32, #tpu.memory_space<vmem>>, vector<1x1x384xf32>
    %178 = vector.shape_cast %177 : vector<1x1x384xf32> to vector<1x384xf32>
    %179 = vector.broadcast %178 : vector<1x384xf32> to vector<16x384xf32>
    %180 = arith.addf %176, %179 : vector<16x384xf32>
    %181 = vector.extract_strided_slice %180 {offsets = [0, 0], sizes = [16, 128], strides = [1, 1]} : vector<16x384xf32> to vector<16x128xf32>
    %182 = arith.truncf %181 : vector<16x128xf32> to vector<16x128xbf16>
    %183 = vector.extract_strided_slice %180 {offsets = [0, 128], sizes = [16, 128], strides = [1, 1]} : vector<16x384xf32> to vector<16x128xf32>
    %184 = arith.truncf %183 : vector<16x128xf32> to vector<16x128xbf16>
    %185 = vector.extract_strided_slice %180 {offsets = [0, 256], sizes = [16, 128], strides = [1, 1]} : vector<16x384xf32> to vector<16x128xf32>
    %186 = arith.truncf %185 : vector<16x128xf32> to vector<16x128xbf16>
    %187 = vector.extract_strided_slice %182 {offsets = [0, 0], sizes = [16, 32], strides = [1, 1]} : vector<16x128xbf16> to vector<16x32xbf16>
    %188 = vector.extract_strided_slice %184 {offsets = [0, 0], sizes = [16, 32], strides = [1, 1]} : vector<16x128xbf16> to vector<16x32xbf16>
    %cst_82 = arith.constant dense<0.000000e+00> : vector<16x16xf32>
    %189 = tpu.matmul %187, %188, %cst_82 {dimension_numbers = #tpu.dot_dimension_numbers<[1], [1], [0], [0], [0, 0, 1, 0], [], []>} : vector<16x32xbf16>, vector<16x32xbf16>, vector<16x16xf32> -> vector<16x16xf32>
    %190 = arith.addf %189, %9 : vector<16x16xf32>
    %cst_83 = arith.constant dense<0xFF800000> : vector<16xf32>
    %191 = vector.multi_reduction <maximumf>, %190, %cst_83 [1] : vector<16x16xf32> to vector<16xf32>
    %192 = vector.shape_cast %191 : vector<16xf32> to vector<16x1xf32>
    %193 = vector.broadcast %192 : vector<16x1xf32> to vector<16x16xf32>
    %194 = arith.subf %190, %193 : vector<16x16xf32>
    %195 = math.exp %194 : vector<16x16xf32>
    %cst_84 = arith.constant dense<0.000000e+00> : vector<16xf32>
    %196 = vector.multi_reduction <add>, %195, %cst_84 [1] : vector<16x16xf32> to vector<16xf32>
    %197 = vector.shape_cast %196 : vector<16xf32> to vector<16x1xf32>
    %198 = tpu.reciprocal %197 {approx = true} : vector<16x1xf32> -> vector<16x1xf32>
    %199 = vector.broadcast %198 : vector<16x1xf32> to vector<16x16xf32>
    %200 = arith.mulf %195, %199 : vector<16x16xf32>
    %201 = arith.truncf %200 : vector<16x16xf32> to vector<16x16xbf16>
    %202 = vector.extract_strided_slice %186 {offsets = [0, 0], sizes = [16, 32], strides = [1, 1]} : vector<16x128xbf16> to vector<16x32xbf16>
    %cst_85 = arith.constant dense<0.000000e+00> : vector<16x32xf32>
    %203 = tpu.matmul %201, %202, %cst_85 {dimension_numbers = #tpu.dot_dimension_numbers<[1], [0], [0], [1], [0, 0, 1, 1], [], []>} : vector<16x16xbf16>, vector<16x32xbf16>, vector<16x32xf32> -> vector<16x32xf32>
    %204 = vector.extract_strided_slice %182 {offsets = [0, 32], sizes = [16, 32], strides = [1, 1]} : vector<16x128xbf16> to vector<16x32xbf16>
    %205 = vector.extract_strided_slice %184 {offsets = [0, 32], sizes = [16, 32], strides = [1, 1]} : vector<16x128xbf16> to vector<16x32xbf16>
    %cst_86 = arith.constant dense<0.000000e+00> : vector<16x16xf32>
    %206 = tpu.matmul %204, %205, %cst_86 {dimension_numbers = #tpu.dot_dimension_numbers<[1], [1], [0], [0], [0, 0, 1, 0], [], []>} : vector<16x32xbf16>, vector<16x32xbf16>, vector<16x16xf32> -> vector<16x16xf32>
    %207 = arith.addf %206, %9 : vector<16x16xf32>
    %cst_87 = arith.constant dense<0xFF800000> : vector<16xf32>
    %208 = vector.multi_reduction <maximumf>, %207, %cst_87 [1] : vector<16x16xf32> to vector<16xf32>
    %209 = vector.shape_cast %208 : vector<16xf32> to vector<16x1xf32>
    %210 = vector.broadcast %209 : vector<16x1xf32> to vector<16x16xf32>
    %211 = arith.subf %207, %210 : vector<16x16xf32>
    %212 = math.exp %211 : vector<16x16xf32>
    %cst_88 = arith.constant dense<0.000000e+00> : vector<16xf32>
    %213 = vector.multi_reduction <add>, %212, %cst_88 [1] : vector<16x16xf32> to vector<16xf32>
    %214 = vector.shape_cast %213 : vector<16xf32> to vector<16x1xf32>
    %215 = tpu.reciprocal %214 {approx = true} : vector<16x1xf32> -> vector<16x1xf32>
    %216 = vector.broadcast %215 : vector<16x1xf32> to vector<16x16xf32>
    %217 = arith.mulf %212, %216 : vector<16x16xf32>
    %218 = arith.truncf %217 : vector<16x16xf32> to vector<16x16xbf16>
    %219 = vector.extract_strided_slice %186 {offsets = [0, 32], sizes = [16, 32], strides = [1, 1]} : vector<16x128xbf16> to vector<16x32xbf16>
    %cst_89 = arith.constant dense<0.000000e+00> : vector<16x32xf32>
    %220 = tpu.matmul %218, %219, %cst_89 {dimension_numbers = #tpu.dot_dimension_numbers<[1], [0], [0], [1], [0, 0, 1, 1], [], []>} : vector<16x16xbf16>, vector<16x32xbf16>, vector<16x32xf32> -> vector<16x32xf32>
    %221 = vector.extract_strided_slice %182 {offsets = [0, 64], sizes = [16, 32], strides = [1, 1]} : vector<16x128xbf16> to vector<16x32xbf16>
    %222 = vector.extract_strided_slice %184 {offsets = [0, 64], sizes = [16, 32], strides = [1, 1]} : vector<16x128xbf16> to vector<16x32xbf16>
    %cst_90 = arith.constant dense<0.000000e+00> : vector<16x16xf32>
    %223 = tpu.matmul %221, %222, %cst_90 {dimension_numbers = #tpu.dot_dimension_numbers<[1], [1], [0], [0], [0, 0, 1, 0], [], []>} : vector<16x32xbf16>, vector<16x32xbf16>, vector<16x16xf32> -> vector<16x16xf32>
    %224 = arith.addf %223, %9 : vector<16x16xf32>
    %cst_91 = arith.constant dense<0xFF800000> : vector<16xf32>
    %225 = vector.multi_reduction <maximumf>, %224, %cst_91 [1] : vector<16x16xf32> to vector<16xf32>
    %226 = vector.shape_cast %225 : vector<16xf32> to vector<16x1xf32>
    %227 = vector.broadcast %226 : vector<16x1xf32> to vector<16x16xf32>
    %228 = arith.subf %224, %227 : vector<16x16xf32>
    %229 = math.exp %228 : vector<16x16xf32>
    %cst_92 = arith.constant dense<0.000000e+00> : vector<16xf32>
    %230 = vector.multi_reduction <add>, %229, %cst_92 [1] : vector<16x16xf32> to vector<16xf32>
    %231 = vector.shape_cast %230 : vector<16xf32> to vector<16x1xf32>
    %232 = tpu.reciprocal %231 {approx = true} : vector<16x1xf32> -> vector<16x1xf32>
    %233 = vector.broadcast %232 : vector<16x1xf32> to vector<16x16xf32>
    %234 = arith.mulf %229, %233 : vector<16x16xf32>
    %235 = arith.truncf %234 : vector<16x16xf32> to vector<16x16xbf16>
    %236 = vector.extract_strided_slice %186 {offsets = [0, 64], sizes = [16, 32], strides = [1, 1]} : vector<16x128xbf16> to vector<16x32xbf16>
    %cst_93 = arith.constant dense<0.000000e+00> : vector<16x32xf32>
    %237 = tpu.matmul %235, %236, %cst_93 {dimension_numbers = #tpu.dot_dimension_numbers<[1], [0], [0], [1], [0, 0, 1, 1], [], []>} : vector<16x16xbf16>, vector<16x32xbf16>, vector<16x32xf32> -> vector<16x32xf32>
    %238 = vector.extract_strided_slice %182 {offsets = [0, 96], sizes = [16, 32], strides = [1, 1]} : vector<16x128xbf16> to vector<16x32xbf16>
    %239 = vector.extract_strided_slice %184 {offsets = [0, 96], sizes = [16, 32], strides = [1, 1]} : vector<16x128xbf16> to vector<16x32xbf16>
    %cst_94 = arith.constant dense<0.000000e+00> : vector<16x16xf32>
    %240 = tpu.matmul %238, %239, %cst_94 {dimension_numbers = #tpu.dot_dimension_numbers<[1], [1], [0], [0], [0, 0, 1, 0], [], []>} : vector<16x32xbf16>, vector<16x32xbf16>, vector<16x16xf32> -> vector<16x16xf32>
    %241 = arith.addf %240, %9 : vector<16x16xf32>
    %cst_95 = arith.constant dense<0xFF800000> : vector<16xf32>
    %242 = vector.multi_reduction <maximumf>, %241, %cst_95 [1] : vector<16x16xf32> to vector<16xf32>
    %243 = vector.shape_cast %242 : vector<16xf32> to vector<16x1xf32>
    %244 = vector.broadcast %243 : vector<16x1xf32> to vector<16x16xf32>
    %245 = arith.subf %241, %244 : vector<16x16xf32>
    %246 = math.exp %245 : vector<16x16xf32>
    %cst_96 = arith.constant dense<0.000000e+00> : vector<16xf32>
    %247 = vector.multi_reduction <add>, %246, %cst_96 [1] : vector<16x16xf32> to vector<16xf32>
    %248 = vector.shape_cast %247 : vector<16xf32> to vector<16x1xf32>
    %249 = tpu.reciprocal %248 {approx = true} : vector<16x1xf32> -> vector<16x1xf32>
    %250 = vector.broadcast %249 : vector<16x1xf32> to vector<16x16xf32>
    %251 = arith.mulf %246, %250 : vector<16x16xf32>
    %252 = arith.truncf %251 : vector<16x16xf32> to vector<16x16xbf16>
    %253 = vector.extract_strided_slice %186 {offsets = [0, 96], sizes = [16, 32], strides = [1, 1]} : vector<16x128xbf16> to vector<16x32xbf16>
    %cst_97 = arith.constant dense<0.000000e+00> : vector<16x32xf32>
    %254 = tpu.matmul %252, %253, %cst_97 {dimension_numbers = #tpu.dot_dimension_numbers<[1], [0], [0], [1], [0, 0, 1, 1], [], []>} : vector<16x16xbf16>, vector<16x32xbf16>, vector<16x32xf32> -> vector<16x32xf32>
    %255 = tpu.concatenate %203, %220, %237, %254 in 1 : vector<16x32xf32>, vector<16x32xf32>, vector<16x32xf32>, vector<16x32xf32> -> vector<16x128xf32>
    %c1_98 = arith.constant 1 : index
    %c0_99 = arith.constant 0 : index
    %c0_100 = arith.constant 0 : index
    %256 = vector.load %arg8[%c1_98, %c0_99, %c0_100] : memref<2x128x128xbf16, #tpu.memory_space<vmem>>, vector<1x128x128xbf16>
    %257 = vector.shape_cast %256 : vector<1x128x128xbf16> to vector<128x128xbf16>
    %258 = arith.truncf %255 : vector<16x128xf32> to vector<16x128xbf16>
    %cst_101 = arith.constant dense<0.000000e+00> : vector<16x128xf32>
    %259 = tpu.matmul %258, %257, %cst_101 {dimension_numbers = #tpu.dot_dimension_numbers<[1], [0], [0], [1], [0, 0, 1, 1], [], []>} : vector<16x128xbf16>, vector<128x128xbf16>, vector<16x128xf32> -> vector<16x128xf32>
    %c1_102 = arith.constant 1 : index
    %c0_103 = arith.constant 0 : index
    %c0_104 = arith.constant 0 : index
    %260 = vector.load %arg9[%c1_102, %c0_103, %c0_104] : memref<2x1x128xf32, #tpu.memory_space<vmem>>, vector<1x1x128xf32>
    %261 = vector.shape_cast %260 : vector<1x1x128xf32> to vector<1x128xf32>
    %262 = vector.broadcast %261 : vector<1x128xf32> to vector<16x128xf32>
    %263 = arith.addf %259, %262 : vector<16x128xf32>
    %264 = arith.addf %172, %263 : vector<16x128xf32>
    %c1_105 = arith.constant 1 : index
    %c0_106 = arith.constant 0 : index
    %c0_107 = arith.constant 0 : index
    %265 = vector.load %arg10[%c1_105, %c0_106, %c0_107] : memref<2x1x128xf32, #tpu.memory_space<vmem>>, vector<1x1x128xf32>
    %266 = vector.shape_cast %265 : vector<1x1x128xf32> to vector<1x128xf32>
    %c1_108 = arith.constant 1 : index
    %c0_109 = arith.constant 0 : index
    %c0_110 = arith.constant 0 : index
    %267 = vector.load %arg11[%c1_108, %c0_109, %c0_110] : memref<2x1x128xf32, #tpu.memory_space<vmem>>, vector<1x1x128xf32>
    %268 = vector.shape_cast %267 : vector<1x1x128xf32> to vector<1x128xf32>
    %cst_111 = arith.constant dense<0.000000e+00> : vector<16xf32>
    %269 = vector.multi_reduction <add>, %264, %cst_111 [1] : vector<16x128xf32> to vector<16xf32>
    %270 = vector.shape_cast %269 : vector<16xf32> to vector<16x1xf32>
    %cst_112 = arith.constant 1.280000e+02 : f32
    %271 = vector.broadcast %cst_112 : f32 to vector<16x1xf32>
    %272 = arith.divf %270, %271 : vector<16x1xf32>
    %273 = vector.broadcast %272 : vector<16x1xf32> to vector<16x128xf32>
    %274 = arith.subf %264, %273 : vector<16x128xf32>
    %275 = arith.mulf %274, %274 : vector<16x128xf32>
    %cst_113 = arith.constant dense<0.000000e+00> : vector<16xf32>
    %276 = vector.multi_reduction <add>, %275, %cst_113 [1] : vector<16x128xf32> to vector<16xf32>
    %277 = vector.shape_cast %276 : vector<16xf32> to vector<16x1xf32>
    %cst_114 = arith.constant 1.280000e+02 : f32
    %278 = vector.broadcast %cst_114 : f32 to vector<16x1xf32>
    %279 = arith.divf %277, %278 : vector<16x1xf32>
    %280 = vector.broadcast %272 : vector<16x1xf32> to vector<16x128xf32>
    %281 = arith.subf %264, %280 : vector<16x128xf32>
    %cst_115 = arith.constant 9.99999974E-6 : f32
    %282 = vector.broadcast %cst_115 : f32 to vector<16x1xf32>
    %283 = arith.addf %279, %282 : vector<16x1xf32>
    %284 = math.rsqrt %283 : vector<16x1xf32>
    %285 = vector.broadcast %284 : vector<16x1xf32> to vector<16x128xf32>
    %286 = arith.mulf %281, %285 : vector<16x128xf32>
    %287 = vector.broadcast %266 : vector<1x128xf32> to vector<16x128xf32>
    %288 = arith.mulf %286, %287 : vector<16x128xf32>
    %289 = vector.broadcast %268 : vector<1x128xf32> to vector<16x128xf32>
    %290 = arith.addf %288, %289 : vector<16x128xf32>
    %c1_116 = arith.constant 1 : index
    %c0_117 = arith.constant 0 : index
    %c0_118 = arith.constant 0 : index
    %291 = vector.load %arg12[%c1_116, %c0_117, %c0_118] : memref<2x128x256xbf16, #tpu.memory_space<vmem>>, vector<1x128x256xbf16>
    %292 = vector.shape_cast %291 : vector<1x128x256xbf16> to vector<128x256xbf16>
    %293 = arith.truncf %290 : vector<16x128xf32> to vector<16x128xbf16>
    %cst_119 = arith.constant dense<0.000000e+00> : vector<16x256xf32>
    %294 = tpu.matmul %293, %292, %cst_119 {dimension_numbers = #tpu.dot_dimension_numbers<[1], [0], [0], [1], [0, 0, 1, 1], [], []>} : vector<16x128xbf16>, vector<128x256xbf16>, vector<16x256xf32> -> vector<16x256xf32>
    %c1_120 = arith.constant 1 : index
    %c0_121 = arith.constant 0 : index
    %c0_122 = arith.constant 0 : index
    %295 = vector.load %arg13[%c1_120, %c0_121, %c0_122] : memref<2x1x256xf32, #tpu.memory_space<vmem>>, vector<1x1x256xf32>
    %296 = vector.shape_cast %295 : vector<1x1x256xf32> to vector<1x256xf32>
    %297 = vector.broadcast %296 : vector<1x256xf32> to vector<16x256xf32>
    %298 = arith.addf %294, %297 : vector<16x256xf32>
    %cst_123 = arith.constant 0.000000e+00 : f32
    %299 = vector.broadcast %cst_123 : f32 to vector<16x256xf32>
    %300 = arith.maximumf %298, %299 : vector<16x256xf32>
    %c1_124 = arith.constant 1 : index
    %c0_125 = arith.constant 0 : index
    %c0_126 = arith.constant 0 : index
    %301 = vector.load %arg14[%c1_124, %c0_125, %c0_126] : memref<2x256x128xbf16, #tpu.memory_space<vmem>>, vector<1x256x128xbf16>
    %302 = vector.shape_cast %301 : vector<1x256x128xbf16> to vector<256x128xbf16>
    %303 = arith.truncf %300 : vector<16x256xf32> to vector<16x256xbf16>
    %cst_127 = arith.constant dense<0.000000e+00> : vector<16x128xf32>
    %304 = tpu.matmul %303, %302, %cst_127 {dimension_numbers = #tpu.dot_dimension_numbers<[1], [0], [0], [1], [0, 0, 1, 1], [], []>} : vector<16x256xbf16>, vector<256x128xbf16>, vector<16x128xf32> -> vector<16x128xf32>
    %c1_128 = arith.constant 1 : index
    %c0_129 = arith.constant 0 : index
    %c0_130 = arith.constant 0 : index
    %305 = vector.load %arg15[%c1_128, %c0_129, %c0_130] : memref<2x1x128xf32, #tpu.memory_space<vmem>>, vector<1x1x128xf32>
    %306 = vector.shape_cast %305 : vector<1x1x128xf32> to vector<1x128xf32>
    %307 = vector.broadcast %306 : vector<1x128xf32> to vector<16x128xf32>
    %308 = arith.addf %304, %307 : vector<16x128xf32>
    %309 = arith.addf %290, %308 : vector<16x128xf32>
    %c1_131 = arith.constant 1 : index
    %c0_132 = arith.constant 0 : index
    %c0_133 = arith.constant 0 : index
    %310 = vector.load %arg16[%c1_131, %c0_132, %c0_133] : memref<2x1x128xf32, #tpu.memory_space<vmem>>, vector<1x1x128xf32>
    %311 = vector.shape_cast %310 : vector<1x1x128xf32> to vector<1x128xf32>
    %c1_134 = arith.constant 1 : index
    %c0_135 = arith.constant 0 : index
    %c0_136 = arith.constant 0 : index
    %312 = vector.load %arg17[%c1_134, %c0_135, %c0_136] : memref<2x1x128xf32, #tpu.memory_space<vmem>>, vector<1x1x128xf32>
    %313 = vector.shape_cast %312 : vector<1x1x128xf32> to vector<1x128xf32>
    %cst_137 = arith.constant dense<0.000000e+00> : vector<16xf32>
    %314 = vector.multi_reduction <add>, %309, %cst_137 [1] : vector<16x128xf32> to vector<16xf32>
    %315 = vector.shape_cast %314 : vector<16xf32> to vector<16x1xf32>
    %cst_138 = arith.constant 1.280000e+02 : f32
    %316 = vector.broadcast %cst_138 : f32 to vector<16x1xf32>
    %317 = arith.divf %315, %316 : vector<16x1xf32>
    %318 = vector.broadcast %317 : vector<16x1xf32> to vector<16x128xf32>
    %319 = arith.subf %309, %318 : vector<16x128xf32>
    %320 = arith.mulf %319, %319 : vector<16x128xf32>
    %cst_139 = arith.constant dense<0.000000e+00> : vector<16xf32>
    %321 = vector.multi_reduction <add>, %320, %cst_139 [1] : vector<16x128xf32> to vector<16xf32>
    %322 = vector.shape_cast %321 : vector<16xf32> to vector<16x1xf32>
    %cst_140 = arith.constant 1.280000e+02 : f32
    %323 = vector.broadcast %cst_140 : f32 to vector<16x1xf32>
    %324 = arith.divf %322, %323 : vector<16x1xf32>
    %325 = vector.broadcast %317 : vector<16x1xf32> to vector<16x128xf32>
    %326 = arith.subf %309, %325 : vector<16x128xf32>
    %cst_141 = arith.constant 9.99999974E-6 : f32
    %327 = vector.broadcast %cst_141 : f32 to vector<16x1xf32>
    %328 = arith.addf %324, %327 : vector<16x1xf32>
    %329 = math.rsqrt %328 : vector<16x1xf32>
    %330 = vector.broadcast %329 : vector<16x1xf32> to vector<16x128xf32>
    %331 = arith.mulf %326, %330 : vector<16x128xf32>
    %332 = vector.broadcast %311 : vector<1x128xf32> to vector<16x128xf32>
    %333 = arith.mulf %331, %332 : vector<16x128xf32>
    %334 = vector.broadcast %313 : vector<1x128xf32> to vector<16x128xf32>
    %335 = arith.addf %333, %334 : vector<16x128xf32>
    %c0_142 = arith.constant 0 : index
    %c0_143 = arith.constant 0 : index
    %336 = vector.load %arg18[%c0_142, %c0_143] : memref<128x256xbf16, #tpu.memory_space<vmem>>, vector<128x256xbf16>
    %337 = arith.truncf %335 : vector<16x128xf32> to vector<16x128xbf16>
    %cst_144 = arith.constant dense<0.000000e+00> : vector<16x256xf32>
    %338 = tpu.matmul %337, %336, %cst_144 {dimension_numbers = #tpu.dot_dimension_numbers<[1], [0], [0], [1], [0, 0, 1, 1], [], []>} : vector<16x128xbf16>, vector<128x256xbf16>, vector<16x256xf32> -> vector<16x256xf32>
    %c0_145 = arith.constant 0 : index
    %c0_146 = arith.constant 0 : index
    %339 = vector.load %arg19[%c0_145, %c0_146] : memref<1x256xf32, #tpu.memory_space<vmem>>, vector<1x256xf32>
    %340 = vector.broadcast %339 : vector<1x256xf32> to vector<16x256xf32>
    %341 = arith.addf %338, %340 : vector<16x256xf32>
    %cst_147 = arith.constant 0.000000e+00 : f32
    %342 = vector.broadcast %cst_147 : f32 to vector<16x256xf32>
    %343 = arith.maximumf %341, %342 : vector<16x256xf32>
    %c0_148 = arith.constant 0 : index
    %c0_149 = arith.constant 0 : index
    %344 = vector.load %arg20[%c0_148, %c0_149] : memref<256x128xbf16, #tpu.memory_space<vmem>>, vector<256x128xbf16>
    %345 = arith.truncf %343 : vector<16x256xf32> to vector<16x256xbf16>
    %cst_150 = arith.constant dense<0.000000e+00> : vector<16x128xf32>
    %346 = tpu.matmul %345, %344, %cst_150 {dimension_numbers = #tpu.dot_dimension_numbers<[1], [0], [0], [1], [0, 0, 1, 1], [], []>} : vector<16x256xbf16>, vector<256x128xbf16>, vector<16x128xf32> -> vector<16x128xf32>
    %c0_151 = arith.constant 0 : index
    %c0_152 = arith.constant 0 : index
    %347 = vector.load %arg21[%c0_151, %c0_152] : memref<1x128xf32, #tpu.memory_space<vmem>>, vector<1x128xf32>
    %348 = vector.broadcast %347 : vector<1x128xf32> to vector<16x128xf32>
    %349 = arith.addf %346, %348 : vector<16x128xf32>
    %350 = math.tanh %349 : vector<16x128xf32>
    %c0_153 = arith.constant 0 : index
    %c0_154 = arith.constant 0 : index
    %351 = vector.load %arg22[%c0_153, %c0_154] : memref<128x384xbf16, #tpu.memory_space<vmem>>, vector<128x384xbf16>
    %352 = arith.truncf %350 : vector<16x128xf32> to vector<16x128xbf16>
    %cst_155 = arith.constant dense<0.000000e+00> : vector<16x384xf32>
    %353 = tpu.matmul %352, %351, %cst_155 {dimension_numbers = #tpu.dot_dimension_numbers<[1], [0], [0], [1], [0, 0, 1, 1], [], []>} : vector<16x128xbf16>, vector<128x384xbf16>, vector<16x384xf32> -> vector<16x384xf32>
    %c0_156 = arith.constant 0 : index
    %c0_157 = arith.constant 0 : index
    %354 = vector.load %arg23[%c0_156, %c0_157] : memref<1x384xf32, #tpu.memory_space<vmem>>, vector<1x384xf32>
    %355 = vector.broadcast %354 : vector<1x384xf32> to vector<16x384xf32>
    %356 = arith.addf %353, %355 : vector<16x384xf32>
    %c0_158 = arith.constant 0 : index
    %c0_159 = arith.constant 0 : index
    %357 = vector.load %arg26[%c0_158, %c0_159] : memref<128x128xbf16, #tpu.memory_space<vmem>>, vector<128x128xbf16>
    %358 = arith.truncf %335 : vector<16x128xf32> to vector<16x128xbf16>
    %cst_160 = arith.constant dense<0.000000e+00> : vector<16x128xf32>
    %359 = tpu.matmul %358, %357, %cst_160 {dimension_numbers = #tpu.dot_dimension_numbers<[1], [0], [0], [1], [0, 0, 1, 1], [], []>} : vector<16x128xbf16>, vector<128x128xbf16>, vector<16x128xf32> -> vector<16x128xf32>
    %c0_161 = arith.constant 0 : index
    %c0_162 = arith.constant 0 : index
    %360 = vector.load %arg28[%c0_161, %c0_162] : memref<1x128xf32, #tpu.memory_space<vmem>>, vector<1x128xf32>
    %361 = vector.broadcast %360 : vector<1x128xf32> to vector<16x128xf32>
    %362 = arith.addf %359, %361 : vector<16x128xf32>
    %c0_163 = arith.constant 0 : index
    %c0_164 = arith.constant 0 : index
    %363 = vector.load %arg24[%c0_163, %c0_164] : memref<128x384xbf16, #tpu.memory_space<vmem>>, vector<128x384xbf16>
    %c0_165 = arith.constant 0 : index
    %c0_166 = arith.constant 0 : index
    %364 = vector.load %arg25[%c0_165, %c0_166] : memref<1x384xf32, #tpu.memory_space<vmem>>, vector<1x384xf32>
    %cst_167 = arith.constant 0.000000e+00 : f32
    %365 = vector.broadcast %cst_167 : f32 to vector<8x128xf32>
    %366 = vector.extract_strided_slice %356 {offsets = [0, 0], sizes = [8, 384], strides = [1, 1]} : vector<16x384xf32> to vector<8x384xf32>
    %367 = arith.truncf %365 : vector<8x128xf32> to vector<8x128xbf16>
    %cst_168 = arith.constant dense<0.000000e+00> : vector<8x384xf32>
    %368 = tpu.matmul %367, %363, %cst_168 {dimension_numbers = #tpu.dot_dimension_numbers<[1], [0], [0], [1], [0, 0, 1, 1], [], []>} : vector<8x128xbf16>, vector<128x384xbf16>, vector<8x384xf32> -> vector<8x384xf32>
    %369 = vector.broadcast %364 : vector<1x384xf32> to vector<8x384xf32>
    %370 = arith.addf %368, %369 : vector<8x384xf32>
    %371 = vector.extract_strided_slice %366 {offsets = [0, 0], sizes = [8, 128], strides = [1, 1]} : vector<8x384xf32> to vector<8x128xf32>
    %372 = vector.extract_strided_slice %370 {offsets = [0, 0], sizes = [8, 128], strides = [1, 1]} : vector<8x384xf32> to vector<8x128xf32>
    %373 = arith.addf %371, %372 : vector<8x128xf32>
    %374 = arith.negf %373 : vector<8x128xf32>
    %375 = math.exp %374 : vector<8x128xf32>
    %cst_169 = arith.constant 1.000000e+00 : f32
    %376 = vector.broadcast %cst_169 : f32 to vector<8x128xf32>
    %377 = arith.addf %376, %375 : vector<8x128xf32>
    %378 = arith.divf %376, %377 : vector<8x128xf32>
    %379 = vector.extract_strided_slice %366 {offsets = [0, 128], sizes = [8, 128], strides = [1, 1]} : vector<8x384xf32> to vector<8x128xf32>
    %380 = vector.extract_strided_slice %370 {offsets = [0, 128], sizes = [8, 128], strides = [1, 1]} : vector<8x384xf32> to vector<8x128xf32>
    %381 = arith.addf %379, %380 : vector<8x128xf32>
    %382 = arith.negf %381 : vector<8x128xf32>
    %383 = math.exp %382 : vector<8x128xf32>
    %cst_170 = arith.constant 1.000000e+00 : f32
    %384 = vector.broadcast %cst_170 : f32 to vector<8x128xf32>
    %385 = arith.addf %384, %383 : vector<8x128xf32>
    %386 = arith.divf %384, %385 : vector<8x128xf32>
    %387 = vector.extract_strided_slice %366 {offsets = [0, 256], sizes = [8, 128], strides = [1, 1]} : vector<8x384xf32> to vector<8x128xf32>
    %388 = vector.extract_strided_slice %370 {offsets = [0, 256], sizes = [8, 128], strides = [1, 1]} : vector<8x384xf32> to vector<8x128xf32>
    %389 = arith.mulf %378, %388 : vector<8x128xf32>
    %390 = arith.addf %387, %389 : vector<8x128xf32>
    %391 = math.tanh %390 : vector<8x128xf32>
    %cst_171 = arith.constant 1.000000e+00 : f32
    %392 = vector.broadcast %cst_171 : f32 to vector<8x128xf32>
    %393 = arith.subf %392, %386 : vector<8x128xf32>
    %394 = arith.mulf %393, %391 : vector<8x128xf32>
    %395 = arith.mulf %386, %365 : vector<8x128xf32>
    %396 = arith.addf %394, %395 : vector<8x128xf32>
    %397 = vector.extract_strided_slice %356 {offsets = [8, 0], sizes = [8, 384], strides = [1, 1]} : vector<16x384xf32> to vector<8x384xf32>
    %398 = arith.truncf %396 : vector<8x128xf32> to vector<8x128xbf16>
    %cst_172 = arith.constant dense<0.000000e+00> : vector<8x384xf32>
    %399 = tpu.matmul %398, %363, %cst_172 {dimension_numbers = #tpu.dot_dimension_numbers<[1], [0], [0], [1], [0, 0, 1, 1], [], []>} : vector<8x128xbf16>, vector<128x384xbf16>, vector<8x384xf32> -> vector<8x384xf32>
    %400 = vector.broadcast %364 : vector<1x384xf32> to vector<8x384xf32>
    %401 = arith.addf %399, %400 : vector<8x384xf32>
    %402 = vector.extract_strided_slice %397 {offsets = [0, 0], sizes = [8, 128], strides = [1, 1]} : vector<8x384xf32> to vector<8x128xf32>
    %403 = vector.extract_strided_slice %401 {offsets = [0, 0], sizes = [8, 128], strides = [1, 1]} : vector<8x384xf32> to vector<8x128xf32>
    %404 = arith.addf %402, %403 : vector<8x128xf32>
    %405 = arith.negf %404 : vector<8x128xf32>
    %406 = math.exp %405 : vector<8x128xf32>
    %cst_173 = arith.constant 1.000000e+00 : f32
    %407 = vector.broadcast %cst_173 : f32 to vector<8x128xf32>
    %408 = arith.addf %407, %406 : vector<8x128xf32>
    %409 = arith.divf %407, %408 : vector<8x128xf32>
    %410 = vector.extract_strided_slice %397 {offsets = [0, 128], sizes = [8, 128], strides = [1, 1]} : vector<8x384xf32> to vector<8x128xf32>
    %411 = vector.extract_strided_slice %401 {offsets = [0, 128], sizes = [8, 128], strides = [1, 1]} : vector<8x384xf32> to vector<8x128xf32>
    %412 = arith.addf %410, %411 : vector<8x128xf32>
    %413 = arith.negf %412 : vector<8x128xf32>
    %414 = math.exp %413 : vector<8x128xf32>
    %cst_174 = arith.constant 1.000000e+00 : f32
    %415 = vector.broadcast %cst_174 : f32 to vector<8x128xf32>
    %416 = arith.addf %415, %414 : vector<8x128xf32>
    %417 = arith.divf %415, %416 : vector<8x128xf32>
    %418 = vector.extract_strided_slice %397 {offsets = [0, 256], sizes = [8, 128], strides = [1, 1]} : vector<8x384xf32> to vector<8x128xf32>
    %419 = vector.extract_strided_slice %401 {offsets = [0, 256], sizes = [8, 128], strides = [1, 1]} : vector<8x384xf32> to vector<8x128xf32>
    %420 = arith.mulf %409, %419 : vector<8x128xf32>
    %421 = arith.addf %418, %420 : vector<8x128xf32>
    %422 = math.tanh %421 : vector<8x128xf32>
    %cst_175 = arith.constant 1.000000e+00 : f32
    %423 = vector.broadcast %cst_175 : f32 to vector<8x128xf32>
    %424 = arith.subf %423, %417 : vector<8x128xf32>
    %425 = arith.mulf %424, %422 : vector<8x128xf32>
    %426 = arith.mulf %417, %396 : vector<8x128xf32>
    %427 = arith.addf %425, %426 : vector<8x128xf32>
    %428 = tpu.concatenate %396, %427 in 0 : vector<8x128xf32>, vector<8x128xf32> -> vector<16x128xf32>
    %c0_176 = arith.constant 0 : index
    %c0_177 = arith.constant 0 : index
    %429 = vector.load %arg27[%c0_176, %c0_177] : memref<128x128xbf16, #tpu.memory_space<vmem>>, vector<128x128xbf16>
    %430 = arith.truncf %428 : vector<16x128xf32> to vector<16x128xbf16>
    %cst_178 = arith.constant dense<0.000000e+00> : vector<16x128xf32>
    %431 = tpu.matmul %430, %429, %cst_178 {dimension_numbers = #tpu.dot_dimension_numbers<[1], [0], [0], [1], [0, 0, 1, 1], [], []>} : vector<16x128xbf16>, vector<128x128xbf16>, vector<16x128xf32> -> vector<16x128xf32>
    %432 = arith.addf %362, %431 : vector<16x128xf32>
    %c0_179 = arith.constant 0 : index
    %c0_180 = arith.constant 0 : index
    %433 = vector.load %arg3[%c0_179, %c0_180] : memref<1x128xf32, #tpu.memory_space<vmem>>, vector<1x128xf32>
    %434 = vector.broadcast %433 : vector<1x128xf32> to vector<16x128xf32>
    %435 = arith.mulf %432, %434 : vector<16x128xf32>
    %cst_181 = arith.constant dense<0.000000e+00> : vector<16xf32>
    %436 = vector.multi_reduction <add>, %435, %cst_181 [1] : vector<16x128xf32> to vector<16xf32>
    %437 = vector.shape_cast %436 : vector<16xf32> to vector<16x1xf32>
    %cst_182 = arith.constant 3.125000e-02 : f32
    %438 = vector.broadcast %cst_182 : f32 to vector<16x1xf32>
    %439 = arith.mulf %437, %438 : vector<16x1xf32>
    %440 = vector.broadcast %439 : vector<16x1xf32> to vector<16x128xf32>
    %441 = arith.subf %432, %440 : vector<16x128xf32>
    %442 = vector.broadcast %433 : vector<1x128xf32> to vector<16x128xf32>
    %443 = arith.mulf %441, %442 : vector<16x128xf32>
    %444 = arith.mulf %443, %443 : vector<16x128xf32>
    %cst_183 = arith.constant dense<0.000000e+00> : vector<16xf32>
    %445 = vector.multi_reduction <add>, %444, %cst_183 [1] : vector<16x128xf32> to vector<16xf32>
    %446 = vector.shape_cast %445 : vector<16xf32> to vector<16x1xf32>
    %cst_184 = arith.constant 3.125000e-02 : f32
    %447 = vector.broadcast %cst_184 : f32 to vector<16x1xf32>
    %448 = arith.mulf %446, %447 : vector<16x1xf32>
    %cst_185 = arith.constant 9.99999974E-6 : f32
    %449 = vector.broadcast %cst_185 : f32 to vector<16x1xf32>
    %450 = arith.addf %448, %449 : vector<16x1xf32>
    %451 = math.rsqrt %450 : vector<16x1xf32>
    %452 = vector.broadcast %451 : vector<16x1xf32> to vector<16x128xf32>
    %453 = arith.mulf %443, %452 : vector<16x128xf32>
    %c0_186 = arith.constant 0 : index
    %c0_187 = arith.constant 0 : index
    %454 = vector.load %arg29[%c0_186, %c0_187] : memref<1x128xf32, #tpu.memory_space<vmem>>, vector<1x128xf32>
    %455 = vector.broadcast %454 : vector<1x128xf32> to vector<16x128xf32>
    %456 = arith.mulf %453, %455 : vector<16x128xf32>
    %c0_188 = arith.constant 0 : index
    %c0_189 = arith.constant 0 : index
    %457 = vector.load %arg30[%c0_188, %c0_189] : memref<1x128xf32, #tpu.memory_space<vmem>>, vector<1x128xf32>
    %458 = vector.broadcast %457 : vector<1x128xf32> to vector<16x128xf32>
    %459 = arith.addf %456, %458 : vector<16x128xf32>
    %c0_190 = arith.constant 0 : index
    %c0_191 = arith.constant 0 : index
    %460 = vector.load %arg31[%c0_190, %c0_191] : memref<16x128xf32, #tpu.memory_space<vmem>>, vector<16x128xf32>
    tpu.vector_store %arg31[%c0_190, %c0_191], %459 {strides = array<i32>} : memref<16x128xf32, #tpu.memory_space<vmem>>, vector<16x128xf32>,
    return
  }
}

</mosaic_0001>

<llo_original>
// kernel: transnar_forward.1
$region0: #{transnar_forward.1}
  #allocation0 [shape = 'u32[]', space=smem, size = 0x4, offset = 0x4, fixed_abs, tag = 'smem constant byte address 0x4 - core index']
  #allocation1 [shape = 'u32[72,128]{1,0:T(1,128)}', space=vmem, size = 0x9000, scoped, tag = 'internal scratch']
  %s0 = inlined_call_operand.smem [shape: u32[32], index: -1, kind: input, shape index: {}]
  %s1 = sld [smem:[%s0]]
  %s2 = scalar_lea.smem %s0, 1
  %s3 = sld [smem:[%s2]]
  %s4 = scalar_lea.smem %s0, 2
  %s5 = sld [smem:[%s4]]
  %s6 = scalar_lea.smem %s0, 3
  %s7 = sld [smem:[%s6]]
  %s8 = scalar_lea.smem %s0, 4
  %s9 = sld [smem:[%s8]]
  %s10 = scalar_lea.smem %s0, 5
  %s11 = sld [smem:[%s10]]
  %s12 = scalar_lea.smem %s0, 6
  %s13 = sld [smem:[%s12]]
  %s14 = scalar_lea.smem %s0, 7
  %s15 = sld [smem:[%s14]]
  %s16 = scalar_lea.smem %s0, 8
  %s17 = sld [smem:[%s16]]
  %s18 = scalar_lea.smem %s0, 9
  %s19 = sld [smem:[%s18]]
  %s20 = scalar_lea.smem %s0, 10
  %s21 = sld [smem:[%s20]]
  %s22 = scalar_lea.smem %s0, 11
  %s23 = sld [smem:[%s22]]
  %s24 = scalar_lea.smem %s0, 12
  %s25 = sld [smem:[%s24]]
  %s26 = scalar_lea.smem %s0, 13
  %s27 = sld [smem:[%s26]]
  %s28 = scalar_lea.smem %s0, 14
  %s29 = sld [smem:[%s28]]
  %s30 = scalar_lea.smem %s0, 15
  %s31 = sld [smem:[%s30]]
  %s32 = scalar_lea.smem %s0, 16
  %s33 = sld [smem:[%s32]]
  %s34 = scalar_lea.smem %s0, 17
  %s35 = sld [smem:[%s34]]
  %s36 = scalar_lea.smem %s0, 18
  %s37 = sld [smem:[%s36]]
  %s38 = scalar_lea.smem %s0, 19
  %s39 = sld [smem:[%s38]]
  %s40 = scalar_lea.smem %s0, 20
  %s41 = sld [smem:[%s40]]
  %s42 = scalar_lea.smem %s0, 21
  %s43 = sld [smem:[%s42]]
  %s44 = scalar_lea.smem %s0, 22
  %s45 = sld [smem:[%s44]]
  %s46 = scalar_lea.smem %s0, 23
  %s47 = sld [smem:[%s46]]
  %s48 = scalar_lea.smem %s0, 24
  %s49 = sld [smem:[%s48]]
  %s50 = scalar_lea.smem %s0, 25
  %s51 = sld [smem:[%s50]]
  %s52 = scalar_lea.smem %s0, 26
  %s53 = sld [smem:[%s52]]
  %s54 = scalar_lea.smem %s0, 27
  %s55 = sld [smem:[%s54]]
  %s56 = scalar_lea.smem %s0, 28
  %s57 = sld [smem:[%s56]]
  %s58 = scalar_lea.smem %s0, 29
  %s59 = sld [smem:[%s58]]
  %s60 = scalar_lea.smem %s0, 30
  %s61 = sld [smem:[%s60]]
  %s62 = scalar_lea.smem %s0, 31
  %s63 = sld [smem:[%s62]]
  %s64 = sld [smem:[#allocation0]]
  $region170: #{transnar_forward.1} parent=0
    _
  %s66 = ssub.s32 1, %s64
  %s67 = scalar_select 0, %s66, %s64
  $region1: #{transnar_forward.1} parent=0
    #allocation2 [shape = 'u8[65536]{0}', space=vmem, size = 0x10000, scoped, tag = 'input window, operand 8, single buffered']
    #allocation3 [shape = 's32[1]{0}', space=sflag, size = 0x4, scoped, tag = 'scoped memory for transnar_forward.1']
    #allocation4 [shape = 'u8[131072]{0}', space=vmem, size = 0x20000, scoped, tag = 'input window, operand 12, single buffered']
    #allocation5 [shape = 's32[1]{0}', space=sflag, size = 0x4, scoped, tag = 'scoped memory for transnar_forward.1']
    #allocation6 [shape = 'u8[131072]{0}', space=vmem, size = 0x20000, scoped, tag = 'input window, operand 14, single buffered']
    #allocation7 [shape = 'u8[65536]{0}', space=vmem, size = 0x10000, scoped, tag = 'input window, operand 18, single buffered']
    #allocation8 [shape = 's32[1]{0}', space=sflag, size = 0x4, scoped, tag = 'scoped memory for transnar_forward.1']
    #allocation9 [shape = 'u8[65536]{0}', space=vmem, size = 0x10000, scoped, tag = 'input window, operand 20, single buffered']
    #allocation10 [shape = 'u8[98304]{0}', space=vmem, size = 0x18000, scoped, tag = 'input window, operand 22, single buffered']
    #allocation11 [shape = 's32[1]{0}', space=sflag, size = 0x4, scoped, tag = 'scoped memory for transnar_forward.1']
    #allocation12 [shape = 'u8[98304]{0}', space=vmem, size = 0x18000, scoped, tag = 'input window, operand 24, single buffered']
    #allocation13 [shape = 'u8[32768]{0}', space=vmem, size = 0x8000, scoped, tag = 'input window, operand 26, single buffered']
    #allocation14 [shape = 's32[1]{0}', space=sflag, size = 0x4, scoped, tag = 'scoped memory for transnar_forward.1']
    #allocation15 [shape = 'u8[32768]{0}', space=vmem, size = 0x8000, scoped, tag = 'input window, operand 27, single buffered']
    %68 = vsyncpa [#allocation3], 0
    %69 = vsyncpa [#allocation5], 0
    %70 = vsyncpa [#allocation8], 0
    %71 = vsyncpa [#allocation11], 0
    %72 = vsyncpa [#allocation14], 0
    // Predicated region
    $region2: #{transnar_forward.1} parent=1 // pred_check
      _
    $region3: #{transnar_forward.1} parent=1 // pred_check_branch
      %74 = sbr.rel (0) target = $region5
    $region4: #{transnar_forward.1} parent=1 // pred_region
      _
    $region5: #{transnar_forward.1} parent=1 // pred_fallthru
      _
    // Predicated region
    $region6: #{transnar_forward.1} parent=1 // pred_check
      _
    $region7: #{transnar_forward.1} parent=1 // pred_check_branch
      %76 = sbr.rel (0) target = $region9
    $region8: #{transnar_forward.1} parent=1 // pred_region
      _
    $region9: #{transnar_forward.1} parent=1 // pred_fallthru
      _
    // Predicated region
    $region10: #{transnar_forward.1} parent=1 // pred_check
      _
    $region11: #{transnar_forward.1} parent=1 // pred_check_branch
      %78 = sbr.rel (0) target = $region13
    $region12: #{transnar_forward.1} parent=1 // pred_region
      _
    $region13: #{transnar_forward.1} parent=1 // pred_fallthru
      _
    // Predicated region
    $region14: #{transnar_forward.1} parent=1 // pred_check
      _
    $region15: #{transnar_forward.1} parent=1 // pred_check_branch
      %80 = sbr.rel (0) target = $region17
    $region16: #{transnar_forward.1} parent=1 // pred_region
      _
    $region17: #{transnar_forward.1} parent=1 // pred_fallthru
      _
    // Predicated region
    $region18: #{transnar_forward.1} parent=1 // pred_check
      _
    $region19: #{transnar_forward.1} parent=1 // pred_check_branch
      %82 = sbr.rel (0) target = $region21
    $region20: #{transnar_forward.1} parent=1 // pred_region
      _
    $region21: #{transnar_forward.1} parent=1 // pred_fallthru
      _
    // Predicated region
    $region22: #{transnar_forward.1} parent=1 // pred_check
      _
    $region23: #{transnar_forward.1} parent=1 // pred_check_branch
      %84 = sbr.rel (0) target = $region25
    $region24: #{transnar_forward.1} parent=1 // pred_region
      _
    $region25: #{transnar_forward.1} parent=1 // pred_fallthru
      _
    // Predicated region
    $region26: #{transnar_forward.1} parent=1 // pred_check
      _
    $region27: #{transnar_forward.1} parent=1 // pred_check_branch
      %86 = sbr.rel (0) target = $region29
    $region28: #{transnar_forward.1} parent=1 // pred_region
      _
    $region29: #{transnar_forward.1} parent=1 // pred_fallthru
      _
    // Predicated region
    $region30: #{transnar_forward.1} parent=1 // pred_check
      _
    $region31: #{transnar_forward.1} parent=1 // pred_check_branch
      %88 = sbr.rel (0) target = $region33
    $region32: #{transnar_forward.1} parent=1 // pred_region
      _
    $region33: #{transnar_forward.1} parent=1 // pred_fallthru
      _
    // Predicated region
    $region34: #{transnar_forward.1} parent=1 // pred_check
      _
    $region35: #{transnar_forward.1} parent=1 // pred_check_branch
      %90 = sbr.rel (0) target = $region37
    $region36: #{transnar_forward.1} parent=1 // pred_region
      %92 = vsyncadd [#allocation3], 0
      %s93 = sshll.u32 %s17, 4
      %s94 = int_to_ptr.hbm [resolvable:$true] %s93
      %s95 = sshll.u32 [#allocation2], 4
      %s96 = int_to_ptr.vmem [resolvable:$true] %s95
      %101 = dma.hbm_to_vmem [thread:$0]  %s94, 2048, %s96, [#allocation3], 64, 64, 4
    $region37: #{transnar_forward.1} parent=1 // pred_fallthru
      _
    // Predicated region
    $region38: #{transnar_forward.1} parent=1 // pred_check
      _
    $region39: #{transnar_forward.1} parent=1 // pred_check_branch
      %103 = sbr.rel (0) target = $region41
    $region40: #{transnar_forward.1} parent=1 // pred_region
      _
    $region41: #{transnar_forward.1} parent=1 // pred_fallthru
      _
    // Predicated region
    $region42: #{transnar_forward.1} parent=1 // pred_check
      _
    $region43: #{transnar_forward.1} parent=1 // pred_check_branch
      %105 = sbr.rel (0) target = $region45
    $region44: #{transnar_forward.1} parent=1 // pred_region
      _
    $region45: #{transnar_forward.1} parent=1 // pred_fallthru
      _
    // Predicated region
    $region46: #{transnar_forward.1} parent=1 // pred_check
      _
    $region47: #{transnar_forward.1} parent=1 // pred_check_branch
      %107 = sbr.rel (0) target = $region49
    $region48: #{transnar_forward.1} parent=1 // pred_region
      _
    $region49: #{transnar_forward.1} parent=1 // pred_fallthru
      _
    // Predicated region
    $region50: #{transnar_forward.1} parent=1 // pred_check
      _
    $region51: #{transnar_forward.1} parent=1 // pred_check_branch
      %109 = sbr.rel (0) target = $region53
    $region52: #{transnar_forward.1} parent=1 // pred_region
      %111 = vsyncadd [#allocation5], 0
      %s112 = sshll.u32 %s25, 4
      %s113 = int_to_ptr.hbm [resolvable:$true] %s112
      %s114 = sshll.u32 [#allocation4], 4
      %s115 = int_to_ptr.vmem [resolvable:$true] %s114
      %120 = dma.hbm_to_vmem [thread:$0]  %s113, 4096, %s115, [#allocation5], 128, 128, 8
    $region53: #{transnar_forward.1} parent=1 // pred_fallthru
      _
    // Predicated region
    $region54: #{transnar_forward.1} parent=1 // pred_check
      _
    $region55: #{transnar_forward.1} parent=1 // pred_check_branch
      %122 = sbr.rel (0) target = $region57
    $region56: #{transnar_forward.1} parent=1 // pred_region
      _
    $region57: #{transnar_forward.1} parent=1 // pred_fallthru
      _
    // Predicated region
    $region58: #{transnar_forward.1} parent=1 // pred_check
      _
    $region59: #{transnar_forward.1} parent=1 // pred_check_branch
      %124 = sbr.rel (0) target = $region61
    $region60: #{transnar_forward.1} parent=1 // pred_region
      %126 = vsyncadd [#allocation5], 0
      %s127 = sshll.u32 %s29, 4
      %s128 = int_to_ptr.hbm [resolvable:$true] %s127
      %s129 = sshll.u32 [#allocation6], 4
      %s130 = int_to_ptr.vmem [resolvable:$true] %s129
      %135 = dma.hbm_to_vmem [thread:$0]  %s128, 4096, %s130, [#allocation5], 64, 64, 4
    $region61: #{transnar_forward.1} parent=1 // pred_fallthru
      _
    // Predicated region
    $region62: #{transnar_forward.1} parent=1 // pred_check
      _
    $region63: #{transnar_forward.1} parent=1 // pred_check_branch
      %137 = sbr.rel (0) target = $region65
    $region64: #{transnar_forward.1} parent=1 // pred_region
      _
    $region65: #{transnar_forward.1} parent=1 // pred_fallthru
      _
    // Predicated region
    $region66: #{transnar_forward.1} parent=1 // pred_check
      _
    $region67: #{transnar_forward.1} parent=1 // pred_check_branch
      %139 = sbr.rel (0) target = $region69
    $region68: #{transnar_forward.1} parent=1 // pred_region
      _
    $region69: #{transnar_forward.1} parent=1 // pred_fallthru
      _
    // Predicated region
    $region70: #{transnar_forward.1} parent=1 // pred_check
      _
    $region71: #{transnar_forward.1} parent=1 // pred_check_branch
      %141 = sbr.rel (0) target = $region73
    $region72: #{transnar_forward.1} parent=1 // pred_region
      _
    $region73: #{transnar_forward.1} parent=1 // pred_fallthru
      _
    // Predicated region
    $region74: #{transnar_forward.1} parent=1 // pred_check
      _
    $region75: #{transnar_forward.1} parent=1 // pred_check_branch
      %143 = sbr.rel (0) target = $region77
    $region76: #{transnar_forward.1} parent=1 // pred_region
      %145 = vsyncadd [#allocation8], 0
      %s146 = sshll.u32 %s37, 4
      %s147 = int_to_ptr.hbm [resolvable:$true] %s146
      %s148 = sshll.u32 [#allocation7], 4
      %s149 = int_to_ptr.vmem [resolvable:$true] %s148
      %154 = dma.hbm_to_vmem [thread:$0]  %s147, 2048, %s149, [#allocation8], 128, 128, 8
    $region77: #{transnar_forward.1} parent=1 // pred_fallthru
      _
    // Predicated region
    $region78: #{transnar_forward.1} parent=1 // pred_check
      _
    $region79: #{transnar_forward.1} parent=1 // pred_check_branch
      %156 = sbr.rel (0) target = $region81
    $region80: #{transnar_forward.1} parent=1 // pred_region
      _
    $region81: #{transnar_forward.1} parent=1 // pred_fallthru
      _
    // Predicated region
    $region82: #{transnar_forward.1} parent=1 // pred_check
      _
    $region83: #{transnar_forward.1} parent=1 // pred_check_branch
      %158 = sbr.rel (0) target = $region85
    $region84: #{transnar_forward.1} parent=1 // pred_region
      %160 = vsyncadd [#allocation8], 0
      %s161 = sshll.u32 %s41, 4
      %s162 = int_to_ptr.hbm [resolvable:$true] %s161
      %s163 = sshll.u32 [#allocation9], 4
      %s164 = int_to_ptr.vmem [resolvable:$true] %s163
      %169 = dma.hbm_to_vmem [thread:$0]  %s162, 2048, %s164, [#allocation8], 64, 64, 4
    $region85: #{transnar_forward.1} parent=1 // pred_fallthru
      _
    // Predicated region
    $region86: #{transnar_forward.1} parent=1 // pred_check
      _
    $region87: #{transnar_forward.1} parent=1 // pred_check_branch
      %171 = sbr.rel (0) target = $region89
    $region88: #{transnar_forward.1} parent=1 // pred_region
      _
    $region89: #{transnar_forward.1} parent=1 // pred_fallthru
      _
    // Predicated region
    $region90: #{transnar_forward.1} parent=1 // pred_check
      _
    $region91: #{transnar_forward.1} parent=1 // pred_check_branch
      %173 = sbr.rel (0) target = $region93
    $region92: #{transnar_forward.1} parent=1 // pred_region
      %175 = vsyncadd [#allocation11], 0
      %s176 = sshll.u32 %s45, 4
      %s177 = int_to_ptr.hbm [resolvable:$true] %s176
      %s178 = sshll.u32 [#allocation10], 4
      %s179 = int_to_ptr.vmem [resolvable:$true] %s178
      %184 = dma.hbm_to_vmem [thread:$0]  %s177, 3072, %s179, [#allocation11], 192, 192, 12
    $region93: #{transnar_forward.1} parent=1 // pred_fallthru
      _
    // Predicated region
    $region94: #{transnar_forward.1} parent=1 // pred_check
      _
    $region95: #{transnar_forward.1} parent=1 // pred_check_branch
      %186 = sbr.rel (0) target = $region97
    $region96: #{transnar_forward.1} parent=1 // pred_region
      _
    $region97: #{transnar_forward.1} parent=1 // pred_fallthru
      _
    // Predicated region
    $region98: #{transnar_forward.1} parent=1 // pred_check
      _
    $region99: #{transnar_forward.1} parent=1 // pred_check_branch
      %188 = sbr.rel (0) target = $region101
    $region100: #{transnar_forward.1} parent=1 // pred_region
      %190 = vsyncadd [#allocation11], 0
      %s191 = sshll.u32 %s49, 4
      %s192 = int_to_ptr.hbm [resolvable:$true] %s191
      %s193 = sshll.u32 [#allocation12], 4
      %s194 = int_to_ptr.vmem [resolvable:$true] %s193
      %199 = dma.hbm_to_vmem [thread:$0]  %s192, 3072, %s194, [#allocation11], 192, 192, 12
    $region101: #{transnar_forward.1} parent=1 // pred_fallthru
      _
    // Predicated region
    $region102: #{transnar_forward.1} parent=1 // pred_check
      _
    $region103: #{transnar_forward.1} parent=1 // pred_check_branch
      %201 = sbr.rel (0) target = $region105
    $region104: #{transnar_forward.1} parent=1 // pred_region
      _
    $region105: #{transnar_forward.1} parent=1 // pred_fallthru
      _
    // Predicated region
    $region106: #{transnar_forward.1} parent=1 // pred_check
      _
    $region107: #{transnar_forward.1} parent=1 // pred_check_branch
      %203 = sbr.rel (0) target = $region109
    $region108: #{transnar_forward.1} parent=1 // pred_region
      %205 = vsyncadd [#allocation14], 0
      %s206 = sshll.u32 %s53, 4
      %s207 = int_to_ptr.hbm [resolvable:$true] %s206
      %s208 = sshll.u32 [#allocation13], 4
      %s209 = int_to_ptr.vmem [resolvable:$true] %s208
      %214 = dma.hbm_to_vmem [thread:$0]  %s207, 1024, %s209, [#allocation14], 64, 64, 4
    $region109: #{transnar_forward.1} parent=1 // pred_fallthru
      _
    // Predicated region
    $region110: #{transnar_forward.1} parent=1 // pred_check
      _
    $region111: #{transnar_forward.1} parent=1 // pred_check_branch
      %216 = sbr.rel (0) target = $region113
    $region112: #{transnar_forward.1} parent=1 // pred_region
      %218 = vsyncadd [#allocation14], 0
      %s219 = sshll.u32 %s55, 4
      %s220 = int_to_ptr.hbm [resolvable:$true] %s219
      %s221 = sshll.u32 [#allocation15], 4
      %s222 = int_to_ptr.vmem [resolvable:$true] %s221
      %227 = dma.hbm_to_vmem [thread:$0]  %s220, 1024, %s222, [#allocation14], 64, 64, 4
    $region113: #{transnar_forward.1} parent=1 // pred_fallthru
      _
    // Predicated region
    $region114: #{transnar_forward.1} parent=1 // pred_check
      _
    $region115: #{transnar_forward.1} parent=1 // pred_check_branch
      %229 = sbr.rel (0) target = $region117
    $region116: #{transnar_forward.1} parent=1 // pred_region
      _
    $region117: #{transnar_forward.1} parent=1 // pred_fallthru
      _
    // Predicated region
    $region118: #{transnar_forward.1} parent=1 // pred_check
      _
    $region119: #{transnar_forward.1} parent=1 // pred_check_branch
      %231 = sbr.rel (0) target = $region121
    $region120: #{transnar_forward.1} parent=1 // pred_region
      _
    $region121: #{transnar_forward.1} parent=1 // pred_fallthru
      _
    // Predicated region
    $region122: #{transnar_forward.1} parent=1 // pred_check
      _
    $region123: #{transnar_forward.1} parent=1 // pred_check_branch
      %233 = sbr.rel (0) target = $region125
    $region124: #{transnar_forward.1} parent=1 // pred_region
      _
    $region125: #{transnar_forward.1} parent=1 // pred_fallthru
      _
    // Predicated region
    $region126: #{transnar_forward.1} parent=1 // pred_check
      _
    $region127: #{transnar_forward.1} parent=1 // pred_check_branch
      %235 = sbr.rel (0) target = $region129
    $region128: #{transnar_forward.1} parent=1 // pred_region
      %237 = dma.done [#allocation3], 2048
    $region129: #{transnar_forward.1} parent=1 // pred_fallthru
      _
    // Predicated region
    $region130: #{transnar_forward.1} parent=1 // pred_check
      _
    $region131: #{transnar_forward.1} parent=1 // pred_check_branch
      %239 = sbr.rel (0) target = $region133
    $region132: #{transnar_forward.1} parent=1 // pred_region
      %241 = dma.done [#allocation5], 4096
    $region133: #{transnar_forward.1} parent=1 // pred_fallthru
      _
    // Predicated region
    $region134: #{transnar_forward.1} parent=1 // pred_check
      _
    $region135: #{transnar_forward.1} parent=1 // pred_check_branch
      %243 = sbr.rel (0) target = $region137
    $region136: #{transnar_forward.1} parent=1 // pred_region
      %245 = dma.done [#allocation5], 4096
    $region137: #{transnar_forward.1} parent=1 // pred_fallthru
      _
    // Predicated region
    $region138: #{transnar_forward.1} parent=1 // pred_check
      _
    $region139: #{transnar_forward.1} parent=1 // pred_check_branch
      %247 = sbr.rel (0) target = $region141
    $region140: #{transnar_forward.1} parent=1 // pred_region
      %249 = dma.done [#allocation8], 2048
    $region141: #{transnar_forward.1} parent=1 // pred_fallthru
      _
    // Predicated region
    $region142: #{transnar_forward.1} parent=1 // pred_check
      _
    $region143: #{transnar_forward.1} parent=1 // pred_check_branch
      %251 = sbr.rel (0) target = $region145
    $region144: #{transnar_forward.1} parent=1 // pred_region
      %253 = dma.done [#allocation8], 2048
    $region145: #{transnar_forward.1} parent=1 // pred_fallthru
      _
    // Predicated region
    $region146: #{transnar_forward.1} parent=1 // pred_check
      _
    $region147: #{transnar_forward.1} parent=1 // pred_check_branch
      %255 = sbr.rel (0) target = $region149
    $region148: #{transnar_forward.1} parent=1 // pred_region
      %257 = dma.done [#allocation11], 3072
    $region149: #{transnar_forward.1} parent=1 // pred_fallthru
      _
    // Predicated region
    $region150: #{transnar_forward.1} parent=1 // pred_check
      _
    $region151: #{transnar_forward.1} parent=1 // pred_check_branch
      %259 = sbr.rel (0) target = $region153
    $region152: #{transnar_forward.1} parent=1 // pred_region
      %261 = dma.done [#allocation11], 3072
    $region153: #{transnar_forward.1} parent=1 // pred_fallthru
      _
    // Predicated region
    $region154: #{transnar_forward.1} parent=1 // pred_check
      _
    $region155: #{transnar_forward.1} parent=1 // pred_check_branch
      %263 = sbr.rel (0) target = $region157
    $region156: #{transnar_forward.1} parent=1 // pred_region
      %265 = dma.done [#allocation14], 1024
    $region157: #{transnar_forward.1} parent=1 // pred_fallthru
      _
    // Predicated region
    $region158: #{transnar_forward.1} parent=1 // pred_check
      _
    $region159: #{transnar_forward.1} parent=1 // pred_check_branch
      %267 = sbr.rel (0) target = $region161
    $region160: #{transnar_forward.1} parent=1 // pred_region
      %269 = dma.done [#allocation14], 1024
    $region161: #{transnar_forward.1} parent=1 // pred_fallthru
      _
    %v271 = vld [vmem:[%s1] sm:$0xff]
    %v272 = vld [vmem:[%s1 + $0x8] sm:$0xff]
    %v273 = vld [vmem:[%s9] sm:$0xf]
    %v274 = vld [vmem:[%s9 + $0x4] sm:$0xf]
    %v275 = vld [vmem:[%s9 + $0x8] sm:$0xf]
    %v276 = vld [vmem:[%s9 + $0xc] sm:$0xf]
    %v277 = vld [vmem:[%s9 + $0x10] sm:$0xf]
    %v278 = vld [vmem:[%s9 + $0x14] sm:$0xf]
    %v279 = vld [vmem:[%s9 + $0x18] sm:$0xf]
    %v280 = vld [vmem:[%s9 + $0x1c] sm:$0xf]
    %v281 = vld [vmem:[%s9 + $0x20] sm:$0xf]
    %v282 = vld [vmem:[%s9 + $0x24] sm:$0xf]
    %v283 = vld [vmem:[%s9 + $0x28] sm:$0xf]
    %v284 = vld [vmem:[%s9 + $0x2c] sm:$0xf]
    %v285 = vld [vmem:[%s9 + $0x30] sm:$0xf]
    %v286 = vld [vmem:[%s9 + $0x34] sm:$0xf]
    %v287 = vld [vmem:[%s9 + $0x38] sm:$0xf]
    %v288 = vld [vmem:[%s9 + $0x3c] sm:$0xf]
    %v289 = vpack.c.bf16 %v272, %v271
    %v290 = vld [vmem:[%s11] sm:$0x1]
    %v292 = vperm.slane %v290, 0
    %v310 = vunpack.c.l.b16 %v273
    %v311 = vunpack.c.l.b16 %v274
    %v312 = vunpack.c.l.b16 %v275
    %v313 = vunpack.c.l.b16 %v276
    %v314 = vunpack.c.l.b16 %v277
    %v315 = vunpack.c.l.b16 %v278
    %v316 = vunpack.c.l.b16 %v279
    %v317 = vunpack.c.l.b16 %v280
    %v318 = vunpack.c.l.b16 %v281
    %v319 = vunpack.c.l.b16 %v282
    %v320 = vunpack.c.l.b16 %v283
    %v321 = vunpack.c.l.b16 %v284
    %v322 = vunpack.c.l.b16 %v285
    %v323 = vunpack.c.l.b16 %v286
    %v324 = vunpack.c.l.b16 %v287
    %v325 = vunpack.c.l.b16 %v288
    %v326 = vpack.c.b16 %v311, %v310
    %v327 = vpack.c.b16 %v313, %v312
    %v328 = vpack.c.b16 %v315, %v314
    %v329 = vpack.c.b16 %v317, %v316
    %v330 = vpack.c.b16 %v319, %v318
    %v331 = vpack.c.b16 %v321, %v320
    %v332 = vpack.c.b16 %v323, %v322
    %v333 = vpack.c.b16 %v325, %v324
    %342 = vmatpush.bf16.msra.mxu0 %v333
    %343 = vmatpush.bf16.msra.mxu0 %v332
    %344 = vmatpush.bf16.msra.mxu0 %v331
    %345 = vmatpush.bf16.msra.mxu0 %v330
    %346 = vmatpush.bf16.msra.mxu0 %v329
    %347 = vmatpush.bf16.msra.mxu0 %v328
    %348 = vmatpush.bf16.msra.mxu0 %v327
    %349 = vmatpush.bf16.msra.mxu0 %v326
    %350 = vmatmul.bf16.gmra.mxu0 %v289
    %v351 = vpop.f32.mrf.mxu0
    %v352 = vadd.f32 %v292, %v351
    %v353 = vpop.f32.mrf.mxu0
    %v354 = vadd.f32 %v292, %v353
    %355 = vdwg.mxu0
    %v356 = vld [vmem:[%s3] sm:$0xff]
    %v357 = vld [vmem:[%s3 + $0x8] sm:$0xff]
    %v358 = vadd.f32 %v352, %v356
    %v359 = vadd.f32 %v354, %v357
    %v360 = vld [vmem:[%s5] sm:$0xff]
    %v361 = vld [vmem:[%s5 + $0x8] sm:$0xff]
    %v362 = vld [vmem:[%s13] sm:$0xff]
    %v363 = vld [vmem:[%s13 + $0x8] sm:$0xf]
    %v364 = vld [vmem:[%s13 + $0xc] sm:$0xff]
    %v365 = vld [vmem:[%s13 + $0x14] sm:$0xf]
    %v366 = vld [vmem:[%s13 + $0x18] sm:$0xff]
    %v367 = vld [vmem:[%s13 + $0x20] sm:$0xf]
    %v368 = vld [vmem:[%s13 + $0x24] sm:$0xff]
    %v369 = vld [vmem:[%s13 + $0x2c] sm:$0xf]
    %v370 = vld [vmem:[%s13 + $0x30] sm:$0xff]
    %v371 = vld [vmem:[%s13 + $0x38] sm:$0xf]
    %v372 = vld [vmem:[%s13 + $0x3c] sm:$0xff]
    %v373 = vld [vmem:[%s13 + $0x44] sm:$0xf]
    %v374 = vld [vmem:[%s13 + $0x48] sm:$0xff]
    %v375 = vld [vmem:[%s13 + $0x50] sm:$0xf]
    %v376 = vld [vmem:[%s13 + $0x54] sm:$0xff]
    %v377 = vld [vmem:[%s13 + $0x5c] sm:$0xf]
    %v378 = vld [vmem:[%s13 + $0x60] sm:$0xff]
    %v379 = vld [vmem:[%s13 + $0x68] sm:$0xf]
    %v380 = vld [vmem:[%s13 + $0x6c] sm:$0xff]
    %v381 = vld [vmem:[%s13 + $0x74] sm:$0xf]
    %v382 = vld [vmem:[%s13 + $0x78] sm:$0xff]
    %v383 = vld [vmem:[%s13 + $0x80] sm:$0xf]
    %v384 = vld [vmem:[%s13 + $0x84] sm:$0xff]
    %v385 = vld [vmem:[%s13 + $0x8c] sm:$0xf]
    %v386 = vld [vmem:[%s13 + $0x90] sm:$0xff]
    %v387 = vld [vmem:[%s13 + $0x98] sm:$0xf]
    %v388 = vld [vmem:[%s13 + $0x9c] sm:$0xff]
    %v389 = vld [vmem:[%s13 + $0xa4] sm:$0xf]
    %v390 = vld [vmem:[%s13 + $0xa8] sm:$0xff]
    %v391 = vld [vmem:[%s13 + $0xb0] sm:$0xf]
    %v392 = vld [vmem:[%s13 + $0xb4] sm:$0xff]
    %v393 = vld [vmem:[%s13 + $0xbc] sm:$0xf]
    %v394 = vpack.c.bf16 %v359, %v358
    %v395 = vld [vmem:[%s15] sm:$0x7]
    %v397 = vperm.slane %v395, 0
    %v398 = vperm.slane %v395, 1
    %v399 = vperm.slane %v395, 2
    %v435 = vunpack.c.l.b16 %v362
    %v436 = vunpack.c.h.b16 %v362
    %v437 = vunpack.c.l.b16 %v363
    %v438 = vunpack.c.l.b16 %v364
    %v439 = vunpack.c.h.b16 %v364
    %v440 = vunpack.c.l.b16 %v365
    %v441 = vunpack.c.l.b16 %v366
    %v442 = vunpack.c.h.b16 %v366
    %v443 = vunpack.c.l.b16 %v367
    %v444 = vunpack.c.l.b16 %v368
    %v445 = vunpack.c.h.b16 %v368
    %v446 = vunpack.c.l.b16 %v369
    %v447 = vunpack.c.l.b16 %v370
    %v448 = vunpack.c.h.b16 %v370
    %v449 = vunpack.c.l.b16 %v371
    %v450 = vunpack.c.l.b16 %v372
    %v451 = vunpack.c.h.b16 %v372
    %v452 = vunpack.c.l.b16 %v373
    %v453 = vunpack.c.l.b16 %v374
    %v454 = vunpack.c.h.b16 %v374
    %v455 = vunpack.c.l.b16 %v375
    %v456 = vunpack.c.l.b16 %v376
    %v457 = vunpack.c.h.b16 %v376
    %v458 = vunpack.c.l.b16 %v377
    %v459 = vunpack.c.l.b16 %v378
    %v460 = vunpack.c.h.b16 %v378
    %v461 = vunpack.c.l.b16 %v379
    %v462 = vunpack.c.l.b16 %v380
    %v463 = vunpack.c.h.b16 %v380
    %v464 = vunpack.c.l.b16 %v381
    %v465 = vunpack.c.l.b16 %v382
    %v466 = vunpack.c.h.b16 %v382
    %v467 = vunpack.c.l.b16 %v383
    %v468 = vunpack.c.l.b16 %v384
    %v469 = vunpack.c.h.b16 %v384
    %v470 = vunpack.c.l.b16 %v385
    %v471 = vunpack.c.l.b16 %v386
    %v472 = vunpack.c.h.b16 %v386
    %v473 = vunpack.c.l.b16 %v387
    %v474 = vunpack.c.l.b16 %v388
    %v475 = vunpack.c.h.b16 %v388
    %v476 = vunpack.c.l.b16 %v389
    %v477 = vunpack.c.l.b16 %v390
    %v478 = vunpack.c.h.b16 %v390
    %v479 = vunpack.c.l.b16 %v391
    %v480 = vunpack.c.l.b16 %v392
    %v481 = vunpack.c.h.b16 %v392
    %v482 = vunpack.c.l.b16 %v393
    %v483 = vpack.c.b16 %v438, %v435
    %v484 = vpack.c.b16 %v439, %v436
    %v485 = vpack.c.b16 %v440, %v437
    %v486 = vpack.c.b16 %v444, %v441
    %v487 = vpack.c.b16 %v445, %v442
    %v488 = vpack.c.b16 %v446, %v443
    %v489 = vpack.c.b16 %v450, %v447
    %v490 = vpack.c.b16 %v451, %v448
    %v491 = vpack.c.b16 %v452, %v449
    %v492 = vpack.c.b16 %v456, %v453
    %v493 = vpack.c.b16 %v457, %v454
    %v494 = vpack.c.b16 %v458, %v455
    %v495 = vpack.c.b16 %v462, %v459
    %v496 = vpack.c.b16 %v463, %v460
    %v497 = vpack.c.b16 %v464, %v461
    %v498 = vpack.c.b16 %v468, %v465
    %v499 = vpack.c.b16 %v469, %v466
    %v500 = vpack.c.b16 %v470, %v467
    %v501 = vpack.c.b16 %v474, %v471
    %v502 = vpack.c.b16 %v475, %v472
    %v503 = vpack.c.b16 %v476, %v473
    %v504 = vpack.c.b16 %v480, %v477
    %v505 = vpack.c.b16 %v481, %v478
    %v506 = vpack.c.b16 %v482, %v479
    %531 = vmatpush.bf16.msra.mxu0 %v504
    %532 = vmatpush.bf16.msra.mxu0 %v501
    %533 = vmatpush.bf16.msra.mxu0 %v498
    %534 = vmatpush.bf16.msra.mxu0 %v495
    %535 = vmatpush.bf16.msra.mxu0 %v492
    %536 = vmatpush.bf16.msra.mxu0 %v489
    %537 = vmatpush.bf16.msra.mxu0 %v486
    %538 = vmatpush.bf16.msra.mxu0 %v483
    %539 = vmatmul.bf16.gmra.mxu0 %v394
    %v540 = vpop.f32.mrf.mxu0
    %v541 = vadd.f32 %v397, %v540
    %v542 = vpop.f32.mrf.mxu0
    %v543 = vadd.f32 %v397, %v542
    %544 = vdwg.mxu0
    %545 = vmatpush.bf16.msra.mxu0 %v505
    %546 = vmatpush.bf16.msra.mxu0 %v502
    %547 = vmatpush.bf16.msra.mxu0 %v499
    %548 = vmatpush.bf16.msra.mxu0 %v496
    %549 = vmatpush.bf16.msra.mxu0 %v493
    %550 = vmatpush.bf16.msra.mxu0 %v490
    %551 = vmatpush.bf16.msra.mxu0 %v487
    %552 = vmatpush.bf16.msra.mxu0 %v484
    %553 = vmatmul.bf16.gmra.mxu0 %v394
    %v554 = vpop.f32.mrf.mxu0
    %v555 = vadd.f32 %v398, %v554
    %v556 = vpop.f32.mrf.mxu0
    %v557 = vadd.f32 %v398, %v556
    %558 = vdwg.mxu0
    %559 = vmatpush.bf16.msra.mxu0 %v506
    %560 = vmatpush.bf16.msra.mxu0 %v503
    %561 = vmatpush.bf16.msra.mxu0 %v500
    %562 = vmatpush.bf16.msra.mxu0 %v497
    %563 = vmatpush.bf16.msra.mxu0 %v494
    %564 = vmatpush.bf16.msra.mxu0 %v491
    %565 = vmatpush.bf16.msra.mxu0 %v488
    %566 = vmatpush.bf16.msra.mxu0 %v485
    %567 = vmatmul.bf16.gmra.mxu0 %v394
    %v568 = vpop.f32.mrf.mxu0
    %v569 = vadd.f32 %v399, %v568
    %v570 = vpop.f32.mrf.mxu0
    %v571 = vadd.f32 %v399, %v570
    %572 = vdwg.mxu0
    %v573 = vpack.c.bf16 %v541, %v541
    %v574 = vpack.c.bf16 %v543, %v543
    %v575 = vpack.c.bf16 %v555, %v555
    %v576 = vpack.c.bf16 %v557, %v557
    %v577 = vpack.c.bf16 %v569, %v569
    %v578 = vpack.c.bf16 %v571, %v571
    %v581 = vunpack.c.l.b16 %v573
    %v582 = vunpack.c.l.b16 %v574
    %v583 = vpack.c.b16 %v582, %v581
    %v586 = vunpack.c.l.b16 %v575
    %v587 = vunpack.c.l.b16 %v576
    %v588 = vpack.c.b16 %v587, %v586
    %vm589 = vcmask 261120
    %v591 = vsel %vm589, %v583, 0
    %v594 = vsel %vm589, %v588, 0
    %596 = vmatpush.bf16.xpose.msra.mxu0 0
    %597 = vmatpush.bf16.xpose.msra.mxu0 0
    %598 = vmatpush.bf16.xpose.msra.mxu0 0
    %599 = vmatpush.bf16.xpose.msra.mxu0 0
    %600 = vmatpush.bf16.xpose.msra.mxu0 0
    %601 = vmatpush.bf16.xpose.msra.mxu0 0
    %602 = vmatpush.bf16.xpose.msra.mxu0 0
    %603 = vmatpush.bf16.xpose.msra.mxu0 %v594
    %604 = vmatmul.bf16.gmra.mxu0 %v591
    %v605 = vpop.f32.mrf.mxu0
    %v606 = vadd.f32 %v360, %v605
    %v607 = vpop.f32.mrf.mxu0
    %v608 = vadd.f32 %v361, %v607
    %609 = vdwg.mxu0
    %vm610 = vcmask 130048
    %v611 = vsel %vm610, %v606, -inf
    %612 = vmax.xlane.f32.xlu0 %v611
    %v613 = vpop.xlane.xlu0 %612
    %v614 = vsel %vm610, %v608, -inf
    %615 = vmax.xlane.f32.xlu0 %v614
    %v616 = vpop.xlane.xlu0 %615
    %v617 = vsub.f32 %v606, %v613
    %v618 = vsub.f32 %v608, %v616
    %v619 = vmul.f32 %v617, 1.442695
    %v620 = vpow.pop %v619
    %v621 = vmul.f32 %v618, 1.442695
    %v622 = vpow.pop %v621
    %v623 = vsel %vm610, %v620, 0.0
    %624 = vadd.xlane.f32.xlu0 %v623
    %v625 = vpop.xlane.xlu0 %624
    %v626 = vsel %vm610, %v622, 0.0
    %627 = vadd.xlane.f32.xlu0 %v626
    %v628 = vpop.xlane.xlu0 %627
    %v629 = vrcp.pop %v625
    %v630 = vrcp.pop %v628
    %v631 = vmul.f32 %v620, %v629
    %v632 = vmul.f32 %v622, %v630
    %v633 = vpack.c.bf16 %v632, %v631
    %v636 = vunpack.c.l.b16 %v577
    %v637 = vunpack.c.l.b16 %v578
    %v638 = vpack.c.b16 %v637, %v636
    %v641 = vsel %vm610, %v633, 0
    %643 = vmatpush.bf16.msra.mxu0 0
    %644 = vmatpush.bf16.msra.mxu0 0
    %645 = vmatpush.bf16.msra.mxu0 0
    %646 = vmatpush.bf16.msra.mxu0 0
    %647 = vmatpush.bf16.msra.mxu0 0
    %648 = vmatpush.bf16.msra.mxu0 0
    %649 = vmatpush.bf16.msra.mxu0 0
    %650 = vmatpush.bf16.msra.mxu0 %v638
    %651 = vmatmul.bf16.gmra.mxu0 %v641
    %v652 = vpop.f32.mrf.mxu0
    %v653 = vadd.f32 0.0, %v652
    %v654 = vpop.f32.mrf.mxu0
    %v655 = vadd.f32 0.0, %v654
    %656 = vdwg.mxu0
    %657 = vrot.lane.b32.xlu0 %v583, 96
    %v658 = vpop.permute.xlu0 %657
    %659 = vrot.lane.b32.xlu0 %v588, 96
    %v660 = vpop.permute.xlu0 %659
    %v662 = vsel %vm589, %v658, 0
    %v665 = vsel %vm589, %v660, 0
    %667 = vmatpush.bf16.xpose.msra.mxu0 0
    %668 = vmatpush.bf16.xpose.msra.mxu0 0
    %669 = vmatpush.bf16.xpose.msra.mxu0 0
    %670 = vmatpush.bf16.xpose.msra.mxu0 0
    %671 = vmatpush.bf16.xpose.msra.mxu0 0
    %672 = vmatpush.bf16.xpose.msra.mxu0 0
    %673 = vmatpush.bf16.xpose.msra.mxu0 0
    %674 = vmatpush.bf16.xpose.msra.mxu0 %v665
    %675 = vmatmul.bf16.gmra.mxu0 %v662
    %v676 = vpop.f32.mrf.mxu0
    %v677 = vadd.f32 %v360, %v676
    %v678 = vpop.f32.mrf.mxu0
    %v679 = vadd.f32 %v361, %v678
    %680 = vdwg.mxu0
    %v681 = vsel %vm610, %v677, -inf
    %682 = vmax.xlane.f32.xlu0 %v681
    %v683 = vpop.xlane.xlu0 %682
    %v684 = vsel %vm610, %v679, -inf
    %685 = vmax.xlane.f32.xlu0 %v684
    %v686 = vpop.xlane.xlu0 %685
    %v687 = vsub.f32 %v677, %v683
    %v688 = vsub.f32 %v679, %v686
    %v689 = vmul.f32 %v687, 1.442695
    %v690 = vpow.pop %v689
    %v691 = vmul.f32 %v688, 1.442695
    %v692 = vpow.pop %v691
    %v693 = vsel %vm610, %v690, 0.0
    %694 = vadd.xlane.f32.xlu0 %v693
    %v695 = vpop.xlane.xlu0 %694
    %v696 = vsel %vm610, %v692, 0.0
    %697 = vadd.xlane.f32.xlu0 %v696
    %v698 = vpop.xlane.xlu0 %697
    %v699 = vrcp.pop %v695
    %v700 = vrcp.pop %v698
    %v701 = vmul.f32 %v690, %v699
    %v702 = vmul.f32 %v692, %v700
    %v703 = vpack.c.bf16 %v702, %v701
    %704 = vrot.lane.b32.xlu0 %v638, 96
    %v705 = vpop.permute.xlu0 %704
    %v708 = vsel %vm610, %v703, 0
    %710 = vmatpush.bf16.msra.mxu0 0
    %711 = vmatpush.bf16.msra.mxu0 0
    %712 = vmatpush.bf16.msra.mxu0 0
    %713 = vmatpush.bf16.msra.mxu0 0
    %714 = vmatpush.bf16.msra.mxu0 0
    %715 = vmatpush.bf16.msra.mxu0 0
    %716 = vmatpush.bf16.msra.mxu0 0
    %717 = vmatpush.bf16.msra.mxu0 %v705
    %718 = vmatmul.bf16.gmra.mxu0 %v708
    %v719 = vpop.f32.mrf.mxu0
    %v720 = vadd.f32 0.0, %v719
    %v721 = vpop.f32.mrf.mxu0
    %v722 = vadd.f32 0.0, %v721
    %723 = vdwg.mxu0
    %724 = vrot.lane.b32.xlu0 %v583, 64
    %v725 = vpop.permute.xlu0 %724
    %726 = vrot.lane.b32.xlu0 %v588, 64
    %v727 = vpop.permute.xlu0 %726
    %v729 = vsel %vm589, %v725, 0
    %v732 = vsel %vm589, %v727, 0
    %734 = vmatpush.bf16.xpose.msra.mxu0 0
    %735 = vmatpush.bf16.xpose.msra.mxu0 0
    %736 = vmatpush.bf16.xpose.msra.mxu0 0
    %737 = vmatpush.bf16.xpose.msra.mxu0 0
    %738 = vmatpush.bf16.xpose.msra.mxu0 0
    %739 = vmatpush.bf16.xpose.msra.mxu0 0
    %740 = vmatpush.bf16.xpose.msra.mxu0 0
    %741 = vmatpush.bf16.xpose.msra.mxu0 %v732
    %742 = vmatmul.bf16.gmra.mxu0 %v729
    %v743 = vpop.f32.mrf.mxu0
    %v744 = vadd.f32 %v360, %v743
    %v745 = vpop.f32.mrf.mxu0
    %v746 = vadd.f32 %v361, %v745
    %747 = vdwg.mxu0
    %v748 = vsel %vm610, %v744, -inf
    %749 = vmax.xlane.f32.xlu0 %v748
    %v750 = vpop.xlane.xlu0 %749
    %v751 = vsel %vm610, %v746, -inf
    %752 = vmax.xlane.f32.xlu0 %v751
    %v753 = vpop.xlane.xlu0 %752
    %v754 = vsub.f32 %v744, %v750
    %v755 = vsub.f32 %v746, %v753
    %v756 = vmul.f32 %v754, 1.442695
    %v757 = vpow.pop %v756
    %v758 = vmul.f32 %v755, 1.442695
    %v759 = vpow.pop %v758
    %v760 = vsel %vm610, %v757, 0.0
    %761 = vadd.xlane.f32.xlu0 %v760
    %v762 = vpop.xlane.xlu0 %761
    %v763 = vsel %vm610, %v759, 0.0
    %764 = vadd.xlane.f32.xlu0 %v763
    %v765 = vpop.xlane.xlu0 %764
    %v766 = vrcp.pop %v762
    %v767 = vrcp.pop %v765
    %v768 = vmul.f32 %v757, %v766
    %v769 = vmul.f32 %v759, %v767
    %v770 = vpack.c.bf16 %v769, %v768
    %771 = vrot.lane.b32.xlu0 %v638, 64
    %v772 = vpop.permute.xlu0 %771
    %v775 = vsel %vm610, %v770, 0
    %777 = vmatpush.bf16.msra.mxu0 0
    %778 = vmatpush.bf16.msra.mxu0 0
    %779 = vmatpush.bf16.msra.mxu0 0
    %780 = vmatpush.bf16.msra.mxu0 0
    %781 = vmatpush.bf16.msra.mxu0 0
    %782 = vmatpush.bf16.msra.mxu0 0
    %783 = vmatpush.bf16.msra.mxu0 0
    %784 = vmatpush.bf16.msra.mxu0 %v772
    %785 = vmatmul.bf16.gmra.mxu0 %v775
    %v786 = vpop.f32.mrf.mxu0
    %v787 = vadd.f32 0.0, %v786
    %v788 = vpop.f32.mrf.mxu0
    %v789 = vadd.f32 0.0, %v788
    %790 = vdwg.mxu0
    %791 = vrot.lane.b32.xlu0 %v583, 32
    %v792 = vpop.permute.xlu0 %791
    %793 = vrot.lane.b32.xlu0 %v588, 32
    %v794 = vpop.permute.xlu0 %793
    %v796 = vsel %vm589, %v792, 0
    %v799 = vsel %vm589, %v794, 0
    %801 = vmatpush.bf16.xpose.msra.mxu0 0
    %802 = vmatpush.bf16.xpose.msra.mxu0 0
    %803 = vmatpush.bf16.xpose.msra.mxu0 0
    %804 = vmatpush.bf16.xpose.msra.mxu0 0
    %805 = vmatpush.bf16.xpose.msra.mxu0 0
    %806 = vmatpush.bf16.xpose.msra.mxu0 0
    %807 = vmatpush.bf16.xpose.msra.mxu0 0
    %808 = vmatpush.bf16.xpose.msra.mxu0 %v799
    %809 = vmatmul.bf16.gmra.mxu0 %v796
    %v810 = vpop.f32.mrf.mxu0
    %v811 = vadd.f32 %v360, %v810
    %v812 = vpop.f32.mrf.mxu0
    %v813 = vadd.f32 %v361, %v812
    %814 = vdwg.mxu0
    %v815 = vsel %vm610, %v811, -inf
    %816 = vmax.xlane.f32.xlu0 %v815
    %v817 = vpop.xlane.xlu0 %816
    %v818 = vsel %vm610, %v813, -inf
    %819 = vmax.xlane.f32.xlu0 %v818
    %v820 = vpop.xlane.xlu0 %819
    %v821 = vsub.f32 %v811, %v817
    %v822 = vsub.f32 %v813, %v820
    %v823 = vmul.f32 %v821, 1.442695
    %v824 = vpow.pop %v823
    %v825 = vmul.f32 %v822, 1.442695
    %v826 = vpow.pop %v825
    %v827 = vsel %vm610, %v824, 0.0
    %828 = vadd.xlane.f32.xlu0 %v827
    %v829 = vpop.xlane.xlu0 %828
    %v830 = vsel %vm610, %v826, 0.0
    %831 = vadd.xlane.f32.xlu0 %v830
    %v832 = vpop.xlane.xlu0 %831
    %v833 = vrcp.pop %v829
    %v834 = vrcp.pop %v832
    %v835 = vmul.f32 %v824, %v833
    %v836 = vmul.f32 %v826, %v834
    %v837 = vpack.c.bf16 %v836, %v835
    %838 = vrot.lane.b32.xlu0 %v638, 32
    %v839 = vpop.permute.xlu0 %838
    %v842 = vsel %vm610, %v837, 0
    %844 = vmatpush.bf16.msra.mxu0 0
    %845 = vmatpush.bf16.msra.mxu0 0
    %846 = vmatpush.bf16.msra.mxu0 0
    %847 = vmatpush.bf16.msra.mxu0 0
    %848 = vmatpush.bf16.msra.mxu0 0
    %849 = vmatpush.bf16.msra.mxu0 0
    %850 = vmatpush.bf16.msra.mxu0 0
    %851 = vmatpush.bf16.msra.mxu0 %v839
    %852 = vmatmul.bf16.gmra.mxu0 %v842
    %v853 = vpop.f32.mrf.mxu0
    %v854 = vadd.f32 0.0, %v853
    %v855 = vpop.f32.mrf.mxu0
    %v856 = vadd.f32 0.0, %v855
    %857 = vdwg.mxu0
    %860 = vrot.lane.b32.xlu0 %v720, 32
    %v861 = vpop.permute.xlu0 %860
    %862 = vrot.lane.b32.xlu0 %v722, 32
    %v863 = vpop.permute.xlu0 %862
    %868 = vrot.lane.b32.xlu0 %v787, 64
    %v869 = vpop.permute.xlu0 %868
    %870 = vrot.lane.b32.xlu0 %v789, 64
    %v871 = vpop.permute.xlu0 %870
    %876 = vrot.lane.b32.xlu0 %v854, 96
    %v877 = vpop.permute.xlu0 %876
    %878 = vrot.lane.b32.xlu0 %v856, 96
    %v879 = vpop.permute.xlu0 %878
    %v882 = vsel %vm589, %v653, %v861
    %v883 = vsel %vm589, %v655, %v863
    %vm884 = vcmask 523264
    %v885 = vsel %vm884, %v882, %v869
    %v886 = vsel %vm884, %v883, %v871
    %vm887 = vcmask 785408
    %v888 = vsel %vm887, %v885, %v877
    %v889 = vsel %vm887, %v886, %v879
    %v890 = vld [vmem:[#allocation2] sm:$0xf]
    %v891 = vld [vmem:[#allocation2 + $0x4] sm:$0xf]
    %v892 = vld [vmem:[#allocation2 + $0x8] sm:$0xf]
    %v893 = vld [vmem:[#allocation2 + $0xc] sm:$0xf]
    %v894 = vld [vmem:[#allocation2 + $0x10] sm:$0xf]
    %v895 = vld [vmem:[#allocation2 + $0x14] sm:$0xf]
    %v896 = vld [vmem:[#allocation2 + $0x18] sm:$0xf]
    %v897 = vld [vmem:[#allocation2 + $0x1c] sm:$0xf]
    %v898 = vld [vmem:[#allocation2 + $0x20] sm:$0xf]
    %v899 = vld [vmem:[#allocation2 + $0x24] sm:$0xf]
    %v900 = vld [vmem:[#allocation2 + $0x28] sm:$0xf]
    %v901 = vld [vmem:[#allocation2 + $0x2c] sm:$0xf]
    %v902 = vld [vmem:[#allocation2 + $0x30] sm:$0xf]
    %v903 = vld [vmem:[#allocation2 + $0x34] sm:$0xf]
    %v904 = vld [vmem:[#allocation2 + $0x38] sm:$0xf]
    %v905 = vld [vmem:[#allocation2 + $0x3c] sm:$0xf]
    %v906 = vpack.c.bf16 %v889, %v888
    %v907 = vld [vmem:[%s19] sm:$0x1]
    %v909 = vperm.slane %v907, 0
    %v927 = vunpack.c.l.b16 %v890
    %v928 = vunpack.c.l.b16 %v891
    %v929 = vunpack.c.l.b16 %v892
    %v930 = vunpack.c.l.b16 %v893
    %v931 = vunpack.c.l.b16 %v894
    %v932 = vunpack.c.l.b16 %v895
    %v933 = vunpack.c.l.b16 %v896
    %v934 = vunpack.c.l.b16 %v897
    %v935 = vunpack.c.l.b16 %v898
    %v936 = vunpack.c.l.b16 %v899
    %v937 = vunpack.c.l.b16 %v900
    %v938 = vunpack.c.l.b16 %v901
    %v939 = vunpack.c.l.b16 %v902
    %v940 = vunpack.c.l.b16 %v903
    %v941 = vunpack.c.l.b16 %v904
    %v942 = vunpack.c.l.b16 %v905
    %v943 = vpack.c.b16 %v928, %v927
    %v944 = vpack.c.b16 %v930, %v929
    %v945 = vpack.c.b16 %v932, %v931
    %v946 = vpack.c.b16 %v934, %v933
    %v947 = vpack.c.b16 %v936, %v935
    %v948 = vpack.c.b16 %v938, %v937
    %v949 = vpack.c.b16 %v940, %v939
    %v950 = vpack.c.b16 %v942, %v941
    %959 = vmatpush.bf16.msra.mxu0 %v950
    %960 = vmatpush.bf16.msra.mxu0 %v949
    %961 = vmatpush.bf16.msra.mxu0 %v948
    %962 = vmatpush.bf16.msra.mxu0 %v947
    %963 = vmatpush.bf16.msra.mxu0 %v946
    %964 = vmatpush.bf16.msra.mxu0 %v945
    %965 = vmatpush.bf16.msra.mxu0 %v944
    %966 = vmatpush.bf16.msra.mxu0 %v943
    %967 = vmatmul.bf16.gmra.mxu0 %v906
    %v968 = vpop.f32.mrf.mxu0
    %v969 = vadd.f32 %v909, %v968
    %v970 = vpop.f32.mrf.mxu0
    %v971 = vadd.f32 %v909, %v970
    %972 = vdwg.mxu0
    %v973 = vadd.f32 %v358, %v969
    %v974 = vadd.f32 %v359, %v971
    %v975 = vld [vmem:[%s21] sm:$0x1]
    %v976 = vld [vmem:[%s23] sm:$0x1]
    %977 = vadd.xlane.f32.xlu0 %v973
    %v978 = vpop.xlane.xlu0 %977
    %979 = vadd.xlane.f32.xlu0 %v974
    %v980 = vpop.xlane.xlu0 %979
    %v981 = vrcp.pop 128.0
    %v982 = vmul.f32 128.0, %v981
    %v983 = vsub.f32 1.0, %v982
    %v984 = vmul.f32 %v981, %v983
    %v985 = vadd.f32 %v981, %v984
    %vm986 = vweird.f32 %v981
    %v987 = vsel %vm986, %v981, %v985
    %v988 = vmul.f32 %v978, %v987
    %v989 = vmul.f32 %v980, %v987
    %v990 = vsub.f32 %v973, %v988
    %v991 = vsub.f32 %v974, %v989
    %v992 = vmul.f32 %v990, %v990
    %v993 = vmul.f32 %v991, %v991
    %994 = vadd.xlane.f32.xlu0 %v992
    %v995 = vpop.xlane.xlu0 %994
    %996 = vadd.xlane.f32.xlu0 %v993
    %v997 = vpop.xlane.xlu0 %996
    %v998 = vmul.f32 %v995, %v987
    %v999 = vmul.f32 %v997, %v987
    %v1000 = vadd.f32 %v998, 1e-05
    %v1001 = vadd.f32 %v999, 1e-05
    %v1002 = vrsqrt.pop %v1000
    %v1003 = vmul.f32 %v1002, %v1000
    %v1004 = vmul.f32 %v1003, %v1002
    %v1005 = vmul.f32 0.5, %v1004
    %v1006 = vsub.f32 1.5, %v1005
    %v1007 = vmul.f32 %v1002, %v1006
    %vm1008 = vweird.f32 %v1000
    %vm1009 = vweird.f32 %v1002
    %vm1010 = vmor %vm1008, %vm1009
    %v1011 = vsel %vm1010, %v1002, %v1007
    %v1012 = vrsqrt.pop %v1001
    %v1013 = vmul.f32 %v1012, %v1001
    %v1014 = vmul.f32 %v1013, %v1012
    %v1015 = vmul.f32 0.5, %v1014
    %v1016 = vsub.f32 1.5, %v1015
    %v1017 = vmul.f32 %v1012, %v1016
    %vm1018 = vweird.f32 %v1001
    %vm1019 = vweird.f32 %v1012
    %vm1020 = vmor %vm1018, %vm1019
    %v1021 = vsel %vm1020, %v1012, %v1017
    %v1022 = vmul.f32 %v990, %v1011
    %v1023 = vmul.f32 %v991, %v1021
    %v1025 = vperm.slane %v975, 0
    %v1027 = vmul.f32 %v1022, %v1025
    %v1028 = vmul.f32 %v1023, %v1025
    %v1030 = vperm.slane %v976, 0
    %v1032 = vadd.f32 %v1027, %v1030
    %v1033 = vadd.f32 %v1028, %v1030
    %v1034 = vld [vmem:[#allocation4] sm:$0xff]
    %v1035 = vld [vmem:[#allocation4 + $0x8] sm:$0xff]
    %v1036 = vld [vmem:[#allocation4 + $0x10] sm:$0xff]
    %v1037 = vld [vmem:[#allocation4 + $0x18] sm:$0xff]
    %v1038 = vld [vmem:[#allocation4 + $0x20] sm:$0xff]
    %v1039 = vld [vmem:[#allocation4 + $0x28] sm:$0xff]
    %v1040 = vld [vmem:[#allocation4 + $0x30] sm:$0xff]
    %v1041 = vld [vmem:[#allocation4 + $0x38] sm:$0xff]
    %v1042 = vld [vmem:[#allocation4 + $0x40] sm:$0xff]
    %v1043 = vld [vmem:[#allocation4 + $0x48] sm:$0xff]
    %v1044 = vld [vmem:[#allocation4 + $0x50] sm:$0xff]
    %v1045 = vld [vmem:[#allocation4 + $0x58] sm:$0xff]
    %v1046 = vld [vmem:[#allocation4 + $0x60] sm:$0xff]
    %v1047 = vld [vmem:[#allocation4 + $0x68] sm:$0xff]
    %v1048 = vld [vmem:[#allocation4 + $0x70] sm:$0xff]
    %v1049 = vld [vmem:[#allocation4 + $0x78] sm:$0xff]
    %v1050 = vpack.c.bf16 %v1033, %v1032
    %v1051 = vld [vmem:[%s27] sm:$0x3]
    %v1053 = vperm.slane %v1051, 0
    %v1054 = vperm.slane %v1051, 1
    %v1073 = vunpack.c.l.b16 %v1034
    %v1074 = vunpack.c.h.b16 %v1034
    %v1075 = vunpack.c.l.b16 %v1035
    %v1076 = vunpack.c.h.b16 %v1035
    %v1077 = vunpack.c.l.b16 %v1036
    %v1078 = vunpack.c.h.b16 %v1036
    %v1079 = vunpack.c.l.b16 %v1037
    %v1080 = vunpack.c.h.b16 %v1037
    %v1081 = vunpack.c.l.b16 %v1038
    %v1082 = vunpack.c.h.b16 %v1038
    %v1083 = vunpack.c.l.b16 %v1039
    %v1084 = vunpack.c.h.b16 %v1039
    %v1085 = vunpack.c.l.b16 %v1040
    %v1086 = vunpack.c.h.b16 %v1040
    %v1087 = vunpack.c.l.b16 %v1041
    %v1088 = vunpack.c.h.b16 %v1041
    %v1089 = vunpack.c.l.b16 %v1042
    %v1090 = vunpack.c.h.b16 %v1042
    %v1091 = vunpack.c.l.b16 %v1043
    %v1092 = vunpack.c.h.b16 %v1043
    %v1093 = vunpack.c.l.b16 %v1044
    %v1094 = vunpack.c.h.b16 %v1044
    %v1095 = vunpack.c.l.b16 %v1045
    %v1096 = vunpack.c.h.b16 %v1045
    %v1097 = vunpack.c.l.b16 %v1046
    %v1098 = vunpack.c.h.b16 %v1046
    %v1099 = vunpack.c.l.b16 %v1047
    %v1100 = vunpack.c.h.b16 %v1047
    %v1101 = vunpack.c.l.b16 %v1048
    %v1102 = vunpack.c.h.b16 %v1048
    %v1103 = vunpack.c.l.b16 %v1049
    %v1104 = vunpack.c.h.b16 %v1049
    %v1105 = vpack.c.b16 %v1075, %v1073
    %v1106 = vpack.c.b16 %v1076, %v1074
    %v1107 = vpack.c.b16 %v1079, %v1077
    %v1108 = vpack.c.b16 %v1080, %v1078
    %v1109 = vpack.c.b16 %v1083, %v1081
    %v1110 = vpack.c.b16 %v1084, %v1082
    %v1111 = vpack.c.b16 %v1087, %v1085
    %v1112 = vpack.c.b16 %v1088, %v1086
    %v1113 = vpack.c.b16 %v1091, %v1089
    %v1114 = vpack.c.b16 %v1092, %v1090
    %v1115 = vpack.c.b16 %v1095, %v1093
    %v1116 = vpack.c.b16 %v1096, %v1094
    %v1117 = vpack.c.b16 %v1099, %v1097
    %v1118 = vpack.c.b16 %v1100, %v1098
    %v1119 = vpack.c.b16 %v1103, %v1101
    %v1120 = vpack.c.b16 %v1104, %v1102
    %1137 = vmatpush.bf16.msra.mxu0 %v1119
    %1138 = vmatpush.bf16.msra.mxu0 %v1117
    %1139 = vmatpush.bf16.msra.mxu0 %v1115
    %1140 = vmatpush.bf16.msra.mxu0 %v1113
    %1141 = vmatpush.bf16.msra.mxu0 %v1111
    %1142 = vmatpush.bf16.msra.mxu0 %v1109
    %1143 = vmatpush.bf16.msra.mxu0 %v1107
    %1144 = vmatpush.bf16.msra.mxu0 %v1105
    %1145 = vmatmul.bf16.gmra.mxu0 %v1050
    %v1146 = vpop.f32.mrf.mxu0
    %v1147 = vadd.f32 %v1053, %v1146
    %v1148 = vpop.f32.mrf.mxu0
    %v1149 = vadd.f32 %v1053, %v1148
    %1150 = vdwg.mxu0
    %1151 = vmatpush.bf16.msra.mxu0 %v1120
    %1152 = vmatpush.bf16.msra.mxu0 %v1118
    %1153 = vmatpush.bf16.msra.mxu0 %v1116
    %1154 = vmatpush.bf16.msra.mxu0 %v1114
    %1155 = vmatpush.bf16.msra.mxu0 %v1112
    %1156 = vmatpush.bf16.msra.mxu0 %v1110
    %1157 = vmatpush.bf16.msra.mxu0 %v1108
    %1158 = vmatpush.bf16.msra.mxu0 %v1106
    %1159 = vmatmul.bf16.gmra.mxu0 %v1050
    %v1160 = vpop.f32.mrf.mxu0
    %v1161 = vadd.f32 %v1054, %v1160
    %v1162 = vpop.f32.mrf.mxu0
    %v1163 = vadd.f32 %v1054, %v1162
    %1164 = vdwg.mxu0
    %v1165 = vmax.f32 %v1147, 0.0
    %v1166 = vmax.f32 %v1161, 0.0
    %v1167 = vmax.f32 %v1149, 0.0
    %v1168 = vmax.f32 %v1163, 0.0
    %v1169 = vld [vmem:[#allocation6] sm:$0xf]
    %v1170 = vld [vmem:[#allocation6 + $0x4] sm:$0xf]
    %v1171 = vld [vmem:[#allocation6 + $0x8] sm:$0xf]
    %v1172 = vld [vmem:[#allocation6 + $0xc] sm:$0xf]
    %v1173 = vld [vmem:[#allocation6 + $0x10] sm:$0xf]
    %v1174 = vld [vmem:[#allocation6 + $0x14] sm:$0xf]
    %v1175 = vld [vmem:[#allocation6 + $0x18] sm:$0xf]
    %v1176 = vld [vmem:[#allocation6 + $0x1c] sm:$0xf]
    %v1177 = vld [vmem:[#allocation6 + $0x20] sm:$0xf]
    %v1178 = vld [vmem:[#allocation6 + $0x24] sm:$0xf]
    %v1179 = vld [vmem:[#allocation6 + $0x28] sm:$0xf]
    %v1180 = vld [vmem:[#allocation6 + $0x2c] sm:$0xf]
    %v1181 = vld [vmem:[#allocation6 + $0x30] sm:$0xf]
    %v1182 = vld [vmem:[#allocation6 + $0x34] sm:$0xf]
    %v1183 = vld [vmem:[#allocation6 + $0x38] sm:$0xf]
    %v1184 = vld [vmem:[#allocation6 + $0x3c] sm:$0xf]
    %v1185 = vld [vmem:[#allocation6 + $0x40] sm:$0xf]
    %v1186 = vld [vmem:[#allocation6 + $0x44] sm:$0xf]
    %v1187 = vld [vmem:[#allocation6 + $0x48] sm:$0xf]
    %v1188 = vld [vmem:[#allocation6 + $0x4c] sm:$0xf]
    %v1189 = vld [vmem:[#allocation6 + $0x50] sm:$0xf]
    %v1190 = vld [vmem:[#allocation6 + $0x54] sm:$0xf]
    %v1191 = vld [vmem:[#allocation6 + $0x58] sm:$0xf]
    %v1192 = vld [vmem:[#allocation6 + $0x5c] sm:$0xf]
    %v1193 = vld [vmem:[#allocation6 + $0x60] sm:$0xf]
    %v1194 = vld [vmem:[#allocation6 + $0x64] sm:$0xf]
    %v1195 = vld [vmem:[#allocation6 + $0x68] sm:$0xf]
    %v1196 = vld [vmem:[#allocation6 + $0x6c] sm:$0xf]
    %v1197 = vld [vmem:[#allocation6 + $0x70] sm:$0xf]
    %v1198 = vld [vmem:[#allocation6 + $0x74] sm:$0xf]
    %v1199 = vld [vmem:[#allocation6 + $0x78] sm:$0xf]
    %v1200 = vld [vmem:[#allocation6 + $0x7c] sm:$0xf]
    %v1201 = vpack.c.bf16 %v1167, %v1165
    %v1202 = vpack.c.bf16 %v1168, %v1166
    %v1203 = vld [vmem:[%s31] sm:$0x1]
    %v1205 = vperm.slane %v1203, 0
    %v1239 = vunpack.c.l.b16 %v1169
    %v1240 = vunpack.c.l.b16 %v1170
    %v1241 = vunpack.c.l.b16 %v1171
    %v1242 = vunpack.c.l.b16 %v1172
    %v1243 = vunpack.c.l.b16 %v1173
    %v1244 = vunpack.c.l.b16 %v1174
    %v1245 = vunpack.c.l.b16 %v1175
    %v1246 = vunpack.c.l.b16 %v1176
    %v1247 = vunpack.c.l.b16 %v1177
    %v1248 = vunpack.c.l.b16 %v1178
    %v1249 = vunpack.c.l.b16 %v1179
    %v1250 = vunpack.c.l.b16 %v1180
    %v1251 = vunpack.c.l.b16 %v1181
    %v1252 = vunpack.c.l.b16 %v1182
    %v1253 = vunpack.c.l.b16 %v1183
    %v1254 = vunpack.c.l.b16 %v1184
    %v1255 = vunpack.c.l.b16 %v1185
    %v1256 = vunpack.c.l.b16 %v1186
    %v1257 = vunpack.c.l.b16 %v1187
    %v1258 = vunpack.c.l.b16 %v1188
    %v1259 = vunpack.c.l.b16 %v1189
    %v1260 = vunpack.c.l.b16 %v1190
    %v1261 = vunpack.c.l.b16 %v1191
    %v1262 = vunpack.c.l.b16 %v1192
    %v1263 = vunpack.c.l.b16 %v1193
    %v1264 = vunpack.c.l.b16 %v1194
    %v1265 = vunpack.c.l.b16 %v1195
    %v1266 = vunpack.c.l.b16 %v1196
    %v1267 = vunpack.c.l.b16 %v1197
    %v1268 = vunpack.c.l.b16 %v1198
    %v1269 = vunpack.c.l.b16 %v1199
    %v1270 = vunpack.c.l.b16 %v1200
    %v1271 = vpack.c.b16 %v1240, %v1239
    %v1272 = vpack.c.b16 %v1242, %v1241
    %v1273 = vpack.c.b16 %v1244, %v1243
    %v1274 = vpack.c.b16 %v1246, %v1245
    %v1275 = vpack.c.b16 %v1248, %v1247
    %v1276 = vpack.c.b16 %v1250, %v1249
    %v1277 = vpack.c.b16 %v1252, %v1251
    %v1278 = vpack.c.b16 %v1254, %v1253
    %v1279 = vpack.c.b16 %v1256, %v1255
    %v1280 = vpack.c.b16 %v1258, %v1257
    %v1281 = vpack.c.b16 %v1260, %v1259
    %v1282 = vpack.c.b16 %v1262, %v1261
    %v1283 = vpack.c.b16 %v1264, %v1263
    %v1284 = vpack.c.b16 %v1266, %v1265
    %v1285 = vpack.c.b16 %v1268, %v1267
    %v1286 = vpack.c.b16 %v1270, %v1269
    %1303 = vmatpush.bf16.msra.mxu0 %v1278
    %1304 = vmatpush.bf16.msra.mxu0 %v1277
    %1305 = vmatpush.bf16.msra.mxu0 %v1276
    %1306 = vmatpush.bf16.msra.mxu0 %v1275
    %1307 = vmatpush.bf16.msra.mxu0 %v1274
    %1308 = vmatpush.bf16.msra.mxu0 %v1273
    %1309 = vmatpush.bf16.msra.mxu0 %v1272
    %1310 = vmatpush.bf16.msra.mxu0 %v1271
    %1311 = vmatmul.bf16.gmra.mxu0 %v1201
    %v1312 = vpop.f32.mrf.mxu0
    %v1313 = vadd.f32 %v1205, %v1312
    %v1314 = vpop.f32.mrf.mxu0
    %v1315 = vadd.f32 %v1205, %v1314
    %1316 = vdwg.mxu0
    %1317 = vmatpush.bf16.msra.mxu0 %v1286
    %1318 = vmatpush.bf16.msra.mxu0 %v1285
    %1319 = vmatpush.bf16.msra.mxu0 %v1284
    %1320 = vmatpush.bf16.msra.mxu0 %v1283
    %1321 = vmatpush.bf16.msra.mxu0 %v1282
    %1322 = vmatpush.bf16.msra.mxu0 %v1281
    %1323 = vmatpush.bf16.msra.mxu0 %v1280
    %1324 = vmatpush.bf16.msra.mxu0 %v1279
    %1325 = vmatmul.bf16.gmra.mxu0 %v1202
    %v1326 = vpop.f32.mrf.mxu0
    %v1327 = vadd.f32 %v1313, %v1326
    %v1328 = vpop.f32.mrf.mxu0
    %v1329 = vadd.f32 %v1315, %v1328
    %1330 = vdwg.mxu0
    %v1331 = vadd.f32 %v1032, %v1327
    %v1332 = vadd.f32 %v1033, %v1329
    %v1333 = vld [vmem:[%s33] sm:$0x1]
    %v1334 = vld [vmem:[%s35] sm:$0x1]
    %1335 = vadd.xlane.f32.xlu0 %v1331
    %v1336 = vpop.xlane.xlu0 %1335
    %1337 = vadd.xlane.f32.xlu0 %v1332
    %v1338 = vpop.xlane.xlu0 %1337
    %v1339 = vmul.f32 %v1336, %v987
    %v1340 = vmul.f32 %v1338, %v987
    %v1341 = vsub.f32 %v1331, %v1339
    %v1342 = vsub.f32 %v1332, %v1340
    %v1343 = vmul.f32 %v1341, %v1341
    %v1344 = vmul.f32 %v1342, %v1342
    %1345 = vadd.xlane.f32.xlu0 %v1343
    %v1346 = vpop.xlane.xlu0 %1345
    %1347 = vadd.xlane.f32.xlu0 %v1344
    %v1348 = vpop.xlane.xlu0 %1347
    %v1349 = vmul.f32 %v1346, %v987
    %v1350 = vmul.f32 %v1348, %v987
    %v1351 = vadd.f32 %v1349, 1e-05
    %v1352 = vadd.f32 %v1350, 1e-05
    %v1353 = vrsqrt.pop %v1351
    %v1354 = vmul.f32 %v1353, %v1351
    %v1355 = vmul.f32 %v1354, %v1353
    %v1356 = vmul.f32 0.5, %v1355
    %v1357 = vsub.f32 1.5, %v1356
    %v1358 = vmul.f32 %v1353, %v1357
    %vm1359 = vweird.f32 %v1351
    %vm1360 = vweird.f32 %v1353
    %vm1361 = vmor %vm1359, %vm1360
    %v1362 = vsel %vm1361, %v1353, %v1358
    %v1363 = vrsqrt.pop %v1352
    %v1364 = vmul.f32 %v1363, %v1352
    %v1365 = vmul.f32 %v1364, %v1363
    %v1366 = vmul.f32 0.5, %v1365
    %v1367 = vsub.f32 1.5, %v1366
    %v1368 = vmul.f32 %v1363, %v1367
    %vm1369 = vweird.f32 %v1352
    %vm1370 = vweird.f32 %v1363
    %vm1371 = vmor %vm1369, %vm1370
    %v1372 = vsel %vm1371, %v1363, %v1368
    %v1373 = vmul.f32 %v1341, %v1362
    %v1374 = vmul.f32 %v1342, %v1372
    %v1376 = vperm.slane %v1333, 0
    %v1378 = vmul.f32 %v1373, %v1376
    %v1379 = vmul.f32 %v1374, %v1376
    %v1381 = vperm.slane %v1334, 0
    %v1383 = vadd.f32 %v1378, %v1381
    %v1384 = vadd.f32 %v1379, %v1381
    %s1385 = scalar_lea.vmem %s13, 192
    %v1386 = vld [vmem:[%s1385] sm:$0xff]
    %v1387 = vld [vmem:[%s1385 + $0x8] sm:$0xf]
    %v1388 = vld [vmem:[%s1385 + $0xc] sm:$0xff]
    %v1389 = vld [vmem:[%s1385 + $0x14] sm:$0xf]
    %v1390 = vld [vmem:[%s1385 + $0x18] sm:$0xff]
    %v1391 = vld [vmem:[%s1385 + $0x20] sm:$0xf]
    %v1392 = vld [vmem:[%s1385 + $0x24] sm:$0xff]
    %v1393 = vld [vmem:[%s1385 + $0x2c] sm:$0xf]
    %v1394 = vld [vmem:[%s1385 + $0x30] sm:$0xff]
    %v1395 = vld [vmem:[%s1385 + $0x38] sm:$0xf]
    %v1396 = vld [vmem:[%s1385 + $0x3c] sm:$0xff]
    %v1397 = vld [vmem:[%s1385 + $0x44] sm:$0xf]
    %v1398 = vld [vmem:[%s1385 + $0x48] sm:$0xff]
    %v1399 = vld [vmem:[%s1385 + $0x50] sm:$0xf]
    %v1400 = vld [vmem:[%s1385 + $0x54] sm:$0xff]
    %v1401 = vld [vmem:[%s1385 + $0x5c] sm:$0xf]
    %v1402 = vld [vmem:[%s1385 + $0x60] sm:$0xff]
    %v1403 = vld [vmem:[%s1385 + $0x68] sm:$0xf]
    %v1404 = vld [vmem:[%s1385 + $0x6c] sm:$0xff]
    %v1405 = vld [vmem:[%s1385 + $0x74] sm:$0xf]
    %v1406 = vld [vmem:[%s1385 + $0x78] sm:$0xff]
    %v1407 = vld [vmem:[%s1385 + $0x80] sm:$0xf]
    %v1408 = vld [vmem:[%s1385 + $0x84] sm:$0xff]
    %v1409 = vld [vmem:[%s1385 + $0x8c] sm:$0xf]
    %v1410 = vld [vmem:[%s1385 + $0x90] sm:$0xff]
    %v1411 = vld [vmem:[%s1385 + $0x98] sm:$0xf]
    %v1412 = vld [vmem:[%s1385 + $0x9c] sm:$0xff]
    %v1413 = vld [vmem:[%s1385 + $0xa4] sm:$0xf]
    %v1414 = vld [vmem:[%s1385 + $0xa8] sm:$0xff]
    %v1415 = vld [vmem:[%s1385 + $0xb0] sm:$0xf]
    %v1416 = vld [vmem:[%s1385 + $0xb4] sm:$0xff]
    %v1417 = vld [vmem:[%s1385 + $0xbc] sm:$0xf]
    %v1418 = vpack.c.bf16 %v1384, %v1383
    %s1419 = scalar_lea.vmem %s15, 3
    %v1420 = vld [vmem:[%s1419] sm:$0x7]
    %v1422 = vperm.slane %v1420, 0
    %v1423 = vperm.slane %v1420, 1
    %v1424 = vperm.slane %v1420, 2
    %v1460 = vunpack.c.l.b16 %v1386
    %v1461 = vunpack.c.h.b16 %v1386
    %v1462 = vunpack.c.l.b16 %v1387
    %v1463 = vunpack.c.l.b16 %v1388
    %v1464 = vunpack.c.h.b16 %v1388
    %v1465 = vunpack.c.l.b16 %v1389
    %v1466 = vunpack.c.l.b16 %v1390
    %v1467 = vunpack.c.h.b16 %v1390
    %v1468 = vunpack.c.l.b16 %v1391
    %v1469 = vunpack.c.l.b16 %v1392
    %v1470 = vunpack.c.h.b16 %v1392
    %v1471 = vunpack.c.l.b16 %v1393
    %v1472 = vunpack.c.l.b16 %v1394
    %v1473 = vunpack.c.h.b16 %v1394
    %v1474 = vunpack.c.l.b16 %v1395
    %v1475 = vunpack.c.l.b16 %v1396
    %v1476 = vunpack.c.h.b16 %v1396
    %v1477 = vunpack.c.l.b16 %v1397
    %v1478 = vunpack.c.l.b16 %v1398
    %v1479 = vunpack.c.h.b16 %v1398
    %v1480 = vunpack.c.l.b16 %v1399
    %v1481 = vunpack.c.l.b16 %v1400
    %v1482 = vunpack.c.h.b16 %v1400
    %v1483 = vunpack.c.l.b16 %v1401
    %v1484 = vunpack.c.l.b16 %v1402
    %v1485 = vunpack.c.h.b16 %v1402
    %v1486 = vunpack.c.l.b16 %v1403
    %v1487 = vunpack.c.l.b16 %v1404
    %v1488 = vunpack.c.h.b16 %v1404
    %v1489 = vunpack.c.l.b16 %v1405
    %v1490 = vunpack.c.l.b16 %v1406
    %v1491 = vunpack.c.h.b16 %v1406
    %v1492 = vunpack.c.l.b16 %v1407
    %v1493 = vunpack.c.l.b16 %v1408
    %v1494 = vunpack.c.h.b16 %v1408
    %v1495 = vunpack.c.l.b16 %v1409
    %v1496 = vunpack.c.l.b16 %v1410
    %v1497 = vunpack.c.h.b16 %v1410
    %v1498 = vunpack.c.l.b16 %v1411
    %v1499 = vunpack.c.l.b16 %v1412
    %v1500 = vunpack.c.h.b16 %v1412
    %v1501 = vunpack.c.l.b16 %v1413
    %v1502 = vunpack.c.l.b16 %v1414
    %v1503 = vunpack.c.h.b16 %v1414
    %v1504 = vunpack.c.l.b16 %v1415
    %v1505 = vunpack.c.l.b16 %v1416
    %v1506 = vunpack.c.h.b16 %v1416
    %v1507 = vunpack.c.l.b16 %v1417
    %v1508 = vpack.c.b16 %v1463, %v1460
    %v1509 = vpack.c.b16 %v1464, %v1461
    %v1510 = vpack.c.b16 %v1465, %v1462
    %v1511 = vpack.c.b16 %v1469, %v1466
    %v1512 = vpack.c.b16 %v1470, %v1467
    %v1513 = vpack.c.b16 %v1471, %v1468
    %v1514 = vpack.c.b16 %v1475, %v1472
    %v1515 = vpack.c.b16 %v1476, %v1473
    %v1516 = vpack.c.b16 %v1477, %v1474
    %v1517 = vpack.c.b16 %v1481, %v1478
    %v1518 = vpack.c.b16 %v1482, %v1479
    %v1519 = vpack.c.b16 %v1483, %v1480
    %v1520 = vpack.c.b16 %v1487, %v1484
    %v1521 = vpack.c.b16 %v1488, %v1485
    %v1522 = vpack.c.b16 %v1489, %v1486
    %v1523 = vpack.c.b16 %v1493, %v1490
    %v1524 = vpack.c.b16 %v1494, %v1491
    %v1525 = vpack.c.b16 %v1495, %v1492
    %v1526 = vpack.c.b16 %v1499, %v1496
    %v1527 = vpack.c.b16 %v1500, %v1497
    %v1528 = vpack.c.b16 %v1501, %v1498
    %v1529 = vpack.c.b16 %v1505, %v1502
    %v1530 = vpack.c.b16 %v1506, %v1503
    %v1531 = vpack.c.b16 %v1507, %v1504
    %1556 = vmatpush.bf16.msra.mxu0 %v1529
    %1557 = vmatpush.bf16.msra.mxu0 %v1526
    %1558 = vmatpush.bf16.msra.mxu0 %v1523
    %1559 = vmatpush.bf16.msra.mxu0 %v1520
    %1560 = vmatpush.bf16.msra.mxu0 %v1517
    %1561 = vmatpush.bf16.msra.mxu0 %v1514
    %1562 = vmatpush.bf16.msra.mxu0 %v1511
    %1563 = vmatpush.bf16.msra.mxu0 %v1508
    %1564 = vmatmul.bf16.gmra.mxu0 %v1418
    %v1565 = vpop.f32.mrf.mxu0
    %v1566 = vadd.f32 %v1422, %v1565
    %v1567 = vpop.f32.mrf.mxu0
    %v1568 = vadd.f32 %v1422, %v1567
    %1569 = vdwg.mxu0
    %1570 = vmatpush.bf16.msra.mxu0 %v1530
    %1571 = vmatpush.bf16.msra.mxu0 %v1527
    %1572 = vmatpush.bf16.msra.mxu0 %v1524
    %1573 = vmatpush.bf16.msra.mxu0 %v1521
    %1574 = vmatpush.bf16.msra.mxu0 %v1518
    %1575 = vmatpush.bf16.msra.mxu0 %v1515
    %1576 = vmatpush.bf16.msra.mxu0 %v1512
    %1577 = vmatpush.bf16.msra.mxu0 %v1509
    %1578 = vmatmul.bf16.gmra.mxu0 %v1418
    %v1579 = vpop.f32.mrf.mxu0
    %v1580 = vadd.f32 %v1423, %v1579
    %v1581 = vpop.f32.mrf.mxu0
    %v1582 = vadd.f32 %v1423, %v1581
    %1583 = vdwg.mxu0
    %1584 = vmatpush.bf16.msra.mxu0 %v1531
    %1585 = vmatpush.bf16.msra.mxu0 %v1528
    %1586 = vmatpush.bf16.msra.mxu0 %v1525
    %1587 = vmatpush.bf16.msra.mxu0 %v1522
    %1588 = vmatpush.bf16.msra.mxu0 %v1519
    %1589 = vmatpush.bf16.msra.mxu0 %v1516
    %1590 = vmatpush.bf16.msra.mxu0 %v1513
    %1591 = vmatpush.bf16.msra.mxu0 %v1510
    %1592 = vmatmul.bf16.gmra.mxu0 %v1418
    %v1593 = vpop.f32.mrf.mxu0
    %v1594 = vadd.f32 %v1424, %v1593
    %v1595 = vpop.f32.mrf.mxu0
    %v1596 = vadd.f32 %v1424, %v1595
    %1597 = vdwg.mxu0
    %v1598 = vpack.c.bf16 %v1566, %v1566
    %v1599 = vpack.c.bf16 %v1568, %v1568
    %v1600 = vpack.c.bf16 %v1580, %v1580
    %v1601 = vpack.c.bf16 %v1582, %v1582
    %v1602 = vpack.c.bf16 %v1594, %v1594
    %v1603 = vpack.c.bf16 %v1596, %v1596
    %v1606 = vunpack.c.l.b16 %v1598
    %v1607 = vunpack.c.l.b16 %v1599
    %v1608 = vpack.c.b16 %v1607, %v1606
    %v1611 = vunpack.c.l.b16 %v1600
    %v1612 = vunpack.c.l.b16 %v1601
    %v1613 = vpack.c.b16 %v1612, %v1611
    %v1615 = vsel %vm589, %v1608, 0
    %v1618 = vsel %vm589, %v1613, 0
    %1620 = vmatpush.bf16.xpose.msra.mxu0 0
    %1621 = vmatpush.bf16.xpose.msra.mxu0 0
    %1622 = vmatpush.bf16.xpose.msra.mxu0 0
    %1623 = vmatpush.bf16.xpose.msra.mxu0 0
    %1624 = vmatpush.bf16.xpose.msra.mxu0 0
    %1625 = vmatpush.bf16.xpose.msra.mxu0 0
    %1626 = vmatpush.bf16.xpose.msra.mxu0 0
    %1627 = vmatpush.bf16.xpose.msra.mxu0 %v1618
    %1628 = vmatmul.bf16.gmra.mxu0 %v1615
    %v1629 = vpop.f32.mrf.mxu0
    %v1630 = vadd.f32 %v360, %v1629
    %v1631 = vpop.f32.mrf.mxu0
    %v1632 = vadd.f32 %v361, %v1631
    %1633 = vdwg.mxu0
    %v1634 = vsel %vm610, %v1630, -inf
    %1635 = vmax.xlane.f32.xlu0 %v1634
    %v1636 = vpop.xlane.xlu0 %1635
    %v1637 = vsel %vm610, %v1632, -inf
    %1638 = vmax.xlane.f32.xlu0 %v1637
    %v1639 = vpop.xlane.xlu0 %1638
    %v1640 = vsub.f32 %v1630, %v1636
    %v1641 = vsub.f32 %v1632, %v1639
    %v1642 = vmul.f32 %v1640, 1.442695
    %v1643 = vpow.pop %v1642
    %v1644 = vmul.f32 %v1641, 1.442695
    %v1645 = vpow.pop %v1644
    %v1646 = vsel %vm610, %v1643, 0.0
    %1647 = vadd.xlane.f32.xlu0 %v1646
    %v1648 = vpop.xlane.xlu0 %1647
    %v1649 = vsel %vm610, %v1645, 0.0
    %1650 = vadd.xlane.f32.xlu0 %v1649
    %v1651 = vpop.xlane.xlu0 %1650
    %v1652 = vrcp.pop %v1648
    %v1653 = vrcp.pop %v1651
    %v1654 = vmul.f32 %v1643, %v1652
    %v1655 = vmul.f32 %v1645, %v1653
    %v1656 = vpack.c.bf16 %v1655, %v1654
    %v1659 = vunpack.c.l.b16 %v1602
    %v1660 = vunpack.c.l.b16 %v1603
    %v1661 = vpack.c.b16 %v1660, %v1659
    %v1664 = vsel %vm610, %v1656, 0
    %1666 = vmatpush.bf16.msra.mxu0 0
    %1667 = vmatpush.bf16.msra.mxu0 0
    %1668 = vmatpush.bf16.msra.mxu0 0
    %1669 = vmatpush.bf16.msra.mxu0 0
    %1670 = vmatpush.bf16.msra.mxu0 0
    %1671 = vmatpush.bf16.msra.mxu0 0
    %1672 = vmatpush.bf16.msra.mxu0 0
    %1673 = vmatpush.bf16.msra.mxu0 %v1661
    %1674 = vmatmul.bf16.gmra.mxu0 %v1664
    %v1675 = vpop.f32.mrf.mxu0
    %v1676 = vadd.f32 0.0, %v1675
    %v1677 = vpop.f32.mrf.mxu0
    %v1678 = vadd.f32 0.0, %v1677
    %1679 = vdwg.mxu0
    %1680 = vrot.lane.b32.xlu0 %v1608, 96
    %v1681 = vpop.permute.xlu0 %1680
    %1682 = vrot.lane.b32.xlu0 %v1613, 96
    %v1683 = vpop.permute.xlu0 %1682
    %v1685 = vsel %vm589, %v1681, 0
    %v1688 = vsel %vm589, %v1683, 0
    %1690 = vmatpush.bf16.xpose.msra.mxu0 0
    %1691 = vmatpush.bf16.xpose.msra.mxu0 0
    %1692 = vmatpush.bf16.xpose.msra.mxu0 0
    %1693 = vmatpush.bf16.xpose.msra.mxu0 0
    %1694 = vmatpush.bf16.xpose.msra.mxu0 0
    %1695 = vmatpush.bf16.xpose.msra.mxu0 0
    %1696 = vmatpush.bf16.xpose.msra.mxu0 0
    %1697 = vmatpush.bf16.xpose.msra.mxu0 %v1688
    %1698 = vmatmul.bf16.gmra.mxu0 %v1685
    %v1699 = vpop.f32.mrf.mxu0
    %v1700 = vadd.f32 %v360, %v1699
    %v1701 = vpop.f32.mrf.mxu0
    %v1702 = vadd.f32 %v361, %v1701
    %1703 = vdwg.mxu0
    %v1704 = vsel %vm610, %v1700, -inf
    %1705 = vmax.xlane.f32.xlu0 %v1704
    %v1706 = vpop.xlane.xlu0 %1705
    %v1707 = vsel %vm610, %v1702, -inf
    %1708 = vmax.xlane.f32.xlu0 %v1707
    %v1709 = vpop.xlane.xlu0 %1708
    %v1710 = vsub.f32 %v1700, %v1706
    %v1711 = vsub.f32 %v1702, %v1709
    %v1712 = vmul.f32 %v1710, 1.442695
    %v1713 = vpow.pop %v1712
    %v1714 = vmul.f32 %v1711, 1.442695
    %v1715 = vpow.pop %v1714
    %v1716 = vsel %vm610, %v1713, 0.0
    %1717 = vadd.xlane.f32.xlu0 %v1716
    %v1718 = vpop.xlane.xlu0 %1717
    %v1719 = vsel %vm610, %v1715, 0.0
    %1720 = vadd.xlane.f32.xlu0 %v1719
    %v1721 = vpop.xlane.xlu0 %1720
    %v1722 = vrcp.pop %v1718
    %v1723 = vrcp.pop %v1721
    %v1724 = vmul.f32 %v1713, %v1722
    %v1725 = vmul.f32 %v1715, %v1723
    %v1726 = vpack.c.bf16 %v1725, %v1724
    %1727 = vrot.lane.b32.xlu0 %v1661, 96
    %v1728 = vpop.permute.xlu0 %1727
    %v1731 = vsel %vm610, %v1726, 0
    %1733 = vmatpush.bf16.msra.mxu0 0
    %1734 = vmatpush.bf16.msra.mxu0 0
    %1735 = vmatpush.bf16.msra.mxu0 0
    %1736 = vmatpush.bf16.msra.mxu0 0
    %1737 = vmatpush.bf16.msra.mxu0 0
    %1738 = vmatpush.bf16.msra.mxu0 0
    %1739 = vmatpush.bf16.msra.mxu0 0
    %1740 = vmatpush.bf16.msra.mxu0 %v1728
    %1741 = vmatmul.bf16.gmra.mxu0 %v1731
    %v1742 = vpop.f32.mrf.mxu0
    %v1743 = vadd.f32 0.0, %v1742
    %v1744 = vpop.f32.mrf.mxu0
    %v1745 = vadd.f32 0.0, %v1744
    %1746 = vdwg.mxu0
    %1747 = vrot.lane.b32.xlu0 %v1608, 64
    %v1748 = vpop.permute.xlu0 %1747
    %1749 = vrot.lane.b32.xlu0 %v1613, 64
    %v1750 = vpop.permute.xlu0 %1749
    %v1752 = vsel %vm589, %v1748, 0
    %v1755 = vsel %vm589, %v1750, 0
    %1757 = vmatpush.bf16.xpose.msra.mxu0 0
    %1758 = vmatpush.bf16.xpose.msra.mxu0 0
    %1759 = vmatpush.bf16.xpose.msra.mxu0 0
    %1760 = vmatpush.bf16.xpose.msra.mxu0 0
    %1761 = vmatpush.bf16.xpose.msra.mxu0 0
    %1762 = vmatpush.bf16.xpose.msra.mxu0 0
    %1763 = vmatpush.bf16.xpose.msra.mxu0 0
    %1764 = vmatpush.bf16.xpose.msra.mxu0 %v1755
    %1765 = vmatmul.bf16.gmra.mxu0 %v1752
    %v1766 = vpop.f32.mrf.mxu0
    %v1767 = vadd.f32 %v360, %v1766
    %v1768 = vpop.f32.mrf.mxu0
    %v1769 = vadd.f32 %v361, %v1768
    %1770 = vdwg.mxu0
    %v1771 = vsel %vm610, %v1767, -inf
    %1772 = vmax.xlane.f32.xlu0 %v1771
    %v1773 = vpop.xlane.xlu0 %1772
    %v1774 = vsel %vm610, %v1769, -inf
    %1775 = vmax.xlane.f32.xlu0 %v1774
    %v1776 = vpop.xlane.xlu0 %1775
    %v1777 = vsub.f32 %v1767, %v1773
    %v1778 = vsub.f32 %v1769, %v1776
    %v1779 = vmul.f32 %v1777, 1.442695
    %v1780 = vpow.pop %v1779
    %v1781 = vmul.f32 %v1778, 1.442695
    %v1782 = vpow.pop %v1781
    %v1783 = vsel %vm610, %v1780, 0.0
    %1784 = vadd.xlane.f32.xlu0 %v1783
    %v1785 = vpop.xlane.xlu0 %1784
    %v1786 = vsel %vm610, %v1782, 0.0
    %1787 = vadd.xlane.f32.xlu0 %v1786
    %v1788 = vpop.xlane.xlu0 %1787
    %v1789 = vrcp.pop %v1785
    %v1790 = vrcp.pop %v1788
    %v1791 = vmul.f32 %v1780, %v1789
    %v1792 = vmul.f32 %v1782, %v1790
    %v1793 = vpack.c.bf16 %v1792, %v1791
    %1794 = vrot.lane.b32.xlu0 %v1661, 64
    %v1795 = vpop.permute.xlu0 %1794
    %v1798 = vsel %vm610, %v1793, 0
    %1800 = vmatpush.bf16.msra.mxu0 0
    %1801 = vmatpush.bf16.msra.mxu0 0
    %1802 = vmatpush.bf16.msra.mxu0 0
    %1803 = vmatpush.bf16.msra.mxu0 0
    %1804 = vmatpush.bf16.msra.mxu0 0
    %1805 = vmatpush.bf16.msra.mxu0 0
    %1806 = vmatpush.bf16.msra.mxu0 0
    %1807 = vmatpush.bf16.msra.mxu0 %v1795
    %1808 = vmatmul.bf16.gmra.mxu0 %v1798
    %v1809 = vpop.f32.mrf.mxu0
    %v1810 = vadd.f32 0.0, %v1809
    %v1811 = vpop.f32.mrf.mxu0
    %v1812 = vadd.f32 0.0, %v1811
    %1813 = vdwg.mxu0
    %1814 = vrot.lane.b32.xlu0 %v1608, 32
    %v1815 = vpop.permute.xlu0 %1814
    %1816 = vrot.lane.b32.xlu0 %v1613, 32
    %v1817 = vpop.permute.xlu0 %1816
    %v1819 = vsel %vm589, %v1815, 0
    %v1822 = vsel %vm589, %v1817, 0
    %1824 = vmatpush.bf16.xpose.msra.mxu0 0
    %1825 = vmatpush.bf16.xpose.msra.mxu0 0
    %1826 = vmatpush.bf16.xpose.msra.mxu0 0
    %1827 = vmatpush.bf16.xpose.msra.mxu0 0
    %1828 = vmatpush.bf16.xpose.msra.mxu0 0
    %1829 = vmatpush.bf16.xpose.msra.mxu0 0
    %1830 = vmatpush.bf16.xpose.msra.mxu0 0
    %1831 = vmatpush.bf16.xpose.msra.mxu0 %v1822
    %1832 = vmatmul.bf16.gmra.mxu0 %v1819
    %v1833 = vpop.f32.mrf.mxu0
    %v1834 = vadd.f32 %v360, %v1833
    %v1835 = vpop.f32.mrf.mxu0
    %v1836 = vadd.f32 %v361, %v1835
    %1837 = vdwg.mxu0
    %v1838 = vsel %vm610, %v1834, -inf
    %1839 = vmax.xlane.f32.xlu0 %v1838
    %v1840 = vpop.xlane.xlu0 %1839
    %v1841 = vsel %vm610, %v1836, -inf
    %1842 = vmax.xlane.f32.xlu0 %v1841
    %v1843 = vpop.xlane.xlu0 %1842
    %v1844 = vsub.f32 %v1834, %v1840
    %v1845 = vsub.f32 %v1836, %v1843
    %v1846 = vmul.f32 %v1844, 1.442695
    %v1847 = vpow.pop %v1846
    %v1848 = vmul.f32 %v1845, 1.442695
    %v1849 = vpow.pop %v1848
    %v1850 = vsel %vm610, %v1847, 0.0
    %1851 = vadd.xlane.f32.xlu0 %v1850
    %v1852 = vpop.xlane.xlu0 %1851
    %v1853 = vsel %vm610, %v1849, 0.0
    %1854 = vadd.xlane.f32.xlu0 %v1853
    %v1855 = vpop.xlane.xlu0 %1854
    %v1856 = vrcp.pop %v1852
    %v1857 = vrcp.pop %v1855
    %v1858 = vmul.f32 %v1847, %v1856
    %v1859 = vmul.f32 %v1849, %v1857
    %v1860 = vpack.c.bf16 %v1859, %v1858
    %1861 = vrot.lane.b32.xlu0 %v1661, 32
    %v1862 = vpop.permute.xlu0 %1861
    %v1865 = vsel %vm610, %v1860, 0
    %1867 = vmatpush.bf16.msra.mxu0 0
    %1868 = vmatpush.bf16.msra.mxu0 0
    %1869 = vmatpush.bf16.msra.mxu0 0
    %1870 = vmatpush.bf16.msra.mxu0 0
    %1871 = vmatpush.bf16.msra.mxu0 0
    %1872 = vmatpush.bf16.msra.mxu0 0
    %1873 = vmatpush.bf16.msra.mxu0 0
    %1874 = vmatpush.bf16.msra.mxu0 %v1862
    %1875 = vmatmul.bf16.gmra.mxu0 %v1865
    %v1876 = vpop.f32.mrf.mxu0
    %v1877 = vadd.f32 0.0, %v1876
    %v1878 = vpop.f32.mrf.mxu0
    %v1879 = vadd.f32 0.0, %v1878
    %1880 = vdwg.mxu0
    %1883 = vrot.lane.b32.xlu0 %v1743, 32
    %v1884 = vpop.permute.xlu0 %1883
    %1885 = vrot.lane.b32.xlu0 %v1745, 32
    %v1886 = vpop.permute.xlu0 %1885
    %1891 = vrot.lane.b32.xlu0 %v1810, 64
    %v1892 = vpop.permute.xlu0 %1891
    %1893 = vrot.lane.b32.xlu0 %v1812, 64
    %v1894 = vpop.permute.xlu0 %1893
    %1899 = vrot.lane.b32.xlu0 %v1877, 96
    %v1900 = vpop.permute.xlu0 %1899
    %1901 = vrot.lane.b32.xlu0 %v1879, 96
    %v1902 = vpop.permute.xlu0 %1901
    %v1905 = vsel %vm589, %v1676, %v1884
    %v1906 = vsel %vm589, %v1678, %v1886
    %v1907 = vsel %vm884, %v1905, %v1892
    %v1908 = vsel %vm884, %v1906, %v1894
    %v1909 = vsel %vm887, %v1907, %v1900
    %v1910 = vsel %vm887, %v1908, %v1902
    %s1911 = scalar_lea.vmem [#allocation2], 64
    %v1912 = vld [vmem:[%s1911] sm:$0xf]
    %v1913 = vld [vmem:[%s1911 + $0x4] sm:$0xf]
    %v1914 = vld [vmem:[%s1911 + $0x8] sm:$0xf]
    %v1915 = vld [vmem:[%s1911 + $0xc] sm:$0xf]
    %v1916 = vld [vmem:[%s1911 + $0x10] sm:$0xf]
    %v1917 = vld [vmem:[%s1911 + $0x14] sm:$0xf]
    %v1918 = vld [vmem:[%s1911 + $0x18] sm:$0xf]
    %v1919 = vld [vmem:[%s1911 + $0x1c] sm:$0xf]
    %v1920 = vld [vmem:[%s1911 + $0x20] sm:$0xf]
    %v1921 = vld [vmem:[%s1911 + $0x24] sm:$0xf]
    %v1922 = vld [vmem:[%s1911 + $0x28] sm:$0xf]
    %v1923 = vld [vmem:[%s1911 + $0x2c] sm:$0xf]
    %v1924 = vld [vmem:[%s1911 + $0x30] sm:$0xf]
    %v1925 = vld [vmem:[%s1911 + $0x34] sm:$0xf]
    %v1926 = vld [vmem:[%s1911 + $0x38] sm:$0xf]
    %v1927 = vld [vmem:[%s1911 + $0x3c] sm:$0xf]
    %v1928 = vpack.c.bf16 %v1910, %v1909
    %s1929 = scalar_lea.vmem %s19, 1
    %v1930 = vld [vmem:[%s1929] sm:$0x1]
    %v1932 = vperm.slane %v1930, 0
    %v1950 = vunpack.c.l.b16 %v1912
    %v1951 = vunpack.c.l.b16 %v1913
    %v1952 = vunpack.c.l.b16 %v1914
    %v1953 = vunpack.c.l.b16 %v1915
    %v1954 = vunpack.c.l.b16 %v1916
    %v1955 = vunpack.c.l.b16 %v1917
    %v1956 = vunpack.c.l.b16 %v1918
    %v1957 = vunpack.c.l.b16 %v1919
    %v1958 = vunpack.c.l.b16 %v1920
    %v1959 = vunpack.c.l.b16 %v1921
    %v1960 = vunpack.c.l.b16 %v1922
    %v1961 = vunpack.c.l.b16 %v1923
    %v1962 = vunpack.c.l.b16 %v1924
    %v1963 = vunpack.c.l.b16 %v1925
    %v1964 = vunpack.c.l.b16 %v1926
    %v1965 = vunpack.c.l.b16 %v1927
    %v1966 = vpack.c.b16 %v1951, %v1950
    %v1967 = vpack.c.b16 %v1953, %v1952
    %v1968 = vpack.c.b16 %v1955, %v1954
    %v1969 = vpack.c.b16 %v1957, %v1956
    %v1970 = vpack.c.b16 %v1959, %v1958
    %v1971 = vpack.c.b16 %v1961, %v1960
    %v1972 = vpack.c.b16 %v1963, %v1962
    %v1973 = vpack.c.b16 %v1965, %v1964
    %1982 = vmatpush.bf16.msra.mxu0 %v1973
    %1983 = vmatpush.bf16.msra.mxu0 %v1972
    %1984 = vmatpush.bf16.msra.mxu0 %v1971
    %1985 = vmatpush.bf16.msra.mxu0 %v1970
    %1986 = vmatpush.bf16.msra.mxu0 %v1969
    %1987 = vmatpush.bf16.msra.mxu0 %v1968
    %1988 = vmatpush.bf16.msra.mxu0 %v1967
    %1989 = vmatpush.bf16.msra.mxu0 %v1966
    %1990 = vmatmul.bf16.gmra.mxu0 %v1928
    %v1991 = vpop.f32.mrf.mxu0
    %v1992 = vadd.f32 %v1932, %v1991
    %v1993 = vpop.f32.mrf.mxu0
    %v1994 = vadd.f32 %v1932, %v1993
    %1995 = vdwg.mxu0
    %v1996 = vadd.f32 %v1383, %v1992
    %v1997 = vadd.f32 %v1384, %v1994
    %s1998 = scalar_lea.vmem %s21, 1
    %v1999 = vld [vmem:[%s1998] sm:$0x1]
    %s2000 = scalar_lea.vmem %s23, 1
    %v2001 = vld [vmem:[%s2000] sm:$0x1]
    %2002 = vadd.xlane.f32.xlu0 %v1996
    %v2003 = vpop.xlane.xlu0 %2002
    %2004 = vadd.xlane.f32.xlu0 %v1997
    %v2005 = vpop.xlane.xlu0 %2004
    %v2006 = vmul.f32 %v2003, %v987
    %v2007 = vmul.f32 %v2005, %v987
    %v2008 = vsub.f32 %v1996, %v2006
    %v2009 = vsub.f32 %v1997, %v2007
    %v2010 = vmul.f32 %v2008, %v2008
    %v2011 = vmul.f32 %v2009, %v2009
    %2012 = vadd.xlane.f32.xlu0 %v2010
    %v2013 = vpop.xlane.xlu0 %2012
    %2014 = vadd.xlane.f32.xlu0 %v2011
    %v2015 = vpop.xlane.xlu0 %2014
    %v2016 = vmul.f32 %v2013, %v987
    %v2017 = vmul.f32 %v2015, %v987
    %v2018 = vadd.f32 %v2016, 1e-05
    %v2019 = vadd.f32 %v2017, 1e-05
    %v2020 = vrsqrt.pop %v2018
    %v2021 = vmul.f32 %v2020, %v2018
    %v2022 = vmul.f32 %v2021, %v2020
    %v2023 = vmul.f32 0.5, %v2022
    %v2024 = vsub.f32 1.5, %v2023
    %v2025 = vmul.f32 %v2020, %v2024
    %vm2026 = vweird.f32 %v2018
    %vm2027 = vweird.f32 %v2020
    %vm2028 = vmor %vm2026, %vm2027
    %v2029 = vsel %vm2028, %v2020, %v2025
    %v2030 = vrsqrt.pop %v2019
    %v2031 = vmul.f32 %v2030, %v2019
    %v2032 = vmul.f32 %v2031, %v2030
    %v2033 = vmul.f32 0.5, %v2032
    %v2034 = vsub.f32 1.5, %v2033
    %v2035 = vmul.f32 %v2030, %v2034
    %vm2036 = vweird.f32 %v2019
    %vm2037 = vweird.f32 %v2030
    %vm2038 = vmor %vm2036, %vm2037
    %v2039 = vsel %vm2038, %v2030, %v2035
    %v2040 = vmul.f32 %v2008, %v2029
    %v2041 = vmul.f32 %v2009, %v2039
    %v2043 = vperm.slane %v1999, 0
    %v2045 = vmul.f32 %v2040, %v2043
    %v2046 = vmul.f32 %v2041, %v2043
    %v2048 = vperm.slane %v2001, 0
    %v2050 = vadd.f32 %v2045, %v2048
    %v2051 = vadd.f32 %v2046, %v2048
    %s2052 = scalar_lea.vmem [#allocation4], 128
    %v2053 = vld [vmem:[%s2052] sm:$0xff]
    %v2054 = vld [vmem:[%s2052 + $0x8] sm:$0xff]
    %v2055 = vld [vmem:[%s2052 + $0x10] sm:$0xff]
    %v2056 = vld [vmem:[%s2052 + $0x18] sm:$0xff]
    %v2057 = vld [vmem:[%s2052 + $0x20] sm:$0xff]
    %v2058 = vld [vmem:[%s2052 + $0x28] sm:$0xff]
    %v2059 = vld [vmem:[%s2052 + $0x30] sm:$0xff]
    %v2060 = vld [vmem:[%s2052 + $0x38] sm:$0xff]
    %v2061 = vld [vmem:[%s2052 + $0x40] sm:$0xff]
    %v2062 = vld [vmem:[%s2052 + $0x48] sm:$0xff]
    %v2063 = vld [vmem:[%s2052 + $0x50] sm:$0xff]
    %v2064 = vld [vmem:[%s2052 + $0x58] sm:$0xff]
    %v2065 = vld [vmem:[%s2052 + $0x60] sm:$0xff]
    %v2066 = vld [vmem:[%s2052 + $0x68] sm:$0xff]
    %v2067 = vld [vmem:[%s2052 + $0x70] sm:$0xff]
    %v2068 = vld [vmem:[%s2052 + $0x78] sm:$0xff]
    %v2069 = vpack.c.bf16 %v2051, %v2050
    %s2070 = scalar_lea.vmem %s27, 2
    %v2071 = vld [vmem:[%s2070] sm:$0x3]
    %v2073 = vperm.slane %v2071, 0
    %v2074 = vperm.slane %v2071, 1
    %v2093 = vunpack.c.l.b16 %v2053
    %v2094 = vunpack.c.h.b16 %v2053
    %v2095 = vunpack.c.l.b16 %v2054
    %v2096 = vunpack.c.h.b16 %v2054
    %v2097 = vunpack.c.l.b16 %v2055
    %v2098 = vunpack.c.h.b16 %v2055
    %v2099 = vunpack.c.l.b16 %v2056
    %v2100 = vunpack.c.h.b16 %v2056
    %v2101 = vunpack.c.l.b16 %v2057
    %v2102 = vunpack.c.h.b16 %v2057
    %v2103 = vunpack.c.l.b16 %v2058
    %v2104 = vunpack.c.h.b16 %v2058
    %v2105 = vunpack.c.l.b16 %v2059
    %v2106 = vunpack.c.h.b16 %v2059
    %v2107 = vunpack.c.l.b16 %v2060
    %v2108 = vunpack.c.h.b16 %v2060
    %v2109 = vunpack.c.l.b16 %v2061
    %v2110 = vunpack.c.h.b16 %v2061
    %v2111 = vunpack.c.l.b16 %v2062
    %v2112 = vunpack.c.h.b16 %v2062
    %v2113 = vunpack.c.l.b16 %v2063
    %v2114 = vunpack.c.h.b16 %v2063
    %v2115 = vunpack.c.l.b16 %v2064
    %v2116 = vunpack.c.h.b16 %v2064
    %v2117 = vunpack.c.l.b16 %v2065
    %v2118 = vunpack.c.h.b16 %v2065
    %v2119 = vunpack.c.l.b16 %v2066
    %v2120 = vunpack.c.h.b16 %v2066
    %v2121 = vunpack.c.l.b16 %v2067
    %v2122 = vunpack.c.h.b16 %v2067
    %v2123 = vunpack.c.l.b16 %v2068
    %v2124 = vunpack.c.h.b16 %v2068
    %v2125 = vpack.c.b16 %v2095, %v2093
    %v2126 = vpack.c.b16 %v2096, %v2094
    %v2127 = vpack.c.b16 %v2099, %v2097
    %v2128 = vpack.c.b16 %v2100, %v2098
    %v2129 = vpack.c.b16 %v2103, %v2101
    %v2130 = vpack.c.b16 %v2104, %v2102
    %v2131 = vpack.c.b16 %v2107, %v2105
    %v2132 = vpack.c.b16 %v2108, %v2106
    %v2133 = vpack.c.b16 %v2111, %v2109
    %v2134 = vpack.c.b16 %v2112, %v2110
    %v2135 = vpack.c.b16 %v2115, %v2113
    %v2136 = vpack.c.b16 %v2116, %v2114
    %v2137 = vpack.c.b16 %v2119, %v2117
    %v2138 = vpack.c.b16 %v2120, %v2118
    %v2139 = vpack.c.b16 %v2123, %v2121
    %v2140 = vpack.c.b16 %v2124, %v2122
    %2157 = vmatpush.bf16.msra.mxu0 %v2139
    %2158 = vmatpush.bf16.msra.mxu0 %v2137
    %2159 = vmatpush.bf16.msra.mxu0 %v2135
    %2160 = vmatpush.bf16.msra.mxu0 %v2133
    %2161 = vmatpush.bf16.msra.mxu0 %v2131
    %2162 = vmatpush.bf16.msra.mxu0 %v2129
    %2163 = vmatpush.bf16.msra.mxu0 %v2127
    %2164 = vmatpush.bf16.msra.mxu0 %v2125
    %2165 = vmatmul.bf16.gmra.mxu0 %v2069
    %v2166 = vpop.f32.mrf.mxu0
    %v2167 = vadd.f32 %v2073, %v2166
    %v2168 = vpop.f32.mrf.mxu0
    %v2169 = vadd.f32 %v2073, %v2168
    %2170 = vdwg.mxu0
    %2171 = vmatpush.bf16.msra.mxu0 %v2140
    %2172 = vmatpush.bf16.msra.mxu0 %v2138
    %2173 = vmatpush.bf16.msra.mxu0 %v2136
    %2174 = vmatpush.bf16.msra.mxu0 %v2134
    %2175 = vmatpush.bf16.msra.mxu0 %v2132
    %2176 = vmatpush.bf16.msra.mxu0 %v2130
    %2177 = vmatpush.bf16.msra.mxu0 %v2128
    %2178 = vmatpush.bf16.msra.mxu0 %v2126
    %2179 = vmatmul.bf16.gmra.mxu0 %v2069
    %v2180 = vpop.f32.mrf.mxu0
    %v2181 = vadd.f32 %v2074, %v2180
    %v2182 = vpop.f32.mrf.mxu0
    %v2183 = vadd.f32 %v2074, %v2182
    %2184 = vdwg.mxu0
    %v2185 = vmax.f32 %v2167, 0.0
    %v2186 = vmax.f32 %v2181, 0.0
    %v2187 = vmax.f32 %v2169, 0.0
    %v2188 = vmax.f32 %v2183, 0.0
    %s2189 = scalar_lea.vmem [#allocation6], 128
    %v2190 = vld [vmem:[%s2189] sm:$0xf]
    %v2191 = vld [vmem:[%s2189 + $0x4] sm:$0xf]
    %v2192 = vld [vmem:[%s2189 + $0x8] sm:$0xf]
    %v2193 = vld [vmem:[%s2189 + $0xc] sm:$0xf]
    %v2194 = vld [vmem:[%s2189 + $0x10] sm:$0xf]
    %v2195 = vld [vmem:[%s2189 + $0x14] sm:$0xf]
    %v2196 = vld [vmem:[%s2189 + $0x18] sm:$0xf]
    %v2197 = vld [vmem:[%s2189 + $0x1c] sm:$0xf]
    %v2198 = vld [vmem:[%s2189 + $0x20] sm:$0xf]
    %v2199 = vld [vmem:[%s2189 + $0x24] sm:$0xf]
    %v2200 = vld [vmem:[%s2189 + $0x28] sm:$0xf]
    %v2201 = vld [vmem:[%s2189 + $0x2c] sm:$0xf]
    %v2202 = vld [vmem:[%s2189 + $0x30] sm:$0xf]
    %v2203 = vld [vmem:[%s2189 + $0x34] sm:$0xf]
    %v2204 = vld [vmem:[%s2189 + $0x38] sm:$0xf]
    %v2205 = vld [vmem:[%s2189 + $0x3c] sm:$0xf]
    %v2206 = vld [vmem:[%s2189 + $0x40] sm:$0xf]
    %v2207 = vld [vmem:[%s2189 + $0x44] sm:$0xf]
    %v2208 = vld [vmem:[%s2189 + $0x48] sm:$0xf]
    %v2209 = vld [vmem:[%s2189 + $0x4c] sm:$0xf]
    %v2210 = vld [vmem:[%s2189 + $0x50] sm:$0xf]
    %v2211 = vld [vmem:[%s2189 + $0x54] sm:$0xf]
    %v2212 = vld [vmem:[%s2189 + $0x58] sm:$0xf]
    %v2213 = vld [vmem:[%s2189 + $0x5c] sm:$0xf]
    %v2214 = vld [vmem:[%s2189 + $0x60] sm:$0xf]
    %v2215 = vld [vmem:[%s2189 + $0x64] sm:$0xf]
    %v2216 = vld [vmem:[%s2189 + $0x68] sm:$0xf]
    %v2217 = vld [vmem:[%s2189 + $0x6c] sm:$0xf]
    %v2218 = vld [vmem:[%s2189 + $0x70] sm:$0xf]
    %v2219 = vld [vmem:[%s2189 + $0x74] sm:$0xf]
    %v2220 = vld [vmem:[%s2189 + $0x78] sm:$0xf]
    %v2221 = vld [vmem:[%s2189 + $0x7c] sm:$0xf]
    %v2222 = vpack.c.bf16 %v2187, %v2185
    %v2223 = vpack.c.bf16 %v2188, %v2186
    %s2224 = scalar_lea.vmem %s31, 1
    %v2225 = vld [vmem:[%s2224] sm:$0x1]
    %v2227 = vperm.slane %v2225, 0
    %v2261 = vunpack.c.l.b16 %v2190
    %v2262 = vunpack.c.l.b16 %v2191
    %v2263 = vunpack.c.l.b16 %v2192
    %v2264 = vunpack.c.l.b16 %v2193
    %v2265 = vunpack.c.l.b16 %v2194
    %v2266 = vunpack.c.l.b16 %v2195
    %v2267 = vunpack.c.l.b16 %v2196
    %v2268 = vunpack.c.l.b16 %v2197
    %v2269 = vunpack.c.l.b16 %v2198
    %v2270 = vunpack.c.l.b16 %v2199
    %v2271 = vunpack.c.l.b16 %v2200
    %v2272 = vunpack.c.l.b16 %v2201
    %v2273 = vunpack.c.l.b16 %v2202
    %v2274 = vunpack.c.l.b16 %v2203
    %v2275 = vunpack.c.l.b16 %v2204
    %v2276 = vunpack.c.l.b16 %v2205
    %v2277 = vunpack.c.l.b16 %v2206
    %v2278 = vunpack.c.l.b16 %v2207
    %v2279 = vunpack.c.l.b16 %v2208
    %v2280 = vunpack.c.l.b16 %v2209
    %v2281 = vunpack.c.l.b16 %v2210
    %v2282 = vunpack.c.l.b16 %v2211
    %v2283 = vunpack.c.l.b16 %v2212
    %v2284 = vunpack.c.l.b16 %v2213
    %v2285 = vunpack.c.l.b16 %v2214
    %v2286 = vunpack.c.l.b16 %v2215
    %v2287 = vunpack.c.l.b16 %v2216
    %v2288 = vunpack.c.l.b16 %v2217
    %v2289 = vunpack.c.l.b16 %v2218
    %v2290 = vunpack.c.l.b16 %v2219
    %v2291 = vunpack.c.l.b16 %v2220
    %v2292 = vunpack.c.l.b16 %v2221
    %v2293 = vpack.c.b16 %v2262, %v2261
    %v2294 = vpack.c.b16 %v2264, %v2263
    %v2295 = vpack.c.b16 %v2266, %v2265
    %v2296 = vpack.c.b16 %v2268, %v2267
    %v2297 = vpack.c.b16 %v2270, %v2269
    %v2298 = vpack.c.b16 %v2272, %v2271
    %v2299 = vpack.c.b16 %v2274, %v2273
    %v2300 = vpack.c.b16 %v2276, %v2275
    %v2301 = vpack.c.b16 %v2278, %v2277
    %v2302 = vpack.c.b16 %v2280, %v2279
    %v2303 = vpack.c.b16 %v2282, %v2281
    %v2304 = vpack.c.b16 %v2284, %v2283
    %v2305 = vpack.c.b16 %v2286, %v2285
    %v2306 = vpack.c.b16 %v2288, %v2287
    %v2307 = vpack.c.b16 %v2290, %v2289
    %v2308 = vpack.c.b16 %v2292, %v2291
    %2325 = vmatpush.bf16.msra.mxu0 %v2300
    %2326 = vmatpush.bf16.msra.mxu0 %v2299
    %2327 = vmatpush.bf16.msra.mxu0 %v2298
    %2328 = vmatpush.bf16.msra.mxu0 %v2297
    %2329 = vmatpush.bf16.msra.mxu0 %v2296
    %2330 = vmatpush.bf16.msra.mxu0 %v2295
    %2331 = vmatpush.bf16.msra.mxu0 %v2294
    %2332 = vmatpush.bf16.msra.mxu0 %v2293
    %2333 = vmatmul.bf16.gmra.mxu0 %v2222
    %v2334 = vpop.f32.mrf.mxu0
    %v2335 = vadd.f32 %v2227, %v2334
    %v2336 = vpop.f32.mrf.mxu0
    %v2337 = vadd.f32 %v2227, %v2336
    %2338 = vdwg.mxu0
    %2339 = vmatpush.bf16.msra.mxu0 %v2308
    %2340 = vmatpush.bf16.msra.mxu0 %v2307
    %2341 = vmatpush.bf16.msra.mxu0 %v2306
    %2342 = vmatpush.bf16.msra.mxu0 %v2305
    %2343 = vmatpush.bf16.msra.mxu0 %v2304
    %2344 = vmatpush.bf16.msra.mxu0 %v2303
    %2345 = vmatpush.bf16.msra.mxu0 %v2302
    %2346 = vmatpush.bf16.msra.mxu0 %v2301
    %2347 = vmatmul.bf16.gmra.mxu0 %v2223
    %v2348 = vpop.f32.mrf.mxu0
    %v2349 = vadd.f32 %v2335, %v2348
    %v2350 = vpop.f32.mrf.mxu0
    %v2351 = vadd.f32 %v2337, %v2350
    %2352 = vdwg.mxu0
    %v2353 = vadd.f32 %v2050, %v2349
    %v2354 = vadd.f32 %v2051, %v2351
    %s2355 = scalar_lea.vmem %s33, 1
    %v2356 = vld [vmem:[%s2355] sm:$0x1]
    %s2357 = scalar_lea.vmem %s35, 1
    %v2358 = vld [vmem:[%s2357] sm:$0x1]
    %2359 = vadd.xlane.f32.xlu0 %v2353
    %v2360 = vpop.xlane.xlu0 %2359
    %2361 = vadd.xlane.f32.xlu0 %v2354
    %v2362 = vpop.xlane.xlu0 %2361
    %v2363 = vmul.f32 %v2360, %v987
    %v2364 = vmul.f32 %v2362, %v987
    %v2365 = vsub.f32 %v2353, %v2363
    %v2366 = vsub.f32 %v2354, %v2364
    %v2367 = vmul.f32 %v2365, %v2365
    %v2368 = vmul.f32 %v2366, %v2366
    %2369 = vadd.xlane.f32.xlu0 %v2367
    %v2370 = vpop.xlane.xlu0 %2369
    %2371 = vadd.xlane.f32.xlu0 %v2368
    %v2372 = vpop.xlane.xlu0 %2371
    %v2373 = vmul.f32 %v2370, %v987
    %v2374 = vmul.f32 %v2372, %v987
    %v2375 = vadd.f32 %v2373, 1e-05
    %v2376 = vadd.f32 %v2374, 1e-05
    %v2377 = vrsqrt.pop %v2375
    %v2378 = vmul.f32 %v2377, %v2375
    %v2379 = vmul.f32 %v2378, %v2377
    %v2380 = vmul.f32 0.5, %v2379
    %v2381 = vsub.f32 1.5, %v2380
    %v2382 = vmul.f32 %v2377, %v2381
    %vm2383 = vweird.f32 %v2375
    %vm2384 = vweird.f32 %v2377
    %vm2385 = vmor %vm2383, %vm2384
    %v2386 = vsel %vm2385, %v2377, %v2382
    %v2387 = vrsqrt.pop %v2376
    %v2388 = vmul.f32 %v2387, %v2376
    %v2389 = vmul.f32 %v2388, %v2387
    %v2390 = vmul.f32 0.5, %v2389
    %v2391 = vsub.f32 1.5, %v2390
    %v2392 = vmul.f32 %v2387, %v2391
    %vm2393 = vweird.f32 %v2376
    %vm2394 = vweird.f32 %v2387
    %vm2395 = vmor %vm2393, %vm2394
    %v2396 = vsel %vm2395, %v2387, %v2392
    %v2397 = vmul.f32 %v2365, %v2386
    %v2398 = vmul.f32 %v2366, %v2396
    %v2400 = vperm.slane %v2356, 0
    %v2402 = vmul.f32 %v2397, %v2400
    %v2403 = vmul.f32 %v2398, %v2400
    %v2405 = vperm.slane %v2358, 0
    %v2407 = vadd.f32 %v2402, %v2405
    %v2408 = vadd.f32 %v2403, %v2405
    %v2409 = vld [vmem:[#allocation7] sm:$0xff]
    %v2410 = vld [vmem:[#allocation7 + $0x8] sm:$0xff]
    %v2411 = vld [vmem:[#allocation7 + $0x10] sm:$0xff]
    %v2412 = vld [vmem:[#allocation7 + $0x18] sm:$0xff]
    %v2413 = vld [vmem:[#allocation7 + $0x20] sm:$0xff]
    %v2414 = vld [vmem:[#allocation7 + $0x28] sm:$0xff]
    %v2415 = vld [vmem:[#allocation7 + $0x30] sm:$0xff]
    %v2416 = vld [vmem:[#allocation7 + $0x38] sm:$0xff]
    %v2417 = vld [vmem:[#allocation7 + $0x40] sm:$0xff]
    %v2418 = vld [vmem:[#allocation7 + $0x48] sm:$0xff]
    %v2419 = vld [vmem:[#allocation7 + $0x50] sm:$0xff]
    %v2420 = vld [vmem:[#allocation7 + $0x58] sm:$0xff]
    %v2421 = vld [vmem:[#allocation7 + $0x60] sm:$0xff]
    %v2422 = vld [vmem:[#allocation7 + $0x68] sm:$0xff]
    %v2423 = vld [vmem:[#allocation7 + $0x70] sm:$0xff]
    %v2424 = vld [vmem:[#allocation7 + $0x78] sm:$0xff]
    %v2425 = vpack.c.bf16 %v2408, %v2407
    %v2426 = vld [vmem:[%s39] sm:$0x3]
    %v2428 = vperm.slane %v2426, 0
    %v2429 = vperm.slane %v2426, 1
    %v2448 = vunpack.c.l.b16 %v2409
    %v2449 = vunpack.c.h.b16 %v2409
    %v2450 = vunpack.c.l.b16 %v2410
    %v2451 = vunpack.c.h.b16 %v2410
    %v2452 = vunpack.c.l.b16 %v2411
    %v2453 = vunpack.c.h.b16 %v2411
    %v2454 = vunpack.c.l.b16 %v2412
    %v2455 = vunpack.c.h.b16 %v2412
    %v2456 = vunpack.c.l.b16 %v2413
    %v2457 = vunpack.c.h.b16 %v2413
    %v2458 = vunpack.c.l.b16 %v2414
    %v2459 = vunpack.c.h.b16 %v2414
    %v2460 = vunpack.c.l.b16 %v2415
    %v2461 = vunpack.c.h.b16 %v2415
    %v2462 = vunpack.c.l.b16 %v2416
    %v2463 = vunpack.c.h.b16 %v2416
    %v2464 = vunpack.c.l.b16 %v2417
    %v2465 = vunpack.c.h.b16 %v2417
    %v2466 = vunpack.c.l.b16 %v2418
    %v2467 = vunpack.c.h.b16 %v2418
    %v2468 = vunpack.c.l.b16 %v2419
    %v2469 = vunpack.c.h.b16 %v2419
    %v2470 = vunpack.c.l.b16 %v2420
    %v2471 = vunpack.c.h.b16 %v2420
    %v2472 = vunpack.c.l.b16 %v2421
    %v2473 = vunpack.c.h.b16 %v2421
    %v2474 = vunpack.c.l.b16 %v2422
    %v2475 = vunpack.c.h.b16 %v2422
    %v2476 = vunpack.c.l.b16 %v2423
    %v2477 = vunpack.c.h.b16 %v2423
    %v2478 = vunpack.c.l.b16 %v2424
    %v2479 = vunpack.c.h.b16 %v2424
    %v2480 = vpack.c.b16 %v2450, %v2448
    %v2481 = vpack.c.b16 %v2451, %v2449
    %v2482 = vpack.c.b16 %v2454, %v2452
    %v2483 = vpack.c.b16 %v2455, %v2453
    %v2484 = vpack.c.b16 %v2458, %v2456
    %v2485 = vpack.c.b16 %v2459, %v2457
    %v2486 = vpack.c.b16 %v2462, %v2460
    %v2487 = vpack.c.b16 %v2463, %v2461
    %v2488 = vpack.c.b16 %v2466, %v2464
    %v2489 = vpack.c.b16 %v2467, %v2465
    %v2490 = vpack.c.b16 %v2470, %v2468
    %v2491 = vpack.c.b16 %v2471, %v2469
    %v2492 = vpack.c.b16 %v2474, %v2472
    %v2493 = vpack.c.b16 %v2475, %v2473
    %v2494 = vpack.c.b16 %v2478, %v2476
    %v2495 = vpack.c.b16 %v2479, %v2477
    %2512 = vmatpush.bf16.msra.mxu0 %v2494
    %2513 = vmatpush.bf16.msra.mxu0 %v2492
    %2514 = vmatpush.bf16.msra.mxu0 %v2490
    %2515 = vmatpush.bf16.msra.mxu0 %v2488
    %2516 = vmatpush.bf16.msra.mxu0 %v2486
    %2517 = vmatpush.bf16.msra.mxu0 %v2484
    %2518 = vmatpush.bf16.msra.mxu0 %v2482
    %2519 = vmatpush.bf16.msra.mxu0 %v2480
    %2520 = vmatmul.bf16.gmra.mxu0 %v2425
    %v2521 = vpop.f32.mrf.mxu0
    %v2522 = vadd.f32 %v2428, %v2521
    %v2523 = vpop.f32.mrf.mxu0
    %v2524 = vadd.f32 %v2428, %v2523
    %2525 = vdwg.mxu0
    %2526 = vmatpush.bf16.msra.mxu0 %v2495
    %2527 = vmatpush.bf16.msra.mxu0 %v2493
    %2528 = vmatpush.bf16.msra.mxu0 %v2491
    %2529 = vmatpush.bf16.msra.mxu0 %v2489
    %2530 = vmatpush.bf16.msra.mxu0 %v2487
    %2531 = vmatpush.bf16.msra.mxu0 %v2485
    %2532 = vmatpush.bf16.msra.mxu0 %v2483
    %2533 = vmatpush.bf16.msra.mxu0 %v2481
    %2534 = vmatmul.bf16.gmra.mxu0 %v2425
    %v2535 = vpop.f32.mrf.mxu0
    %v2536 = vadd.f32 %v2429, %v2535
    %v2537 = vpop.f32.mrf.mxu0
    %v2538 = vadd.f32 %v2429, %v2537
    %2539 = vdwg.mxu0
    %v2540 = vmax.f32 %v2522, 0.0
    %v2541 = vmax.f32 %v2536, 0.0
    %v2542 = vmax.f32 %v2524, 0.0
    %v2543 = vmax.f32 %v2538, 0.0
    %v2544 = vld [vmem:[#allocation9] sm:$0xf]
    %v2545 = vld [vmem:[#allocation9 + $0x4] sm:$0xf]
    %v2546 = vld [vmem:[#allocation9 + $0x8] sm:$0xf]
    %v2547 = vld [vmem:[#allocation9 + $0xc] sm:$0xf]
    %v2548 = vld [vmem:[#allocation9 + $0x10] sm:$0xf]
    %v2549 = vld [vmem:[#allocation9 + $0x14] sm:$0xf]
    %v2550 = vld [vmem:[#allocation9 + $0x18] sm:$0xf]
    %v2551 = vld [vmem:[#allocation9 + $0x1c] sm:$0xf]
    %v2552 = vld [vmem:[#allocation9 + $0x20] sm:$0xf]
    %v2553 = vld [vmem:[#allocation9 + $0x24] sm:$0xf]
    %v2554 = vld [vmem:[#allocation9 + $0x28] sm:$0xf]
    %v2555 = vld [vmem:[#allocation9 + $0x2c] sm:$0xf]
    %v2556 = vld [vmem:[#allocation9 + $0x30] sm:$0xf]
    %v2557 = vld [vmem:[#allocation9 + $0x34] sm:$0xf]
    %v2558 = vld [vmem:[#allocation9 + $0x38] sm:$0xf]
    %v2559 = vld [vmem:[#allocation9 + $0x3c] sm:$0xf]
    %v2560 = vld [vmem:[#allocation9 + $0x40] sm:$0xf]
    %v2561 = vld [vmem:[#allocation9 + $0x44] sm:$0xf]
    %v2562 = vld [vmem:[#allocation9 + $0x48] sm:$0xf]
    %v2563 = vld [vmem:[#allocation9 + $0x4c] sm:$0xf]
    %v2564 = vld [vmem:[#allocation9 + $0x50] sm:$0xf]
    %v2565 = vld [vmem:[#allocation9 + $0x54] sm:$0xf]
    %v2566 = vld [vmem:[#allocation9 + $0x58] sm:$0xf]
    %v2567 = vld [vmem:[#allocation9 + $0x5c] sm:$0xf]
    %v2568 = vld [vmem:[#allocation9 + $0x60] sm:$0xf]
    %v2569 = vld [vmem:[#allocation9 + $0x64] sm:$0xf]
    %v2570 = vld [vmem:[#allocation9 + $0x68] sm:$0xf]
    %v2571 = vld [vmem:[#allocation9 + $0x6c] sm:$0xf]
    %v2572 = vld [vmem:[#allocation9 + $0x70] sm:$0xf]
    %v2573 = vld [vmem:[#allocation9 + $0x74] sm:$0xf]
    %v2574 = vld [vmem:[#allocation9 + $0x78] sm:$0xf]
    %v2575 = vld [vmem:[#allocation9 + $0x7c] sm:$0xf]
    %v2576 = vpack.c.bf16 %v2542, %v2540
    %v2577 = vpack.c.bf16 %v2543, %v2541
    %v2578 = vld [vmem:[%s43] sm:$0x1]
    %v2580 = vperm.slane %v2578, 0
    %v2614 = vunpack.c.l.b16 %v2544
    %v2615 = vunpack.c.l.b16 %v2545
    %v2616 = vunpack.c.l.b16 %v2546
    %v2617 = vunpack.c.l.b16 %v2547
    %v2618 = vunpack.c.l.b16 %v2548
    %v2619 = vunpack.c.l.b16 %v2549
    %v2620 = vunpack.c.l.b16 %v2550
    %v2621 = vunpack.c.l.b16 %v2551
    %v2622 = vunpack.c.l.b16 %v2552
    %v2623 = vunpack.c.l.b16 %v2553
    %v2624 = vunpack.c.l.b16 %v2554
    %v2625 = vunpack.c.l.b16 %v2555
    %v2626 = vunpack.c.l.b16 %v2556
    %v2627 = vunpack.c.l.b16 %v2557
    %v2628 = vunpack.c.l.b16 %v2558
    %v2629 = vunpack.c.l.b16 %v2559
    %v2630 = vunpack.c.l.b16 %v2560
    %v2631 = vunpack.c.l.b16 %v2561
    %v2632 = vunpack.c.l.b16 %v2562
    %v2633 = vunpack.c.l.b16 %v2563
    %v2634 = vunpack.c.l.b16 %v2564
    %v2635 = vunpack.c.l.b16 %v2565
    %v2636 = vunpack.c.l.b16 %v2566
    %v2637 = vunpack.c.l.b16 %v2567
    %v2638 = vunpack.c.l.b16 %v2568
    %v2639 = vunpack.c.l.b16 %v2569
    %v2640 = vunpack.c.l.b16 %v2570
    %v2641 = vunpack.c.l.b16 %v2571
    %v2642 = vunpack.c.l.b16 %v2572
    %v2643 = vunpack.c.l.b16 %v2573
    %v2644 = vunpack.c.l.b16 %v2574
    %v2645 = vunpack.c.l.b16 %v2575
    %v2646 = vpack.c.b16 %v2615, %v2614
    %v2647 = vpack.c.b16 %v2617, %v2616
    %v2648 = vpack.c.b16 %v2619, %v2618
    %v2649 = vpack.c.b16 %v2621, %v2620
    %v2650 = vpack.c.b16 %v2623, %v2622
    %v2651 = vpack.c.b16 %v2625, %v2624
    %v2652 = vpack.c.b16 %v2627, %v2626
    %v2653 = vpack.c.b16 %v2629, %v2628
    %v2654 = vpack.c.b16 %v2631, %v2630
    %v2655 = vpack.c.b16 %v2633, %v2632
    %v2656 = vpack.c.b16 %v2635, %v2634
    %v2657 = vpack.c.b16 %v2637, %v2636
    %v2658 = vpack.c.b16 %v2639, %v2638
    %v2659 = vpack.c.b16 %v2641, %v2640
    %v2660 = vpack.c.b16 %v2643, %v2642
    %v2661 = vpack.c.b16 %v2645, %v2644
    %2678 = vmatpush.bf16.msra.mxu0 %v2653
    %2679 = vmatpush.bf16.msra.mxu0 %v2652
    %2680 = vmatpush.bf16.msra.mxu0 %v2651
    %2681 = vmatpush.bf16.msra.mxu0 %v2650
    %2682 = vmatpush.bf16.msra.mxu0 %v2649
    %2683 = vmatpush.bf16.msra.mxu0 %v2648
    %2684 = vmatpush.bf16.msra.mxu0 %v2647
    %2685 = vmatpush.bf16.msra.mxu0 %v2646
    %2686 = vmatmul.bf16.gmra.mxu0 %v2576
    %v2687 = vpop.f32.mrf.mxu0
    %v2688 = vadd.f32 %v2580, %v2687
    %v2689 = vpop.f32.mrf.mxu0
    %v2690 = vadd.f32 %v2580, %v2689
    %2691 = vdwg.mxu0
    %2692 = vmatpush.bf16.msra.mxu0 %v2661
    %2693 = vmatpush.bf16.msra.mxu0 %v2660
    %2694 = vmatpush.bf16.msra.mxu0 %v2659
    %2695 = vmatpush.bf16.msra.mxu0 %v2658
    %2696 = vmatpush.bf16.msra.mxu0 %v2657
    %2697 = vmatpush.bf16.msra.mxu0 %v2656
    %2698 = vmatpush.bf16.msra.mxu0 %v2655
    %2699 = vmatpush.bf16.msra.mxu0 %v2654
    %2700 = vmatmul.bf16.gmra.mxu0 %v2577
    %v2701 = vpop.f32.mrf.mxu0
    %v2702 = vadd.f32 %v2688, %v2701
    %v2703 = vpop.f32.mrf.mxu0
    %v2704 = vadd.f32 %v2690, %v2703
    %2705 = vdwg.mxu0
    %v2706 = vtanh.pop %v2702
    %v2707 = vtanh.pop %v2704
    %v2708 = vld [vmem:[#allocation10] sm:$0xff]
    %v2709 = vld [vmem:[#allocation10 + $0x8] sm:$0xf]
    %v2710 = vld [vmem:[#allocation10 + $0xc] sm:$0xff]
    %v2711 = vld [vmem:[#allocation10 + $0x14] sm:$0xf]
    %v2712 = vld [vmem:[#allocation10 + $0x18] sm:$0xff]
    %v2713 = vld [vmem:[#allocation10 + $0x20] sm:$0xf]
    %v2714 = vld [vmem:[#allocation10 + $0x24] sm:$0xff]
    %v2715 = vld [vmem:[#allocation10 + $0x2c] sm:$0xf]
    %v2716 = vld [vmem:[#allocation10 + $0x30] sm:$0xff]
    %v2717 = vld [vmem:[#allocation10 + $0x38] sm:$0xf]
    %v2718 = vld [vmem:[#allocation10 + $0x3c] sm:$0xff]
    %v2719 = vld [vmem:[#allocation10 + $0x44] sm:$0xf]
    %v2720 = vld [vmem:[#allocation10 + $0x48] sm:$0xff]
    %v2721 = vld [vmem:[#allocation10 + $0x50] sm:$0xf]
    %v2722 = vld [vmem:[#allocation10 + $0x54] sm:$0xff]
    %v2723 = vld [vmem:[#allocation10 + $0x5c] sm:$0xf]
    %v2724 = vld [vmem:[#allocation10 + $0x60] sm:$0xff]
    %v2725 = vld [vmem:[#allocation10 + $0x68] sm:$0xf]
    %v2726 = vld [vmem:[#allocation10 + $0x6c] sm:$0xff]
    %v2727 = vld [vmem:[#allocation10 + $0x74] sm:$0xf]
    %v2728 = vld [vmem:[#allocation10 + $0x78] sm:$0xff]
    %v2729 = vld [vmem:[#allocation10 + $0x80] sm:$0xf]
    %v2730 = vld [vmem:[#allocation10 + $0x84] sm:$0xff]
    %v2731 = vld [vmem:[#allocation10 + $0x8c] sm:$0xf]
    %v2732 = vld [vmem:[#allocation10 + $0x90] sm:$0xff]
    %v2733 = vld [vmem:[#allocation10 + $0x98] sm:$0xf]
    %v2734 = vld [vmem:[#allocation10 + $0x9c] sm:$0xff]
    %v2735 = vld [vmem:[#allocation10 + $0xa4] sm:$0xf]
    %v2736 = vld [vmem:[#allocation10 + $0xa8] sm:$0xff]
    %v2737 = vld [vmem:[#allocation10 + $0xb0] sm:$0xf]
    %v2738 = vld [vmem:[#allocation10 + $0xb4] sm:$0xff]
    %v2739 = vld [vmem:[#allocation10 + $0xbc] sm:$0xf]
    %v2740 = vpack.c.bf16 %v2707, %v2706
    %v2741 = vld [vmem:[%s47] sm:$0x7]
    %v2743 = vperm.slane %v2741, 0
    %v2744 = vperm.slane %v2741, 1
    %v2745 = vperm.slane %v2741, 2
    %v2781 = vunpack.c.l.b16 %v2708
    %v2782 = vunpack.c.h.b16 %v2708
    %v2783 = vunpack.c.l.b16 %v2709
    %v2784 = vunpack.c.l.b16 %v2710
    %v2785 = vunpack.c.h.b16 %v2710
    %v2786 = vunpack.c.l.b16 %v2711
    %v2787 = vunpack.c.l.b16 %v2712
    %v2788 = vunpack.c.h.b16 %v2712
    %v2789 = vunpack.c.l.b16 %v2713
    %v2790 = vunpack.c.l.b16 %v2714
    %v2791 = vunpack.c.h.b16 %v2714
    %v2792 = vunpack.c.l.b16 %v2715
    %v2793 = vunpack.c.l.b16 %v2716
    %v2794 = vunpack.c.h.b16 %v2716
    %v2795 = vunpack.c.l.b16 %v2717
    %v2796 = vunpack.c.l.b16 %v2718
    %v2797 = vunpack.c.h.b16 %v2718
    %v2798 = vunpack.c.l.b16 %v2719
    %v2799 = vunpack.c.l.b16 %v2720
    %v2800 = vunpack.c.h.b16 %v2720
    %v2801 = vunpack.c.l.b16 %v2721
    %v2802 = vunpack.c.l.b16 %v2722
    %v2803 = vunpack.c.h.b16 %v2722
    %v2804 = vunpack.c.l.b16 %v2723
    %v2805 = vunpack.c.l.b16 %v2724
    %v2806 = vunpack.c.h.b16 %v2724
    %v2807 = vunpack.c.l.b16 %v2725
    %v2808 = vunpack.c.l.b16 %v2726
    %v2809 = vunpack.c.h.b16 %v2726
    %v2810 = vunpack.c.l.b16 %v2727
    %v2811 = vunpack.c.l.b16 %v2728
    %v2812 = vunpack.c.h.b16 %v2728
    %v2813 = vunpack.c.l.b16 %v2729
    %v2814 = vunpack.c.l.b16 %v2730
    %v2815 = vunpack.c.h.b16 %v2730
    %v2816 = vunpack.c.l.b16 %v2731
    %v2817 = vunpack.c.l.b16 %v2732
    %v2818 = vunpack.c.h.b16 %v2732
    %v2819 = vunpack.c.l.b16 %v2733
    %v2820 = vunpack.c.l.b16 %v2734
    %v2821 = vunpack.c.h.b16 %v2734
    %v2822 = vunpack.c.l.b16 %v2735
    %v2823 = vunpack.c.l.b16 %v2736
    %v2824 = vunpack.c.h.b16 %v2736
    %v2825 = vunpack.c.l.b16 %v2737
    %v2826 = vunpack.c.l.b16 %v2738
    %v2827 = vunpack.c.h.b16 %v2738
    %v2828 = vunpack.c.l.b16 %v2739
    %v2829 = vpack.c.b16 %v2784, %v2781
    %v2830 = vpack.c.b16 %v2785, %v2782
    %v2831 = vpack.c.b16 %v2786, %v2783
    %v2832 = vpack.c.b16 %v2790, %v2787
    %v2833 = vpack.c.b16 %v2791, %v2788
    %v2834 = vpack.c.b16 %v2792, %v2789
    %v2835 = vpack.c.b16 %v2796, %v2793
    %v2836 = vpack.c.b16 %v2797, %v2794
    %v2837 = vpack.c.b16 %v2798, %v2795
    %v2838 = vpack.c.b16 %v2802, %v2799
    %v2839 = vpack.c.b16 %v2803, %v2800
    %v2840 = vpack.c.b16 %v2804, %v2801
    %v2841 = vpack.c.b16 %v2808, %v2805
    %v2842 = vpack.c.b16 %v2809, %v2806
    %v2843 = vpack.c.b16 %v2810, %v2807
    %v2844 = vpack.c.b16 %v2814, %v2811
    %v2845 = vpack.c.b16 %v2815, %v2812
    %v2846 = vpack.c.b16 %v2816, %v2813
    %v2847 = vpack.c.b16 %v2820, %v2817
    %v2848 = vpack.c.b16 %v2821, %v2818
    %v2849 = vpack.c.b16 %v2822, %v2819
    %v2850 = vpack.c.b16 %v2826, %v2823
    %v2851 = vpack.c.b16 %v2827, %v2824
    %v2852 = vpack.c.b16 %v2828, %v2825
    %2877 = vmatpush.bf16.msra.mxu0 %v2850
    %2878 = vmatpush.bf16.msra.mxu0 %v2847
    %2879 = vmatpush.bf16.msra.mxu0 %v2844
    %2880 = vmatpush.bf16.msra.mxu0 %v2841
    %2881 = vmatpush.bf16.msra.mxu0 %v2838
    %2882 = vmatpush.bf16.msra.mxu0 %v2835
    %2883 = vmatpush.bf16.msra.mxu0 %v2832
    %2884 = vmatpush.bf16.msra.mxu0 %v2829
    %2885 = vmatmul.bf16.gmra.mxu0 %v2740
    %v2886 = vpop.f32.mrf.mxu0
    %v2887 = vadd.f32 %v2743, %v2886
    %v2888 = vpop.f32.mrf.mxu0
    %v2889 = vadd.f32 %v2743, %v2888
    %2890 = vdwg.mxu0
    %2891 = vmatpush.bf16.msra.mxu0 %v2851
    %2892 = vmatpush.bf16.msra.mxu0 %v2848
    %2893 = vmatpush.bf16.msra.mxu0 %v2845
    %2894 = vmatpush.bf16.msra.mxu0 %v2842
    %2895 = vmatpush.bf16.msra.mxu0 %v2839
    %2896 = vmatpush.bf16.msra.mxu0 %v2836
    %2897 = vmatpush.bf16.msra.mxu0 %v2833
    %2898 = vmatpush.bf16.msra.mxu0 %v2830
    %2899 = vmatmul.bf16.gmra.mxu0 %v2740
    %v2900 = vpop.f32.mrf.mxu0
    %v2901 = vadd.f32 %v2744, %v2900
    %v2902 = vpop.f32.mrf.mxu0
    %v2903 = vadd.f32 %v2744, %v2902
    %2904 = vdwg.mxu0
    %2905 = vmatpush.bf16.msra.mxu0 %v2852
    %2906 = vmatpush.bf16.msra.mxu0 %v2849
    %2907 = vmatpush.bf16.msra.mxu0 %v2846
    %2908 = vmatpush.bf16.msra.mxu0 %v2843
    %2909 = vmatpush.bf16.msra.mxu0 %v2840
    %2910 = vmatpush.bf16.msra.mxu0 %v2837
    %2911 = vmatpush.bf16.msra.mxu0 %v2834
    %2912 = vmatpush.bf16.msra.mxu0 %v2831
    %2913 = vmatmul.bf16.gmra.mxu0 %v2740
    %v2914 = vpop.f32.mrf.mxu0
    %v2915 = vadd.f32 %v2745, %v2914
    %v2916 = vpop.f32.mrf.mxu0
    %v2917 = vadd.f32 %v2745, %v2916
    %2918 = vdwg.mxu0
    %v2919 = vld [vmem:[#allocation13] sm:$0xf]
    %v2920 = vld [vmem:[#allocation13 + $0x4] sm:$0xf]
    %v2921 = vld [vmem:[#allocation13 + $0x8] sm:$0xf]
    %v2922 = vld [vmem:[#allocation13 + $0xc] sm:$0xf]
    %v2923 = vld [vmem:[#allocation13 + $0x10] sm:$0xf]
    %v2924 = vld [vmem:[#allocation13 + $0x14] sm:$0xf]
    %v2925 = vld [vmem:[#allocation13 + $0x18] sm:$0xf]
    %v2926 = vld [vmem:[#allocation13 + $0x1c] sm:$0xf]
    %v2927 = vld [vmem:[#allocation13 + $0x20] sm:$0xf]
    %v2928 = vld [vmem:[#allocation13 + $0x24] sm:$0xf]
    %v2929 = vld [vmem:[#allocation13 + $0x28] sm:$0xf]
    %v2930 = vld [vmem:[#allocation13 + $0x2c] sm:$0xf]
    %v2931 = vld [vmem:[#allocation13 + $0x30] sm:$0xf]
    %v2932 = vld [vmem:[#allocation13 + $0x34] sm:$0xf]
    %v2933 = vld [vmem:[#allocation13 + $0x38] sm:$0xf]
    %v2934 = vld [vmem:[#allocation13 + $0x3c] sm:$0xf]
    %v2935 = vld [vmem:[%s57] sm:$0x1]
    %v2937 = vperm.slane %v2935, 0
    %v2955 = vunpack.c.l.b16 %v2919
    %v2956 = vunpack.c.l.b16 %v2920
    %v2957 = vunpack.c.l.b16 %v2921
    %v2958 = vunpack.c.l.b16 %v2922
    %v2959 = vunpack.c.l.b16 %v2923
    %v2960 = vunpack.c.l.b16 %v2924
    %v2961 = vunpack.c.l.b16 %v2925
    %v2962 = vunpack.c.l.b16 %v2926
    %v2963 = vunpack.c.l.b16 %v2927
    %v2964 = vunpack.c.l.b16 %v2928
    %v2965 = vunpack.c.l.b16 %v2929
    %v2966 = vunpack.c.l.b16 %v2930
    %v2967 = vunpack.c.l.b16 %v2931
    %v2968 = vunpack.c.l.b16 %v2932
    %v2969 = vunpack.c.l.b16 %v2933
    %v2970 = vunpack.c.l.b16 %v2934
    %v2971 = vpack.c.b16 %v2956, %v2955
    %v2972 = vpack.c.b16 %v2958, %v2957
    %v2973 = vpack.c.b16 %v2960, %v2959
    %v2974 = vpack.c.b16 %v2962, %v2961
    %v2975 = vpack.c.b16 %v2964, %v2963
    %v2976 = vpack.c.b16 %v2966, %v2965
    %v2977 = vpack.c.b16 %v2968, %v2967
    %v2978 = vpack.c.b16 %v2970, %v2969
    %2987 = vmatpush.bf16.msra.mxu0 %v2978
    %2988 = vmatpush.bf16.msra.mxu0 %v2977
    %2989 = vmatpush.bf16.msra.mxu0 %v2976
    %2990 = vmatpush.bf16.msra.mxu0 %v2975
    %2991 = vmatpush.bf16.msra.mxu0 %v2974
    %2992 = vmatpush.bf16.msra.mxu0 %v2973
    %2993 = vmatpush.bf16.msra.mxu0 %v2972
    %2994 = vmatpush.bf16.msra.mxu0 %v2971
    %2995 = vmatmul.bf16.gmra.mxu0 %v2425
    %v2996 = vpop.f32.mrf.mxu0
    %v2997 = vadd.f32 %v2937, %v2996
    %v2998 = vpop.f32.mrf.mxu0
    %v2999 = vadd.f32 %v2937, %v2998
    %3000 = vdwg.mxu0
    %v3001 = vld [vmem:[#allocation12] sm:$0xff]
    %v3002 = vld [vmem:[#allocation12 + $0x8] sm:$0xf]
    %v3003 = vld [vmem:[#allocation12 + $0xc] sm:$0xff]
    %v3004 = vld [vmem:[#allocation12 + $0x14] sm:$0xf]
    %v3005 = vld [vmem:[#allocation12 + $0x18] sm:$0xff]
    %v3006 = vld [vmem:[#allocation12 + $0x20] sm:$0xf]
    %v3007 = vld [vmem:[#allocation12 + $0x24] sm:$0xff]
    %v3008 = vld [vmem:[#allocation12 + $0x2c] sm:$0xf]
    %v3009 = vld [vmem:[#allocation12 + $0x30] sm:$0xff]
    %v3010 = vld [vmem:[#allocation12 + $0x38] sm:$0xf]
    %v3011 = vld [vmem:[#allocation12 + $0x3c] sm:$0xff]
    %v3012 = vld [vmem:[#allocation12 + $0x44] sm:$0xf]
    %v3013 = vld [vmem:[#allocation12 + $0x48] sm:$0xff]
    %v3014 = vld [vmem:[#allocation12 + $0x50] sm:$0xf]
    %v3015 = vld [vmem:[#allocation12 + $0x54] sm:$0xff]
    %v3016 = vld [vmem:[#allocation12 + $0x5c] sm:$0xf]
    %v3017 = vld [vmem:[#allocation12 + $0x60] sm:$0xff]
    %v3018 = vld [vmem:[#allocation12 + $0x68] sm:$0xf]
    %v3019 = vld [vmem:[#allocation12 + $0x6c] sm:$0xff]
    %v3020 = vld [vmem:[#allocation12 + $0x74] sm:$0xf]
    %v3021 = vld [vmem:[#allocation12 + $0x78] sm:$0xff]
    %v3022 = vld [vmem:[#allocation12 + $0x80] sm:$0xf]
    %v3023 = vld [vmem:[#allocation12 + $0x84] sm:$0xff]
    %v3024 = vld [vmem:[#allocation12 + $0x8c] sm:$0xf]
    %v3025 = vld [vmem:[#allocation12 + $0x90] sm:$0xff]
    %v3026 = vld [vmem:[#allocation12 + $0x98] sm:$0xf]
    %v3027 = vld [vmem:[#allocation12 + $0x9c] sm:$0xff]
    %v3028 = vld [vmem:[#allocation12 + $0xa4] sm:$0xf]
    %v3029 = vld [vmem:[#allocation12 + $0xa8] sm:$0xff]
    %v3030 = vld [vmem:[#allocation12 + $0xb0] sm:$0xf]
    %v3031 = vld [vmem:[#allocation12 + $0xb4] sm:$0xff]
    %v3032 = vld [vmem:[#allocation12 + $0xbc] sm:$0xf]
    %v3033 = vld [vmem:[%s51] sm:$0x7]
    %v3035 = vperm.slane %v3033, 0
    %v3036 = vperm.slane %v3033, 1
    %v3037 = vperm.slane %v3033, 2
    %v3073 = vunpack.c.l.b16 %v3001
    %v3074 = vunpack.c.h.b16 %v3001
    %v3075 = vunpack.c.l.b16 %v3002
    %v3076 = vunpack.c.l.b16 %v3003
    %v3077 = vunpack.c.h.b16 %v3003
    %v3078 = vunpack.c.l.b16 %v3004
    %v3079 = vunpack.c.l.b16 %v3005
    %v3080 = vunpack.c.h.b16 %v3005
    %v3081 = vunpack.c.l.b16 %v3006
    %v3082 = vunpack.c.l.b16 %v3007
    %v3083 = vunpack.c.h.b16 %v3007
    %v3084 = vunpack.c.l.b16 %v3008
    %v3085 = vunpack.c.l.b16 %v3009
    %v3086 = vunpack.c.h.b16 %v3009
    %v3087 = vunpack.c.l.b16 %v3010
    %v3088 = vunpack.c.l.b16 %v3011
    %v3089 = vunpack.c.h.b16 %v3011
    %v3090 = vunpack.c.l.b16 %v3012
    %v3091 = vunpack.c.l.b16 %v3013
    %v3092 = vunpack.c.h.b16 %v3013
    %v3093 = vunpack.c.l.b16 %v3014
    %v3094 = vunpack.c.l.b16 %v3015
    %v3095 = vunpack.c.h.b16 %v3015
    %v3096 = vunpack.c.l.b16 %v3016
    %v3097 = vunpack.c.l.b16 %v3017
    %v3098 = vunpack.c.h.b16 %v3017
    %v3099 = vunpack.c.l.b16 %v3018
    %v3100 = vunpack.c.l.b16 %v3019
    %v3101 = vunpack.c.h.b16 %v3019
    %v3102 = vunpack.c.l.b16 %v3020
    %v3103 = vunpack.c.l.b16 %v3021
    %v3104 = vunpack.c.h.b16 %v3021
    %v3105 = vunpack.c.l.b16 %v3022
    %v3106 = vunpack.c.l.b16 %v3023
    %v3107 = vunpack.c.h.b16 %v3023
    %v3108 = vunpack.c.l.b16 %v3024
    %v3109 = vunpack.c.l.b16 %v3025
    %v3110 = vunpack.c.h.b16 %v3025
    %v3111 = vunpack.c.l.b16 %v3026
    %v3112 = vunpack.c.l.b16 %v3027
    %v3113 = vunpack.c.h.b16 %v3027
    %v3114 = vunpack.c.l.b16 %v3028
    %v3115 = vunpack.c.l.b16 %v3029
    %v3116 = vunpack.c.h.b16 %v3029
    %v3117 = vunpack.c.l.b16 %v3030
    %v3118 = vunpack.c.l.b16 %v3031
    %v3119 = vunpack.c.h.b16 %v3031
    %v3120 = vunpack.c.l.b16 %v3032
    %v3121 = vpack.c.b16 %v3076, %v3073
    %v3122 = vpack.c.b16 %v3077, %v3074
    %v3123 = vpack.c.b16 %v3078, %v3075
    %v3124 = vpack.c.b16 %v3082, %v3079
    %v3125 = vpack.c.b16 %v3083, %v3080
    %v3126 = vpack.c.b16 %v3084, %v3081
    %v3127 = vpack.c.b16 %v3088, %v3085
    %v3128 = vpack.c.b16 %v3089, %v3086
    %v3129 = vpack.c.b16 %v3090, %v3087
    %v3130 = vpack.c.b16 %v3094, %v3091
    %v3131 = vpack.c.b16 %v3095, %v3092
    %v3132 = vpack.c.b16 %v3096, %v3093
    %v3133 = vpack.c.b16 %v3100, %v3097
    %v3134 = vpack.c.b16 %v3101, %v3098
    %v3135 = vpack.c.b16 %v3102, %v3099
    %v3136 = vpack.c.b16 %v3106, %v3103
    %v3137 = vpack.c.b16 %v3107, %v3104
    %v3138 = vpack.c.b16 %v3108, %v3105
    %v3139 = vpack.c.b16 %v3112, %v3109
    %v3140 = vpack.c.b16 %v3113, %v3110
    %v3141 = vpack.c.b16 %v3114, %v3111
    %v3142 = vpack.c.b16 %v3118, %v3115
    %v3143 = vpack.c.b16 %v3119, %v3116
    %v3144 = vpack.c.b16 %v3120, %v3117
    %3169 = vmatpush.bf16.msra.mxu0 %v3142
    %3170 = vmatpush.bf16.msra.mxu0 %v3139
    %3171 = vmatpush.bf16.msra.mxu0 %v3136
    %3172 = vmatpush.bf16.msra.mxu0 %v3133
    %3173 = vmatpush.bf16.msra.mxu0 %v3130
    %3174 = vmatpush.bf16.msra.mxu0 %v3127
    %3175 = vmatpush.bf16.msra.mxu0 %v3124
    %3176 = vmatpush.bf16.msra.mxu0 %v3121
    %3177 = vmatmul.bf16.gmra.mxu0 0
    %v3178 = vpop.f32.mrf.mxu0
    %v3179 = vadd.f32 %v3035, %v3178
    %v3180 = vpop.f32.mrf.mxu0
    %3181 = vdwg.mxu0
    %3182 = vmatpush.bf16.msra.mxu0 %v3143
    %3183 = vmatpush.bf16.msra.mxu0 %v3140
    %3184 = vmatpush.bf16.msra.mxu0 %v3137
    %3185 = vmatpush.bf16.msra.mxu0 %v3134
    %3186 = vmatpush.bf16.msra.mxu0 %v3131
    %3187 = vmatpush.bf16.msra.mxu0 %v3128
    %3188 = vmatpush.bf16.msra.mxu0 %v3125
    %3189 = vmatpush.bf16.msra.mxu0 %v3122
    %3190 = vmatmul.bf16.gmra.mxu0 0
    %v3191 = vpop.f32.mrf.mxu0
    %v3192 = vadd.f32 %v3036, %v3191
    %v3193 = vpop.f32.mrf.mxu0
    %3194 = vdwg.mxu0
    %3195 = vmatpush.bf16.msra.mxu0 %v3144
    %3196 = vmatpush.bf16.msra.mxu0 %v3141
    %3197 = vmatpush.bf16.msra.mxu0 %v3138
    %3198 = vmatpush.bf16.msra.mxu0 %v3135
    %3199 = vmatpush.bf16.msra.mxu0 %v3132
    %3200 = vmatpush.bf16.msra.mxu0 %v3129
    %3201 = vmatpush.bf16.msra.mxu0 %v3126
    %3202 = vmatpush.bf16.msra.mxu0 %v3123
    %3203 = vmatmul.bf16.gmra.mxu0 0
    %v3204 = vpop.f32.mrf.mxu0
    %v3205 = vadd.f32 %v3037, %v3204
    %v3206 = vpop.f32.mrf.mxu0
    %3207 = vdwg.mxu0
    %v3208 = vadd.f32 %v2887, %v3179
    %v3209 = vxor.u32 %v3208, 2147483648
    %v3210 = vmul.f32 %v3209, 1.442695
    %v3211 = vpow.pop %v3210
    %v3212 = vadd.f32 %v3211, 1.0
    %v3213 = vrcp.pop %v3212
    %v3214 = vmul.f32 %v3212, %v3213
    %v3215 = vsub.f32 1.0, %v3214
    %v3216 = vmul.f32 %v3213, %v3215
    %v3217 = vadd.f32 %v3213, %v3216
    %vm3218 = vweird.f32 %v3212
    %vm3219 = vweird.f32 %v3213
    %vm3220 = vmor %vm3218, %vm3219
    %v3221 = vsel %vm3220, %v3213, %v3217
    %v3222 = vand.u32 2147483647, %v3212
    %vm3223 = vcmp.eq.f32.partialorder %v3222, 8.507059e+37
    %v3224 = vand.u32 %v3212, 2147483648
    %v3225 = vor.u32 1.1754944e-38, %v3224
    %v3226 = vsel %vm3223, %v3225, %v3221
    %v3227 = vmul.f32 1.0, %v3226
    %v3228 = vadd.f32 %v2901, %v3192
    %v3229 = vxor.u32 %v3228, 2147483648
    %v3230 = vmul.f32 %v3229, 1.442695
    %v3231 = vpow.pop %v3230
    %v3232 = vadd.f32 %v3231, 1.0
    %v3233 = vrcp.pop %v3232
    %v3234 = vmul.f32 %v3232, %v3233
    %v3235 = vsub.f32 1.0, %v3234
    %v3236 = vmul.f32 %v3233, %v3235
    %v3237 = vadd.f32 %v3233, %v3236
    %vm3238 = vweird.f32 %v3232
    %vm3239 = vweird.f32 %v3233
    %vm3240 = vmor %vm3238, %vm3239
    %v3241 = vsel %vm3240, %v3233, %v3237
    %v3242 = vand.u32 2147483647, %v3232
    %vm3243 = vcmp.eq.f32.partialorder %v3242, 8.507059e+37
    %v3244 = vand.u32 %v3232, 2147483648
    %v3245 = vor.u32 1.1754944e-38, %v3244
    %v3246 = vsel %vm3243, %v3245, %v3241
    %v3247 = vmul.f32 1.0, %v3246
    %v3248 = vmul.f32 %v3227, %v3205
    %v3249 = vadd.f32 %v2915, %v3248
    %v3250 = vtanh.pop %v3249
    %v3251 = vsub.f32 1.0, %v3247
    %v3252 = vmul.f32 %v3251, %v3250
    %v3253 = vmul.f32 %v3247, 0.0
    %v3254 = vadd.f32 %v3252, %v3253
    %v3255 = vpack.c.bf16 %v3254, %v3254
    %3256 = vmatpush.bf16.msra.mxu0 %v3142
    %3257 = vmatpush.bf16.msra.mxu0 %v3139
    %3258 = vmatpush.bf16.msra.mxu0 %v3136
    %3259 = vmatpush.bf16.msra.mxu0 %v3133
    %3260 = vmatpush.bf16.msra.mxu0 %v3130
    %3261 = vmatpush.bf16.msra.mxu0 %v3127
    %3262 = vmatpush.bf16.msra.mxu0 %v3124
    %3263 = vmatpush.bf16.msra.mxu0 %v3121
    %3264 = vmatmul.bf16.gmra.mxu0 %v3255
    %v3265 = vpop.f32.mrf.mxu0
    %v3266 = vadd.f32 %v3035, %v3265
    %v3267 = vpop.f32.mrf.mxu0
    %3268 = vdwg.mxu0
    %3269 = vmatpush.bf16.msra.mxu0 %v3143
    %3270 = vmatpush.bf16.msra.mxu0 %v3140
    %3271 = vmatpush.bf16.msra.mxu0 %v3137
    %3272 = vmatpush.bf16.msra.mxu0 %v3134
    %3273 = vmatpush.bf16.msra.mxu0 %v3131
    %3274 = vmatpush.bf16.msra.mxu0 %v3128
    %3275 = vmatpush.bf16.msra.mxu0 %v3125
    %3276 = vmatpush.bf16.msra.mxu0 %v3122
    %3277 = vmatmul.bf16.gmra.mxu0 %v3255
    %v3278 = vpop.f32.mrf.mxu0
    %v3279 = vadd.f32 %v3036, %v3278
    %v3280 = vpop.f32.mrf.mxu0
    %3281 = vdwg.mxu0
    %3282 = vmatpush.bf16.msra.mxu0 %v3144
    %3283 = vmatpush.bf16.msra.mxu0 %v3141
    %3284 = vmatpush.bf16.msra.mxu0 %v3138
    %3285 = vmatpush.bf16.msra.mxu0 %v3135
    %3286 = vmatpush.bf16.msra.mxu0 %v3132
    %3287 = vmatpush.bf16.msra.mxu0 %v3129
    %3288 = vmatpush.bf16.msra.mxu0 %v3126
    %3289 = vmatpush.bf16.msra.mxu0 %v3123
    %3290 = vmatmul.bf16.gmra.mxu0 %v3255
    %v3291 = vpop.f32.mrf.mxu0
    %v3292 = vadd.f32 %v3037, %v3291
    %v3293 = vpop.f32.mrf.mxu0
    %3294 = vdwg.mxu0
    %v3295 = vadd.f32 %v2889, %v3266
    %v3296 = vxor.u32 %v3295, 2147483648
    %v3297 = vmul.f32 %v3296, 1.442695
    %v3298 = vpow.pop %v3297
    %v3299 = vadd.f32 %v3298, 1.0
    %v3300 = vrcp.pop %v3299
    %v3301 = vmul.f32 %v3299, %v3300
    %v3302 = vsub.f32 1.0, %v3301
    %v3303 = vmul.f32 %v3300, %v3302
    %v3304 = vadd.f32 %v3300, %v3303
    %vm3305 = vweird.f32 %v3299
    %vm3306 = vweird.f32 %v3300
    %vm3307 = vmor %vm3305, %vm3306
    %v3308 = vsel %vm3307, %v3300, %v3304
    %v3309 = vand.u32 2147483647, %v3299
    %vm3310 = vcmp.eq.f32.partialorder %v3309, 8.507059e+37
    %v3311 = vand.u32 %v3299, 2147483648
    %v3312 = vor.u32 1.1754944e-38, %v3311
    %v3313 = vsel %vm3310, %v3312, %v3308
    %v3314 = vmul.f32 1.0, %v3313
    %v3315 = vadd.f32 %v2903, %v3279
    %v3316 = vxor.u32 %v3315, 2147483648
    %v3317 = vmul.f32 %v3316, 1.442695
    %v3318 = vpow.pop %v3317
    %v3319 = vadd.f32 %v3318, 1.0
    %v3320 = vrcp.pop %v3319
    %v3321 = vmul.f32 %v3319, %v3320
    %v3322 = vsub.f32 1.0, %v3321
    %v3323 = vmul.f32 %v3320, %v3322
    %v3324 = vadd.f32 %v3320, %v3323
    %vm3325 = vweird.f32 %v3319
    %vm3326 = vweird.f32 %v3320
    %vm3327 = vmor %vm3325, %vm3326
    %v3328 = vsel %vm3327, %v3320, %v3324
    %v3329 = vand.u32 2147483647, %v3319
    %vm3330 = vcmp.eq.f32.partialorder %v3329, 8.507059e+37
    %v3331 = vand.u32 %v3319, 2147483648
    %v3332 = vor.u32 1.1754944e-38, %v3331
    %v3333 = vsel %vm3330, %v3332, %v3328
    %v3334 = vmul.f32 1.0, %v3333
    %v3335 = vmul.f32 %v3314, %v3292
    %v3336 = vadd.f32 %v2917, %v3335
    %v3337 = vtanh.pop %v3336
    %v3338 = vsub.f32 1.0, %v3334
    %v3339 = vmul.f32 %v3338, %v3337
    %v3340 = vmul.f32 %v3334, %v3254
    %v3341 = vadd.f32 %v3339, %v3340
    %v3342 = vld [vmem:[#allocation15] sm:$0xf]
    %v3343 = vld [vmem:[#allocation15 + $0x4] sm:$0xf]
    %v3344 = vld [vmem:[#allocation15 + $0x8] sm:$0xf]
    %v3345 = vld [vmem:[#allocation15 + $0xc] sm:$0xf]
    %v3346 = vld [vmem:[#allocation15 + $0x10] sm:$0xf]
    %v3347 = vld [vmem:[#allocation15 + $0x14] sm:$0xf]
    %v3348 = vld [vmem:[#allocation15 + $0x18] sm:$0xf]
    %v3349 = vld [vmem:[#allocation15 + $0x1c] sm:$0xf]
    %v3350 = vld [vmem:[#allocation15 + $0x20] sm:$0xf]
    %v3351 = vld [vmem:[#allocation15 + $0x24] sm:$0xf]
    %v3352 = vld [vmem:[#allocation15 + $0x28] sm:$0xf]
    %v3353 = vld [vmem:[#allocation15 + $0x2c] sm:$0xf]
    %v3354 = vld [vmem:[#allocation15 + $0x30] sm:$0xf]
    %v3355 = vld [vmem:[#allocation15 + $0x34] sm:$0xf]
    %v3356 = vld [vmem:[#allocation15 + $0x38] sm:$0xf]
    %v3357 = vld [vmem:[#allocation15 + $0x3c] sm:$0xf]
    %v3358 = vpack.c.bf16 %v3341, %v3254
    %v3375 = vunpack.c.l.b16 %v3342
    %v3376 = vunpack.c.l.b16 %v3343
    %v3377 = vunpack.c.l.b16 %v3344
    %v3378 = vunpack.c.l.b16 %v3345
    %v3379 = vunpack.c.l.b16 %v3346
    %v3380 = vunpack.c.l.b16 %v3347
    %v3381 = vunpack.c.l.b16 %v3348
    %v3382 = vunpack.c.l.b16 %v3349
    %v3383 = vunpack.c.l.b16 %v3350
    %v3384 = vunpack.c.l.b16 %v3351
    %v3385 = vunpack.c.l.b16 %v3352
    %v3386 = vunpack.c.l.b16 %v3353
    %v3387 = vunpack.c.l.b16 %v3354
    %v3388 = vunpack.c.l.b16 %v3355
    %v3389 = vunpack.c.l.b16 %v3356
    %v3390 = vunpack.c.l.b16 %v3357
    %v3391 = vpack.c.b16 %v3376, %v3375
    %v3392 = vpack.c.b16 %v3378, %v3377
    %v3393 = vpack.c.b16 %v3380, %v3379
    %v3394 = vpack.c.b16 %v3382, %v3381
    %v3395 = vpack.c.b16 %v3384, %v3383
    %v3396 = vpack.c.b16 %v3386, %v3385
    %v3397 = vpack.c.b16 %v3388, %v3387
    %v3398 = vpack.c.b16 %v3390, %v3389
    %3407 = vmatpush.bf16.msra.mxu0 %v3398
    %3408 = vmatpush.bf16.msra.mxu0 %v3397
    %3409 = vmatpush.bf16.msra.mxu0 %v3396
    %3410 = vmatpush.bf16.msra.mxu0 %v3395
    %3411 = vmatpush.bf16.msra.mxu0 %v3394
    %3412 = vmatpush.bf16.msra.mxu0 %v3393
    %3413 = vmatpush.bf16.msra.mxu0 %v3392
    %3414 = vmatpush.bf16.msra.mxu0 %v3391
    %3415 = vmatmul.bf16.gmra.mxu0 %v3358
    %v3416 = vpop.f32.mrf.mxu0
    %v3417 = vadd.f32 0.0, %v3416
    %v3418 = vpop.f32.mrf.mxu0
    %v3419 = vadd.f32 0.0, %v3418
    %3420 = vdwg.mxu0
    %v3421 = vadd.f32 %v2997, %v3417
    %v3422 = vadd.f32 %v2999, %v3419
    %v3423 = vld [vmem:[%s7] sm:$0x1]
    %v3425 = vperm.slane %v3423, 0
    %v3427 = vmul.f32 %v3421, %v3425
    %v3428 = vmul.f32 %v3422, %v3425
    %3429 = vadd.xlane.f32.xlu0 %v3427
    %v3430 = vpop.xlane.xlu0 %3429
    %3431 = vadd.xlane.f32.xlu0 %v3428
    %v3432 = vpop.xlane.xlu0 %3431
    %v3433 = vmul.f32 %v3430, 0.03125
    %v3434 = vmul.f32 %v3432, 0.03125
    %v3435 = vsub.f32 %v3421, %v3433
    %v3436 = vsub.f32 %v3422, %v3434
    %v3437 = vmul.f32 %v3435, %v3425
    %v3438 = vmul.f32 %v3436, %v3425
    %v3439 = vmul.f32 %v3437, %v3437
    %v3440 = vmul.f32 %v3438, %v3438
    %3441 = vadd.xlane.f32.xlu0 %v3439
    %v3442 = vpop.xlane.xlu0 %3441
    %3443 = vadd.xlane.f32.xlu0 %v3440
    %v3444 = vpop.xlane.xlu0 %3443
    %v3445 = vmul.f32 %v3442, 0.03125
    %v3446 = vmul.f32 %v3444, 0.03125
    %v3447 = vadd.f32 %v3445, 1e-05
    %v3448 = vadd.f32 %v3446, 1e-05
    %v3449 = vrsqrt.pop %v3447
    %v3450 = vmul.f32 %v3449, %v3447
    %v3451 = vmul.f32 %v3450, %v3449
    %v3452 = vmul.f32 0.5, %v3451
    %v3453 = vsub.f32 1.5, %v3452
    %v3454 = vmul.f32 %v3449, %v3453
    %vm3455 = vweird.f32 %v3447
    %vm3456 = vweird.f32 %v3449
    %vm3457 = vmor %vm3455, %vm3456
    %v3458 = vsel %vm3457, %v3449, %v3454
    %v3459 = vrsqrt.pop %v3448
    %v3460 = vmul.f32 %v3459, %v3448
    %v3461 = vmul.f32 %v3460, %v3459
    %v3462 = vmul.f32 0.5, %v3461
    %v3463 = vsub.f32 1.5, %v3462
    %v3464 = vmul.f32 %v3459, %v3463
    %vm3465 = vweird.f32 %v3448
    %vm3466 = vweird.f32 %v3459
    %vm3467 = vmor %vm3465, %vm3466
    %v3468 = vsel %vm3467, %v3459, %v3464
    %v3469 = vmul.f32 %v3437, %v3458
    %v3470 = vmul.f32 %v3438, %v3468
    %v3471 = vld [vmem:[%s59] sm:$0x1]
    %v3473 = vperm.slane %v3471, 0
    %v3475 = vmul.f32 %v3469, %v3473
    %v3476 = vmul.f32 %v3470, %v3473
    %v3477 = vld [vmem:[%s61] sm:$0x1]
    %v3479 = vperm.slane %v3477, 0
    %v3481 = vadd.f32 %v3475, %v3479
    %v3482 = vadd.f32 %v3476, %v3479
    %3483 = vst [vmem:[%s63] sm:$0xff] %v3481
    %3484 = vst [vmem:[%s63 + $0x8] sm:$0xff] %v3482
    // Predicated region
    $region162: #{transnar_forward.1} parent=1 // pred_check
      _
    $region163: #{transnar_forward.1} parent=1 // pred_check_branch
      %3486 = sbr.rel (0) target = $region165
    $region164: #{transnar_forward.1} parent=1 // pred_region
      _
    $region165: #{transnar_forward.1} parent=1 // pred_fallthru
      _
    // Predicated region
    $region166: #{transnar_forward.1} parent=1 // pred_check
      _
    $region167: #{transnar_forward.1} parent=1 // pred_check_branch
      %3488 = sbr.rel (0) target = $region169
    $region168: #{transnar_forward.1} parent=1 // pred_region
      _
    $region169: #{transnar_forward.1} parent=1 // pred_fallthru
      _
    %3489 = vsyncpa [#allocation3], 1
    %3490 = vsyncpa [#allocation5], 1
    %3491 = vsyncpa [#allocation8], 1
    %3492 = vsyncpa [#allocation11], 1
    %3493 = vsyncpa [#allocation14], 1

</llo_original>
